<compile_context>
chip_gen: v6e
topology: v6e:2x2x1
jax: 0.10.0
libtpu: 0.0.40
codegen_flags: <defaults>
</compile_context>

<pallas_src>
import functools

import jax
import jax.numpy as jnp
from jax.experimental import pallas as pl
from jax.experimental.pallas import tpu as pltpu

N_CLASSES = 2
LANE = 128
VMEM_LIMIT = 48 * 1024 * 1024   # < v7x's 64 MiB/TC; plenty on v5e/v6e.


def _round_up(x, m):
    return (x + m - 1) // m * m


def _pick_tile(desired, n):
    """Largest multiple of 128 <= min(desired, n) that divides n (n % 128 == 0)."""
    assert n % LANE == 0, n
    t = max(LANE, (min(desired, n) // LANE) * LANE)
    while n % t:
        t -= LANE
    return t


# ----------------------------------------------------------------------------
# Kernel 1: one GCNConv layer  H_out = [relu]( (A_hat @ H) @ W + b )
#   A_hat streamed in (TM, TK) bf16 tiles; H fully VMEM-resident (bf16);
#   f32 accumulator; f32 transform matmul for precision.
# ----------------------------------------------------------------------------
def _gcn_layer_kernel(a_ref, h_ref, w_ref, b_ref, out_ref, acc_ref, *, relu, tk):
    k = pl.program_id(1)

    @pl.when(k == 0)
    def _():
        acc_ref[...] = jnp.zeros_like(acc_ref)

    # Aggregate: acc += A[i, k] @ H[k]   (bf16 x bf16 -> f32 on the MXU).
    # H is resident (constant index map); slice its k-chunk in VMEM.
    start = pl.multiple_of(k * tk, tk)
    acc_ref[...] += jnp.dot(a_ref[...], h_ref[pl.ds(start, tk), :],
                            preferred_element_type=jnp.float32)

    @pl.when(k == pl.num_programs(1) - 1)
    def _():
        # Reassociated transform: (A @ H) @ W + b, kept in f32 (W is small,
        # resident; keeps per-layer precision).
        hw = jnp.dot(acc_ref[...], w_ref[...],
                     preferred_element_type=jnp.float32) + b_ref[...]
        if relu:
            hw = jnp.maximum(hw, 0.0)
        out_ref[...] = hw.astype(out_ref.dtype)


def _gcn_layer(a, h, w, b, *, relu, tm=512, tk=256):
    n = a.shape[0]
    f_in = h.shape[1]
    f_out = w.shape[1]
    assert a.shape == (n, n)
    assert f_in % LANE == 0 and f_out % LANE == 0

    # Cap TM so >= 2 row tiles remain (keeps both v7x TensorCores fed).
    tm = _pick_tile(min(tm, max(n // 2, LANE)), n)
    tk = _pick_tile(tk, n)
    assert n % tm == 0 and n % tk == 0, (n, tm, tk)
    m_tiles, k_tiles = n // tm, n // tk

    flops = 2 * (n * n * f_in + n * f_in * f_out)
    # H is resident -> read once; A_hat is the only streamed operand.
    bytes_accessed = (n * n * 2 + n * f_in * 2 + f_in * f_out * 4
                      + f_out * 4 + n * f_out * 2)

    return pl.pallas_call(
        functools.partial(_gcn_layer_kernel, relu=relu, tk=tk),
        out_shape=jax.ShapeDtypeStruct((n, f_out), jnp.bfloat16),
        grid_spec=pltpu.PrefetchScalarGridSpec(
            num_scalar_prefetch=0,
            grid=(m_tiles, k_tiles),
            in_specs=[
                pl.BlockSpec((tm, tk), lambda i, k: (i, k)),       # A_hat (streamed)
                pl.BlockSpec((n, f_in), lambda i, k: (0, 0)),      # H (VMEM-resident)
                pl.BlockSpec((f_in, f_out), lambda i, k: (0, 0)),  # W f32 (resident)
                pl.BlockSpec((1, f_out), lambda i, k: (0, 0)),     # b (resident)
            ],
            out_specs=pl.BlockSpec((tm, f_out), lambda i, k: (i, 0)),
            scratch_shapes=[pltpu.VMEM((tm, f_in), jnp.float32)],
        ),
        compiler_params=pltpu.CompilerParams(
            dimension_semantics=("parallel", "arbitrary"),
            vmem_limit_bytes=VMEM_LIMIT,
        ),
        cost_estimate=pl.CostEstimate(
            flops=flops, transcendentals=0, bytes_accessed=bytes_accessed),
    )(a, h, w, b)


# ----------------------------------------------------------------------------
# Kernel 2: fused layer-4 + global_mean_pool + dropout(eval) + Linear
#   logits = ((PA @ H3) @ W4 + b4) @ Wl + bl     with PA = pool_mat @ A_hat
# (P @ (A H W4 + b4) == (P A) H W4 + b4 since real pool rows sum to 1.)
# ----------------------------------------------------------------------------
def _gcn_head_kernel(pa_ref, h_ref, w4_ref, b4_ref, wl_ref, bl_ref,
                     out_ref, acc_ref):
    k = pl.program_id(0)

    @pl.when(k == 0)
    def _():
        acc_ref[...] = jnp.zeros_like(acc_ref)

    acc_ref[...] += jnp.dot(pa_ref[...], h_ref[...],
                            preferred_element_type=jnp.float32)

    @pl.when(k == pl.num_programs(0) - 1)
    def _():
        pooled = jnp.dot(acc_ref[...], w4_ref[...],
                         preferred_element_type=jnp.float32) + b4_ref[...]
        # F.dropout(p=0.5, training=False) -> identity (eval mode).
        out_ref[...] = (jnp.dot(pooled, wl_ref[...],
                                preferred_element_type=jnp.float32)
                        + bl_ref[...])


def _gcn_head(pa, h, w4, b4, wl, bl, *, tk=2048):
    g_pad, n = pa.shape
    h_pad = h.shape[1]
    c_pad = wl.shape[1]
    tk = _pick_tile(tk, n)
    assert n % tk == 0
    k_tiles = n // tk

    flops = 2 * (g_pad * n * h_pad + g_pad * h_pad * h_pad
                 + g_pad * h_pad * c_pad)
    bytes_accessed = (g_pad * n * 2 + n * h_pad * 2 + h_pad * h_pad * 4
                      + h_pad * c_pad * 4 + (h_pad + c_pad) * 4
                      + g_pad * c_pad * 4)

    return pl.pallas_call(
        _gcn_head_kernel,
        out_shape=jax.ShapeDtypeStruct((g_pad, c_pad), jnp.float32),
        grid_spec=pltpu.PrefetchScalarGridSpec(
            num_scalar_prefetch=0,
            grid=(k_tiles,),
            in_specs=[
                pl.BlockSpec((g_pad, tk), lambda k: (0, k)),      # PA tile
                pl.BlockSpec((tk, h_pad), lambda k: (k, 0)),      # H3 tile
                pl.BlockSpec((h_pad, h_pad), lambda k: (0, 0)),   # W4 (resident)
                pl.BlockSpec((1, h_pad), lambda k: (0, 0)),       # b4 (resident)
                pl.BlockSpec((h_pad, c_pad), lambda k: (0, 0)),   # Wl (resident)
                pl.BlockSpec((1, c_pad), lambda k: (0, 0)),       # bl (resident)
            ],
            out_specs=pl.BlockSpec((g_pad, c_pad), lambda k: (0, 0)),
            scratch_shapes=[pltpu.VMEM((g_pad, h_pad), jnp.float32)],
        ),
        compiler_params=pltpu.CompilerParams(
            dimension_semantics=("arbitrary",),
            vmem_limit_bytes=VMEM_LIMIT,
        ),
        cost_estimate=pl.CostEstimate(
            flops=flops, transcendentals=0, bytes_accessed=bytes_accessed),
    )(pa, h, w4, b4, wl, bl)


# ----------------------------------------------------------------------------
# Forward pass (eval mode)
# ----------------------------------------------------------------------------
def gcn_forward(a_bf, x, pool_mat, params, *, tm=512, tk=256, head_tk=2048):
    """a_bf: [N_pad, N_pad] bf16 normalized adjacency (zero-padded; cast to
    bf16 exactly once), x: [N_pad, F_pad] f32, pool_mat: [G_pad, N_pad] f32,
    params: lane-padded f32 weights/biases."""
    (w1, b1, w2, b2, w3, b3, w4, b4, wl, bl) = params
    h = x.astype(jnp.bfloat16)
    h = _gcn_layer(a_bf, h, w1, b1, relu=True, tm=tm, tk=tk)
    h = _gcn_layer(a_bf, h, w2, b2, relu=True, tm=tm, tk=tk)
    h = _gcn_layer(a_bf, h, w3, b3, relu=True, tm=tm, tk=tk)
    # Pool fused into layer 4: only G pooled rows of the layer-4 aggregation
    # are ever needed, so precompute PA = pool @ A_hat in bf16 (f32 accum).
    pa = jnp.dot(pool_mat.astype(jnp.bfloat16), a_bf,
                 preferred_element_type=jnp.float32).astype(jnp.bfloat16)
    return _gcn_head(pa, h, w4, b4, wl, bl, tk=head_tk)


# ----------------------------------------------------------------------------
# Plain-JAX glue: dense normalized adjacency, pool matrix, params.
# ----------------------------------------------------------------------------
def build_norm_adj(edge_index, n_nodes, n_pad):
    """Dense D^-1/2 (A + I) D^-1/2 (PyG gcn_norm), zero-padded to n_pad."""
    src, dst = edge_index[0], edge_index[1]
    a = jnp.zeros((n_pad, n_pad), jnp.float32).at[dst, src].add(1.0)
    self_loop = (jnp.arange(n_pad) < n_nodes).astype(jnp.float32)
    a = a + jnp.diag(self_loop)
    deg = a.sum(axis=1)
    dinv = jnp.where(deg > 0, jax.lax.rsqrt(jnp.maximum(deg, 1e-12)), 0.0)
    return a * dinv[:, None] * dinv[None, :]


def build_pool_matrix(batch, n_graphs, g_pad, n_pad):
    n = batch.shape[0]
    batch_p = jnp.concatenate(
        [batch, jnp.full((n_pad - n,), n_graphs, batch.dtype)])
    p = (batch_p[None, :] == jnp.arange(g_pad, dtype=batch.dtype)[:, None])
    p = p.astype(jnp.float32)
    return p / jnp.maximum(p.sum(axis=1, keepdims=True), 1.0)


def init_params(key, n_features, hidden, n_classes):
    def glorot(k, fan_in, fan_out):
        scale = jnp.sqrt(6.0 / (fan_in + fan_out))
        return jax.random.uniform(k, (fan_in, fan_out), jnp.float32,
                                  -scale, scale)

    keys = jax.random.split(key, 5)
    w1 = glorot(keys[0], n_features, hidden)
    w2 = glorot(keys[1], hidden, hidden)
    w3 = glorot(keys[2], hidden, hidden)
    w4 = glorot(keys[3], hidden, hidden)
    wl = glorot(keys[4], hidden, n_classes)
    zeros = lambda c: jnp.zeros((1, c), jnp.float32)
    return (w1, zeros(hidden), w2, zeros(hidden), w3, zeros(hidden),
            w4, zeros(hidden), wl, zeros(n_classes))


def _pad2d(a, rows, cols, dtype):
    out = jnp.zeros((rows, cols), dtype)
    return out.at[:a.shape[0], :a.shape[1]].set(a.astype(dtype))


def pad_params(params, f_pad, h_pad, c_pad):
    (w1, b1, w2, b2, w3, b3, w4, b4, wl, bl) = params
    f32 = jnp.float32
    return (
        _pad2d(w1, f_pad, h_pad, f32), _pad2d(b1, 1, h_pad, f32),
        _pad2d(w2, h_pad, h_pad, f32), _pad2d(b2, 1, h_pad, f32),
        _pad2d(w3, h_pad, h_pad, f32), _pad2d(b3, 1, h_pad, f32),
        _pad2d(w4, h_pad, h_pad, f32), _pad2d(b4, 1, h_pad, f32),
        _pad2d(wl, h_pad, c_pad, f32), _pad2d(bl, 1, c_pad, f32),
    )


def gcn_reference(a, x, p, params_f32):
    """Pure-JAX f32 reference (eval-mode GCN)."""
    (w1, b1, w2, b2, w3, b3, w4, b4, wl, bl) = params_f32
    h = x
    for w, b, relu in ((w1, b1, True), (w2, b2, True),
                       (w3, b3, True), (w4, b4, False)):
        h = a @ (h @ w) + b
        if relu:
            h = jnp.maximum(h, 0.0)
    return (p @ h) @ wl + bl


if __name__ == "__main__":
    key = jax.random.PRNGKey(0)

    # Small synthetic batch: 2 ring graphs of 16 nodes each.
    n_per_graph = 16
    n_graphs = 2
    n_nodes = n_graphs * n_per_graph          # 32
    n_node_features = 8
    hidden_channels = 32

    n_pad = 512                               # exercises a (2, 2) layer grid
    f_pad = _round_up(n_node_features, LANE)  # 128
    h_pad = _round_up(hidden_channels, LANE)  # 128
    c_pad = _round_up(N_CLASSES, LANE)        # 128
    g_pad = _round_up(n_graphs, 8)            # 8

    edges = []
    for g in range(n_graphs):
        base = g * n_per_graph
        for i in range(n_per_graph):
            j = (i + 1) % n_per_graph
            edges.append((base + i, base + j))
            edges.append((base + j, base + i))
    edge_index = jnp.array(edges, dtype=jnp.int32).T          # [2, E]
    batch = jnp.repeat(jnp.arange(n_graphs, dtype=jnp.int32), n_per_graph)

    key, xkey, pkey = jax.random.split(key, 3)
    x_real = jax.random.normal(xkey, (n_nodes, n_node_features), jnp.float32)
    x = jnp.zeros((n_pad, f_pad), jnp.float32)
    x = x.at[:n_nodes, :n_node_features].set(x_real)

    a_hat = build_norm_adj(edge_index, n_nodes, n_pad)   # f32 (reference only)
    a_bf = a_hat.astype(jnp.bfloat16)                    # cast exactly once
    pool_mat = build_pool_matrix(batch, n_graphs, g_pad, n_pad)
    params_f32 = init_params(pkey, n_node_features, hidden_channels, N_CLASSES)
    params = pad_params(params_f32, f_pad, h_pad, c_pad)

    fwd = jax.jit(functools.partial(gcn_forward, tm=512, tk=256, head_tk=2048))
    logits_padded = fwd(a_bf, x, pool_mat, params)
    logits = logits_padded[:n_graphs, :N_CLASSES]
    jax.block_until_ready(logits)

    assert logits.shape == (n_graphs, N_CLASSES)
    assert bool(jnp.all(jnp.isfinite(logits)))

    # Sanity check vs. pure-JAX f32 reference (loose tol: bf16 MXU inputs).
    ref = gcn_reference(a_hat[:n_nodes, :n_nodes], x_real,
                        pool_mat[:n_graphs, :n_nodes], params_f32)
    assert bool(jnp.allclose(logits, ref, atol=1e-1, rtol=1e-1)), (logits, ref)

    print("KERNEL_OK")
</pallas_src>

<mosaic_0001>
module attributes {stable_mosaic.version = 11 : i64} {
  func.func @_gcn_layer_kernel(%arg0: i32, %arg1: i32, %arg2: memref<256x256xbf16, #tpu.memory_space<vmem>>, %arg3: memref<512x128xbf16, #tpu.memory_space<vmem>>, %arg4: memref<128x128xf32, #tpu.memory_space<vmem>>, %arg5: memref<1x128xf32, #tpu.memory_space<vmem>>, %arg6: memref<256x128xbf16, #tpu.memory_space<vmem>>, %arg7: memref<256x128xf32, #tpu.memory_space<vmem>>) attributes {dimension_semantics = [#tpu.dimension_semantics<parallel>, #tpu.dimension_semantics<arbitrary>], iteration_bounds = array<i64: 2, 2>, scalar_prefetch = 0 : i64, scratch_operands = 1 : i64, tpu.core_type = #tpu.core_type<tc>, window_params = [{transform_indices = @transform_0, window_bounds = array<i64: 256, 256>}, {pipeline_mode = #tpu.pipeline_mode<synchronous>, transform_indices = @transform_1, window_bounds = array<i64: 512, 128>}, {pipeline_mode = #tpu.pipeline_mode<synchronous>, transform_indices = @transform_2, window_bounds = array<i64: 128, 128>}, {pipeline_mode = #tpu.pipeline_mode<synchronous>, transform_indices = @transform_3, window_bounds = array<i64: 1, 128>}, {transform_indices = @transform_4, window_bounds = array<i64: 256, 128>}]} {
    %c0_i32 = arith.constant 0 : i32
    %0 = arith.cmpi eq, %arg1, %c0_i32 : i32
    %1 = arith.extui %0 : i1 to i32
    %c0_i32_0 = arith.constant 0 : i32
    %2 = arith.cmpi ne, %1, %c0_i32_0 : i32
    scf.if %2 {
      %cst_8 = arith.constant 0.000000e+00 : f32
      %15 = vector.broadcast %cst_8 : f32 to vector<256x128xf32>
      %c0_9 = arith.constant 0 : index
      %c0_10 = arith.constant 0 : index
      %16 = vector.load %arg7[%c0_9, %c0_10] : memref<256x128xf32, #tpu.memory_space<vmem>>, vector<256x128xf32>
      tpu.vector_store %arg7[%c0_9, %c0_10], %15 {strides = array<i32>} : memref<256x128xf32, #tpu.memory_space<vmem>>, vector<256x128xf32>,
    } else {
    }
    %c256_i32 = arith.constant 256 : i32
    %3 = arith.muli %arg1, %c256_i32 : i32
    %4 = tpu.assume_multiple %3, 256 : i32
    %c0 = arith.constant 0 : index
    %c0_1 = arith.constant 0 : index
    %5 = vector.load %arg7[%c0, %c0_1] : memref<256x128xf32, #tpu.memory_space<vmem>>, vector<256x128xf32>
    %c0_2 = arith.constant 0 : index
    %c0_3 = arith.constant 0 : index
    %6 = vector.load %arg2[%c0_2, %c0_3] : memref<256x256xbf16, #tpu.memory_space<vmem>>, vector<256x256xbf16>
    %7 = arith.index_cast %4 : i32 to index
    %c0_4 = arith.constant 0 : index
    %8 = vector.load %arg3[%7, %c0_4] : memref<512x128xbf16, #tpu.memory_space<vmem>>, vector<256x128xbf16>
    %cst = arith.constant dense<0.000000e+00> : vector<256x128xf32>
    %9 = tpu.matmul %6, %8, %cst {dimension_numbers = #tpu.dot_dimension_numbers<[1], [0], [0], [1], [0, 0, 1, 1], [], []>} : vector<256x256xbf16>, vector<256x128xbf16>, vector<256x128xf32> -> vector<256x128xf32>
    %10 = arith.addf %5, %9 : vector<256x128xf32>
    %c0_5 = arith.constant 0 : index
    %c0_6 = arith.constant 0 : index
    %11 = vector.load %arg7[%c0_5, %c0_6] : memref<256x128xf32, #tpu.memory_space<vmem>>, vector<256x128xf32>
    tpu.vector_store %arg7[%c0_5, %c0_6], %10 {strides = array<i32>} : memref<256x128xf32, #tpu.memory_space<vmem>>, vector<256x128xf32>,
    %c1_i32 = arith.constant 1 : i32
    %12 = arith.cmpi eq, %arg1, %c1_i32 : i32
    %13 = arith.extui %12 : i1 to i32
    %c0_i32_7 = arith.constant 0 : i32
    %14 = arith.cmpi ne, %13, %c0_i32_7 : i32
    scf.if %14 {
      %c0_8 = arith.constant 0 : index
      %c0_9 = arith.constant 0 : index
      %15 = vector.load %arg7[%c0_8, %c0_9] : memref<256x128xf32, #tpu.memory_space<vmem>>, vector<256x128xf32>
      %c0_10 = arith.constant 0 : index
      %c0_11 = arith.constant 0 : index
      %16 = vector.load %arg4[%c0_10, %c0_11] : memref<128x128xf32, #tpu.memory_space<vmem>>, vector<128x128xf32>
      %cst_12 = arith.constant dense<0.000000e+00> : vector<256x128xf32>
      %17 = tpu.matmul %15, %16, %cst_12 {dimension_numbers = #tpu.dot_dimension_numbers<[1], [0], [0], [1], [0, 0, 1, 1], [], []>} : vector<256x128xf32>, vector<128x128xf32>, vector<256x128xf32> -> vector<256x128xf32>
      %c0_13 = arith.constant 0 : index
      %c0_14 = arith.constant 0 : index
      %18 = vector.load %arg5[%c0_13, %c0_14] : memref<1x128xf32, #tpu.memory_space<vmem>>, vector<1x128xf32>
      %19 = vector.broadcast %18 : vector<1x128xf32> to vector<256x128xf32>
      %20 = arith.addf %17, %19 : vector<256x128xf32>
      %cst_15 = arith.constant 0.000000e+00 : f32
      %21 = vector.broadcast %cst_15 : f32 to vector<256x128xf32>
      %22 = arith.maximumf %20, %21 : vector<256x128xf32>
      %23 = arith.truncf %22 : vector<256x128xf32> to vector<256x128xbf16>
      %c0_16 = arith.constant 0 : index
      %c0_17 = arith.constant 0 : index
      %24 = vector.load %arg6[%c0_16, %c0_17] : memref<256x128xbf16, #tpu.memory_space<vmem>>, vector<256x128xbf16>
      tpu.vector_store %arg6[%c0_16, %c0_17], %23 {strides = array<i32>} : memref<256x128xbf16, #tpu.memory_space<vmem>>, vector<256x128xbf16>,
    } else {
    }
    return
  }
  func.func @transform_0(%arg0: i32, %arg1: i32) -> (i32, i32) {
    %c0_i32 = arith.constant 0 : i32
    return %arg0, %arg1 : i32, i32
  }
  func.func @transform_1(%arg0: i32, %arg1: i32) -> (i32, i32) {
    %c0_i32 = arith.constant 0 : i32
    %c0_i32_0 = arith.constant 0 : i32
    %c0_i32_1 = arith.constant 0 : i32
    return %c0_i32, %c0_i32_0 : i32, i32
  }
  func.func @transform_2(%arg0: i32, %arg1: i32) -> (i32, i32) {
    %c0_i32 = arith.constant 0 : i32
    %c0_i32_0 = arith.constant 0 : i32
    %c0_i32_1 = arith.constant 0 : i32
    return %c0_i32, %c0_i32_0 : i32, i32
  }
  func.func @transform_3(%arg0: i32, %arg1: i32) -> (i32, i32) {
    %c0_i32 = arith.constant 0 : i32
    %c0_i32_0 = arith.constant 0 : i32
    %c0_i32_1 = arith.constant 0 : i32
    return %c0_i32, %c0_i32_0 : i32, i32
  }
  func.func @transform_4(%arg0: i32, %arg1: i32) -> (i32, i32) {
    %c0_i32 = arith.constant 0 : i32
    %c0_i32_0 = arith.constant 0 : i32
    return %arg0, %c0_i32 : i32, i32
  }
}

module attributes {stable_mosaic.version = 11 : i64} {
  func.func @_gcn_layer_kernel(%arg0: i32, %arg1: i32, %arg2: memref<256x256xbf16, #tpu.memory_space<vmem>>, %arg3: memref<512x128xbf16, #tpu.memory_space<vmem>>, %arg4: memref<128x128xf32, #tpu.memory_space<vmem>>, %arg5: memref<1x128xf32, #tpu.memory_space<vmem>>, %arg6: memref<256x128xbf16, #tpu.memory_space<vmem>>, %arg7: memref<256x128xf32, #tpu.memory_space<vmem>>) attributes {dimension_semantics = [#tpu.dimension_semantics<parallel>, #tpu.dimension_semantics<arbitrary>], iteration_bounds = array<i64: 2, 2>, scalar_prefetch = 0 : i64, scratch_operands = 1 : i64, tpu.core_type = #tpu.core_type<tc>, window_params = [{transform_indices = @transform_0, window_bounds = array<i64: 256, 256>}, {pipeline_mode = #tpu.pipeline_mode<synchronous>, transform_indices = @transform_1, window_bounds = array<i64: 512, 128>}, {pipeline_mode = #tpu.pipeline_mode<synchronous>, transform_indices = @transform_2, window_bounds = array<i64: 128, 128>}, {pipeline_mode = #tpu.pipeline_mode<synchronous>, transform_indices = @transform_3, window_bounds = array<i64: 1, 128>}, {transform_indices = @transform_4, window_bounds = array<i64: 256, 128>}]} {
    %c0_i32 = arith.constant 0 : i32
    %0 = arith.cmpi eq, %arg1, %c0_i32 : i32
    %1 = arith.extui %0 : i1 to i32
    %c0_i32_0 = arith.constant 0 : i32
    %2 = arith.cmpi ne, %1, %c0_i32_0 : i32
    scf.if %2 {
      %cst_8 = arith.constant 0.000000e+00 : f32
      %15 = vector.broadcast %cst_8 : f32 to vector<256x128xf32>
      %c0_9 = arith.constant 0 : index
      %c0_10 = arith.constant 0 : index
      %16 = vector.load %arg7[%c0_9, %c0_10] : memref<256x128xf32, #tpu.memory_space<vmem>>, vector<256x128xf32>
      tpu.vector_store %arg7[%c0_9, %c0_10], %15 {strides = array<i32>} : memref<256x128xf32, #tpu.memory_space<vmem>>, vector<256x128xf32>,
    } else {
    }
    %c256_i32 = arith.constant 256 : i32
    %3 = arith.muli %arg1, %c256_i32 : i32
    %4 = tpu.assume_multiple %3, 256 : i32
    %c0 = arith.constant 0 : index
    %c0_1 = arith.constant 0 : index
    %5 = vector.load %arg7[%c0, %c0_1] : memref<256x128xf32, #tpu.memory_space<vmem>>, vector<256x128xf32>
    %c0_2 = arith.constant 0 : index
    %c0_3 = arith.constant 0 : index
    %6 = vector.load %arg2[%c0_2, %c0_3] : memref<256x256xbf16, #tpu.memory_space<vmem>>, vector<256x256xbf16>
    %7 = arith.index_cast %4 : i32 to index
    %c0_4 = arith.constant 0 : index
    %8 = vector.load %arg3[%7, %c0_4] : memref<512x128xbf16, #tpu.memory_space<vmem>>, vector<256x128xbf16>
    %cst = arith.constant dense<0.000000e+00> : vector<256x128xf32>
    %9 = tpu.matmul %6, %8, %cst {dimension_numbers = #tpu.dot_dimension_numbers<[1], [0], [0], [1], [0, 0, 1, 1], [], []>} : vector<256x256xbf16>, vector<256x128xbf16>, vector<256x128xf32> -> vector<256x128xf32>
    %10 = arith.addf %5, %9 : vector<256x128xf32>
    %c0_5 = arith.constant 0 : index
    %c0_6 = arith.constant 0 : index
    %11 = vector.load %arg7[%c0_5, %c0_6] : memref<256x128xf32, #tpu.memory_space<vmem>>, vector<256x128xf32>
    tpu.vector_store %arg7[%c0_5, %c0_6], %10 {strides = array<i32>} : memref<256x128xf32, #tpu.memory_space<vmem>>, vector<256x128xf32>,
    %c1_i32 = arith.constant 1 : i32
    %12 = arith.cmpi eq, %arg1, %c1_i32 : i32
    %13 = arith.extui %12 : i1 to i32
    %c0_i32_7 = arith.constant 0 : i32
    %14 = arith.cmpi ne, %13, %c0_i32_7 : i32
    scf.if %14 {
      %c0_8 = arith.constant 0 : index
      %c0_9 = arith.constant 0 : index
      %15 = vector.load %arg7[%c0_8, %c0_9] : memref<256x128xf32, #tpu.memory_space<vmem>>, vector<256x128xf32>
      %c0_10 = arith.constant 0 : index
      %c0_11 = arith.constant 0 : index
      %16 = vector.load %arg4[%c0_10, %c0_11] : memref<128x128xf32, #tpu.memory_space<vmem>>, vector<128x128xf32>
      %cst_12 = arith.constant dense<0.000000e+00> : vector<256x128xf32>
      %17 = tpu.matmul %15, %16, %cst_12 {dimension_numbers = #tpu.dot_dimension_numbers<[1], [0], [0], [1], [0, 0, 1, 1], [], []>} : vector<256x128xf32>, vector<128x128xf32>, vector<256x128xf32> -> vector<256x128xf32>
      %c0_13 = arith.constant 0 : index
      %c0_14 = arith.constant 0 : index
      %18 = vector.load %arg5[%c0_13, %c0_14] : memref<1x128xf32, #tpu.memory_space<vmem>>, vector<1x128xf32>
      %19 = vector.broadcast %18 : vector<1x128xf32> to vector<256x128xf32>
      %20 = arith.addf %17, %19 : vector<256x128xf32>
      %cst_15 = arith.constant 0.000000e+00 : f32
      %21 = vector.broadcast %cst_15 : f32 to vector<256x128xf32>
      %22 = arith.maximumf %20, %21 : vector<256x128xf32>
      %23 = arith.truncf %22 : vector<256x128xf32> to vector<256x128xbf16>
      %c0_16 = arith.constant 0 : index
      %c0_17 = arith.constant 0 : index
      %24 = vector.load %arg6[%c0_16, %c0_17] : memref<256x128xbf16, #tpu.memory_space<vmem>>, vector<256x128xbf16>
      tpu.vector_store %arg6[%c0_16, %c0_17], %23 {strides = array<i32>} : memref<256x128xbf16, #tpu.memory_space<vmem>>, vector<256x128xbf16>,
    } else {
    }
    return
  }
  func.func @transform_0(%arg0: i32, %arg1: i32) -> (i32, i32) {
    %c0_i32 = arith.constant 0 : i32
    return %arg0, %arg1 : i32, i32
  }
  func.func @transform_1(%arg0: i32, %arg1: i32) -> (i32, i32) {
    %c0_i32 = arith.constant 0 : i32
    %c0_i32_0 = arith.constant 0 : i32
    %c0_i32_1 = arith.constant 0 : i32
    return %c0_i32, %c0_i32_0 : i32, i32
  }
  func.func @transform_2(%arg0: i32, %arg1: i32) -> (i32, i32) {
    %c0_i32 = arith.constant 0 : i32
    %c0_i32_0 = arith.constant 0 : i32
    %c0_i32_1 = arith.constant 0 : i32
    return %c0_i32, %c0_i32_0 : i32, i32
  }
  func.func @transform_3(%arg0: i32, %arg1: i32) -> (i32, i32) {
    %c0_i32 = arith.constant 0 : i32
    %c0_i32_0 = arith.constant 0 : i32
    %c0_i32_1 = arith.constant 0 : i32
    return %c0_i32, %c0_i32_0 : i32, i32
  }
  func.func @transform_4(%arg0: i32, %arg1: i32) -> (i32, i32) {
    %c0_i32 = arith.constant 0 : i32
    %c0_i32_0 = arith.constant 0 : i32
    return %arg0, %c0_i32 : i32, i32
  }
}

module attributes {stable_mosaic.version = 11 : i64} {
  func.func @_gcn_head_kernel(%arg0: i32, %arg1: memref<8x512xbf16, #tpu.memory_space<vmem>>, %arg2: memref<512x128xbf16, #tpu.memory_space<vmem>>, %arg3: memref<128x128xf32, #tpu.memory_space<vmem>>, %arg4: memref<1x128xf32, #tpu.memory_space<vmem>>, %arg5: memref<128x128xf32, #tpu.memory_space<vmem>>, %arg6: memref<1x128xf32, #tpu.memory_space<vmem>>, %arg7: memref<8x128xf32, #tpu.memory_space<vmem>>, %arg8: memref<8x128xf32, #tpu.memory_space<vmem>>) attributes {dimension_semantics = [#tpu.dimension_semantics<arbitrary>], iteration_bounds = array<i64: 1>, scalar_prefetch = 0 : i64, scratch_operands = 1 : i64, tpu.core_type = #tpu.core_type<tc>, window_params = [{transform_indices = @transform_0, window_bounds = array<i64: 8, 512>}, {transform_indices = @transform_1, window_bounds = array<i64: 512, 128>}, {pipeline_mode = #tpu.pipeline_mode<synchronous>, transform_indices = @transform_2, window_bounds = array<i64: 128, 128>}, {pipeline_mode = #tpu.pipeline_mode<synchronous>, transform_indices = @transform_3, window_bounds = array<i64: 1, 128>}, {pipeline_mode = #tpu.pipeline_mode<synchronous>, transform_indices = @transform_4, window_bounds = array<i64: 128, 128>}, {pipeline_mode = #tpu.pipeline_mode<synchronous>, transform_indices = @transform_5, window_bounds = array<i64: 1, 128>}, {pipeline_mode = #tpu.pipeline_mode<synchronous>, transform_indices = @transform_6, window_bounds = array<i64: 8, 128>}]} {
    %c0_i32 = arith.constant 0 : i32
    %0 = arith.cmpi eq, %arg0, %c0_i32 : i32
    %1 = arith.extui %0 : i1 to i32
    %c0_i32_0 = arith.constant 0 : i32
    %2 = arith.cmpi ne, %1, %c0_i32_0 : i32
    scf.if %2 {
      %cst_10 = arith.constant 0.000000e+00 : f32
      %12 = vector.broadcast %cst_10 : f32 to vector<8x128xf32>
      %c0_11 = arith.constant 0 : index
      %c0_12 = arith.constant 0 : index
      %13 = vector.load %arg8[%c0_11, %c0_12] : memref<8x128xf32, #tpu.memory_space<vmem>>, vector<8x128xf32>
      tpu.vector_store %arg8[%c0_11, %c0_12], %12 {strides = array<i32>} : memref<8x128xf32, #tpu.memory_space<vmem>>, vector<8x128xf32>,
    } else {
    }
    %c0 = arith.constant 0 : index
    %c0_1 = arith.constant 0 : index
    %3 = vector.load %arg8[%c0, %c0_1] : memref<8x128xf32, #tpu.memory_space<vmem>>, vector<8x128xf32>
    %c0_2 = arith.constant 0 : index
    %c0_3 = arith.constant 0 : index
    %4 = vector.load %arg1[%c0_2, %c0_3] : memref<8x512xbf16, #tpu.memory_space<vmem>>, vector<8x512xbf16>
    %c0_4 = arith.constant 0 : index
    %c0_5 = arith.constant 0 : index
    %5 = vector.load %arg2[%c0_4, %c0_5] : memref<512x128xbf16, #tpu.memory_space<vmem>>, vector<512x128xbf16>
    %cst = arith.constant dense<0.000000e+00> : vector<8x128xf32>
    %6 = tpu.matmul %4, %5, %cst {dimension_numbers = #tpu.dot_dimension_numbers<[1], [0], [0], [1], [0, 0, 1, 1], [], []>} : vector<8x512xbf16>, vector<512x128xbf16>, vector<8x128xf32> -> vector<8x128xf32>
    %7 = arith.addf %3, %6 : vector<8x128xf32>
    %c0_6 = arith.constant 0 : index
    %c0_7 = arith.constant 0 : index
    %8 = vector.load %arg8[%c0_6, %c0_7] : memref<8x128xf32, #tpu.memory_space<vmem>>, vector<8x128xf32>
    tpu.vector_store %arg8[%c0_6, %c0_7], %7 {strides = array<i32>} : memref<8x128xf32, #tpu.memory_space<vmem>>, vector<8x128xf32>,
    %c0_i32_8 = arith.constant 0 : i32
    %9 = arith.cmpi eq, %arg0, %c0_i32_8 : i32
    %10 = arith.extui %9 : i1 to i32
    %c0_i32_9 = arith.constant 0 : i32
    %11 = arith.cmpi ne, %10, %c0_i32_9 : i32
    scf.if %11 {
      %c0_10 = arith.constant 0 : index
      %c0_11 = arith.constant 0 : index
      %12 = vector.load %arg8[%c0_10, %c0_11] : memref<8x128xf32, #tpu.memory_space<vmem>>, vector<8x128xf32>
      %c0_12 = arith.constant 0 : index
      %c0_13 = arith.constant 0 : index
      %13 = vector.load %arg3[%c0_12, %c0_13] : memref<128x128xf32, #tpu.memory_space<vmem>>, vector<128x128xf32>
      %cst_14 = arith.constant dense<0.000000e+00> : vector<8x128xf32>
      %14 = tpu.matmul %12, %13, %cst_14 {dimension_numbers = #tpu.dot_dimension_numbers<[1], [0], [0], [1], [0, 0, 1, 1], [], []>} : vector<8x128xf32>, vector<128x128xf32>, vector<8x128xf32> -> vector<8x128xf32>
      %c0_15 = arith.constant 0 : index
      %c0_16 = arith.constant 0 : index
      %15 = vector.load %arg4[%c0_15, %c0_16] : memref<1x128xf32, #tpu.memory_space<vmem>>, vector<1x128xf32>
      %16 = vector.broadcast %15 : vector<1x128xf32> to vector<8x128xf32>
      %17 = arith.addf %14, %16 : vector<8x128xf32>
      %c0_17 = arith.constant 0 : index
      %c0_18 = arith.constant 0 : index
      %18 = vector.load %arg5[%c0_17, %c0_18] : memref<128x128xf32, #tpu.memory_space<vmem>>, vector<128x128xf32>
      %cst_19 = arith.constant dense<0.000000e+00> : vector<8x128xf32>
      %19 = tpu.matmul %17, %18, %cst_19 {dimension_numbers = #tpu.dot_dimension_numbers<[1], [0], [0], [1], [0, 0, 1, 1], [], []>} : vector<8x128xf32>, vector<128x128xf32>, vector<8x128xf32> -> vector<8x128xf32>
      %c0_20 = arith.constant 0 : index
      %c0_21 = arith.constant 0 : index
      %20 = vector.load %arg6[%c0_20, %c0_21] : memref<1x128xf32, #tpu.memory_space<vmem>>, vector<1x128xf32>
      %21 = vector.broadcast %20 : vector<1x128xf32> to vector<8x128xf32>
      %22 = arith.addf %19, %21 : vector<8x128xf32>
      %c0_22 = arith.constant 0 : index
      %c0_23 = arith.constant 0 : index
      %23 = vector.load %arg7[%c0_22, %c0_23] : memref<8x128xf32, #tpu.memory_space<vmem>>, vector<8x128xf32>
      tpu.vector_store %arg7[%c0_22, %c0_23], %22 {strides = array<i32>} : memref<8x128xf32, #tpu.memory_space<vmem>>, vector<8x128xf32>,
    } else {
    }
    return
  }
  func.func @transform_0(%arg0: i32) -> (i32, i32) {
    %c0_i32 = arith.constant 0 : i32
    %c0_i32_0 = arith.constant 0 : i32
    return %c0_i32, %arg0 : i32, i32
  }
  func.func @transform_1(%arg0: i32) -> (i32, i32) {
    %c0_i32 = arith.constant 0 : i32
    %c0_i32_0 = arith.constant 0 : i32
    return %arg0, %c0_i32 : i32, i32
  }
  func.func @transform_2(%arg0: i32) -> (i32, i32) {
    %c0_i32 = arith.constant 0 : i32
    %c0_i32_0 = arith.constant 0 : i32
    %c0_i32_1 = arith.constant 0 : i32
    return %c0_i32, %c0_i32_0 : i32, i32
  }
  func.func @transform_3(%arg0: i32) -> (i32, i32) {
    %c0_i32 = arith.constant 0 : i32
    %c0_i32_0 = arith.constant 0 : i32
    %c0_i32_1 = arith.constant 0 : i32
    return %c0_i32, %c0_i32_0 : i32, i32
  }
  func.func @transform_4(%arg0: i32) -> (i32, i32) {
    %c0_i32 = arith.constant 0 : i32
    %c0_i32_0 = arith.constant 0 : i32
    %c0_i32_1 = arith.constant 0 : i32
    return %c0_i32, %c0_i32_0 : i32, i32
  }
  func.func @transform_5(%arg0: i32) -> (i32, i32) {
    %c0_i32 = arith.constant 0 : i32
    %c0_i32_0 = arith.constant 0 : i32
    %c0_i32_1 = arith.constant 0 : i32
    return %c0_i32, %c0_i32_0 : i32, i32
  }
  func.func @transform_6(%arg0: i32) -> (i32, i32) {
    %c0_i32 = arith.constant 0 : i32
    %c0_i32_0 = arith.constant 0 : i32
    %c0_i32_1 = arith.constant 0 : i32
    return %c0_i32, %c0_i32_0 : i32, i32
  }
}

</mosaic_0001>

<llo_original>
// kernel: gcn_forward.5
$region0: #{gcn_forward.5}
  #allocation0 [shape = 'u32[]', space=smem, size = 0x4, offset = 0x4, fixed_abs, tag = 'smem constant byte address 0x4 - core index']
  #allocation1 [shape = 'u32[144,128]{1,0:T(1,128)}', space=vmem, size = 0x12000, scoped, tag = 'internal scratch']
  #allocation2 [shape = 'f32[256,128]{1,0:T(8,128)}', space=vmem, size = 0x20000, scoped, tag = 'scratch operand']
  %s0 = inlined_call_operand.vmem [shape: bf16[512,512], index: 0, kind: input, shape index: {}]
  %s1 = inlined_call_operand.vmem [shape: bf16[512,128], index: 1, kind: input, shape index: {}]
  %s2 = inlined_call_operand.vmem [shape: f32[128,128], index: 2, kind: input, shape index: {}]
  %s3 = inlined_call_operand.vmem [shape: f32[1,128], index: 3, kind: input, shape index: {}]
  %s4 = inlined_call_operand.vmem [shape: bf16[512,128], index: 4, kind: output, shape index: {}]
  %s5 = sld [smem:[#allocation0]]
  $region95: #{gcn_forward.5} parent=0
    _
  %s7 = ssub.s32 1, %s5
  %s8 = scalar_select 0, %s7, %s5
  $region1: #{gcn_forward.5} parent=0
    #allocation3 [shape = 'u8[262144]{0}', space=vmem, size = 0x40000, scoped, tag = 'input window, operand 0']
    loop: start=0, step=1, limit=6
    $region2: #{gcn_forward.5} parent=1 // loop_pre_header
      _
    $region3: #{gcn_forward.5} parent=1 // loop_header
      %s10 = sphi 0, %s14
      %p11 = scmp.ge.s32.totalorder %s10, 6
      %s17 = sphi 0, %s29
      %s18 = sphi 0, %s25
      %s19 = sphi 0, %s17
      %s20 = sphi 0, %s18
      %s21 = sphi 0, %s19
      %s22 = sphi 0, %s20
      %s34 = sphi 0, %s36
      %s37 = sphi 0, %s34
      %s38 = sphi 0, %s37
      %s54 = sphi 0, %s38
      %s58 = sphi 0, %s58
      %s60 = sphi 0, %s58
      %s61 = sphi 0, %s60
      %s75 = sphi 0, %s61
      %s79 = sphi 0, %s79
      %s81 = sphi 0, %s79
      %s82 = sphi 0, %s81
      %s96 = sphi 0, %s82
      %s100 = sphi 0, %s100
      %s102 = sphi 0, %s100
      %s103 = sphi 0, %s102
      %s117 = sphi 0, %s103
      %s123 = sphi 0, %s125
      %s126 = sphi 0, %s123
      %s127 = sphi 0, %s126
      %s143 = sphi 0, %s127
    $region4: #{gcn_forward.5} parent=1 // loop_header_branch
      %13 = sbr.rel (%p11) target = $region8
    $region5: #{gcn_forward.5} parent=1 // loop_body
      %s15 = ssub.s32 %s10, 1
      %s16 = ssub.s32 %s10, 2
      %s23 = sadd.s32 1, %s18
      %p24 = scmp.ge.s32.totalorder %s23, 2
      %s25 = scalar_select %p24, 0, %s23
      %s26 = sadd.s32 1, %s17
      %s27 = scalar_select %p24, %s26, %s17
      %p28 = scmp.ge.s32.totalorder %s27, 2
      %s29 = scalar_select %p28, 0, %s27
      %s30 = ssub.s32 %s17, %s29
      %s31 = ssub.s32 %s18, %s25
      %s32 = sor.u32 %s30, %s31
      %p33 = scmp.eq.s32.totalorder %s32, 0
      %s35 = sadd.s32 %s34, 1
      %s36 = scalar_select %p33, %s34, %s35
      %p39 = pneg %p33
      %p40 = scmp.eq.s32.totalorder %s10, 3
      %p41 = por %p39, %p40
      %p42 = scmp.ne.s32.totalorder %s34, %s37
      %p43 = scmp.eq.s32.totalorder %s10, 0
      %p44 = por %p42, %p43
      %p45 = scmp.ne.s32.totalorder %s34, %s37
      %p46 = scmp.eq.s32.totalorder %s15, 3
      %p47 = por %p45, %p46
      %p48 = scmp.ne.s32.totalorder %s37, %s38
      %p49 = scmp.eq.s32.totalorder %s15, 0
      %p50 = por %p48, %p49
      %p51 = scmp.ne.s32.totalorder %s37, %s38
      %p52 = scmp.eq.s32.totalorder %s16, 3
      %p53 = por %p51, %p52
      %p55 = scmp.ne.s32.totalorder %s38, %s54
      %p56 = scmp.eq.s32.totalorder %s16, 0
      %p57 = por %p55, %p56
      %s59 = sadd.s32 %s58, 1
      %p62 = scmp.eq.s32.totalorder %s10, 3
      %p63 = scmp.ne.s32.totalorder %s58, %s60
      %p64 = scmp.eq.s32.totalorder %s10, 0
      %p65 = por %p63, %p64
      %p66 = scmp.ne.s32.totalorder %s58, %s60
      %p67 = scmp.eq.s32.totalorder %s15, 3
      %p68 = por %p66, %p67
      %p69 = scmp.ne.s32.totalorder %s60, %s61
      %p70 = scmp.eq.s32.totalorder %s15, 0
      %p71 = por %p69, %p70
      %p72 = scmp.ne.s32.totalorder %s60, %s61
      %p73 = scmp.eq.s32.totalorder %s16, 3
      %p74 = por %p72, %p73
      %p76 = scmp.ne.s32.totalorder %s61, %s75
      %p77 = scmp.eq.s32.totalorder %s16, 0
      %p78 = por %p76, %p77
      %s80 = sadd.s32 %s79, 1
      %p83 = scmp.eq.s32.totalorder %s10, 3
      %p84 = scmp.ne.s32.totalorder %s79, %s81
      %p85 = scmp.eq.s32.totalorder %s10, 0
      %p86 = por %p84, %p85
      %p87 = scmp.ne.s32.totalorder %s79, %s81
      %p88 = scmp.eq.s32.totalorder %s15, 3
      %p89 = por %p87, %p88
      %p90 = scmp.ne.s32.totalorder %s81, %s82
      %p91 = scmp.eq.s32.totalorder %s15, 0
      %p92 = por %p90, %p91
      %p93 = scmp.ne.s32.totalorder %s81, %s82
      %p94 = scmp.eq.s32.totalorder %s16, 3
      %p95 = por %p93, %p94
      %p97 = scmp.ne.s32.totalorder %s82, %s96
      %p98 = scmp.eq.s32.totalorder %s16, 0
      %p99 = por %p97, %p98
      %s101 = sadd.s32 %s100, 1
      %p104 = scmp.eq.s32.totalorder %s10, 3
      %p105 = scmp.ne.s32.totalorder %s100, %s102
      %p106 = scmp.eq.s32.totalorder %s10, 0
      %p107 = por %p105, %p106
      %p108 = scmp.ne.s32.totalorder %s100, %s102
      %p109 = scmp.eq.s32.totalorder %s15, 3
      %p110 = por %p108, %p109
      %p111 = scmp.ne.s32.totalorder %s102, %s103
      %p112 = scmp.eq.s32.totalorder %s15, 0
      %p113 = por %p111, %p112
      %p114 = scmp.ne.s32.totalorder %s102, %s103
      %p115 = scmp.eq.s32.totalorder %s16, 3
      %p116 = por %p114, %p115
      %p118 = scmp.ne.s32.totalorder %s103, %s117
      %p119 = scmp.eq.s32.totalorder %s16, 0
      %p120 = por %p118, %p119
      %s121 = ssub.s32 %s17, %s29
      %p122 = scmp.eq.s32.totalorder %s121, 0
      %s124 = sadd.s32 %s123, 1
      %s125 = scalar_select %p122, %s123, %s124
      %p128 = pneg %p122
      %p129 = scmp.eq.s32.totalorder %s10, 3
      %p130 = por %p128, %p129
      %p131 = scmp.ne.s32.totalorder %s123, %s126
      %p132 = scmp.eq.s32.totalorder %s10, 0
      %p133 = por %p131, %p132
      %p134 = scmp.ne.s32.totalorder %s123, %s126
      %p135 = scmp.eq.s32.totalorder %s15, 3
      %p136 = por %p134, %p135
      %p137 = scmp.ne.s32.totalorder %s126, %s127
      %p138 = scmp.eq.s32.totalorder %s15, 0
      %p139 = por %p137, %p138
      %p140 = scmp.ne.s32.totalorder %s126, %s127
      %p141 = scmp.eq.s32.totalorder %s16, 3
      %p142 = por %p140, %p141
      %p144 = scmp.ne.s32.totalorder %s127, %s143
      %p145 = scmp.eq.s32.totalorder %s16, 0
      %p146 = por %p144, %p145
      %p147 = scmp.le.s32.totalorder 1, %s10
      %p148 = scmp.lt.s32.totalorder %s10, 5
      %p149 = pnand %p147, %p148
      %p150 = pneg %p149
      // Predicated region
      $region9: #{gcn_forward.5} parent=5 // pred_check
        _
      $region10: #{gcn_forward.5} parent=5 // pred_check_branch
        %152 = sbr.rel (%p149) target = $region12
      $region11: #{gcn_forward.5} parent=5 // pred_region
        %s153 = ssub.s32 %s10, 1
        // Predicated region
        $region13: #{gcn_forward.5} parent=11 // pred_check
          %p154 = pneg %p71
        $region14: #{gcn_forward.5} parent=11 // pred_check_branch
          %156 = sbr.rel (%p154) target = $region16
        $region15: #{gcn_forward.5} parent=11 // pred_region
          _
        $region16: #{gcn_forward.5} parent=11 // pred_fallthru
          _
        // Predicated region
        $region17: #{gcn_forward.5} parent=11 // pred_check
          %p157 = pneg %p92
        $region18: #{gcn_forward.5} parent=11 // pred_check_branch
          %159 = sbr.rel (%p157) target = $region20
        $region19: #{gcn_forward.5} parent=11 // pred_region
          _
        $region20: #{gcn_forward.5} parent=11 // pred_fallthru
          _
        // Predicated region
        $region21: #{gcn_forward.5} parent=11 // pred_check
          %p160 = pneg %p113
        $region22: #{gcn_forward.5} parent=11 // pred_check_branch
          %162 = sbr.rel (%p160) target = $region24
        $region23: #{gcn_forward.5} parent=11 // pred_region
          _
        $region24: #{gcn_forward.5} parent=11 // pred_fallthru
          _
      $region12: #{gcn_forward.5} parent=5 // pred_fallthru
        _
      %p163 = scmp.lt.s32.totalorder %s10, 4
      // Predicated region
      $region25: #{gcn_forward.5} parent=5 // pred_check
        %p164 = pneg %p163
      $region26: #{gcn_forward.5} parent=5 // pred_check_branch
        %166 = sbr.rel (%p164) target = $region28
      $region27: #{gcn_forward.5} parent=5 // pred_region
        // Predicated region
        $region29: #{gcn_forward.5} parent=27 // pred_check
          %p167 = pneg %p44
        $region30: #{gcn_forward.5} parent=27 // pred_check_branch
          %169 = sbr.rel (%p167) target = $region32
        $region31: #{gcn_forward.5} parent=27 // pred_region
          %s170 = sand.u32 %s34, 1
          %s171 = sand.u32 %s34, 1
          %s172 = smul.addr %s171, 256
          %s173 = scalar_lea.vmem [#allocation3], %s172
          %s174 = smul.u32 32, %s17
          %s175 = smul.u32 2, %s18
          %s176 = smul.addr %s174, 4
          %s177 = sadd.s32 %s175, %s176
          %s178 = smul.addr %s177, 4
          %s179 = scalar_lea.vmem %s0, %s178
          // Predicated region
          $region33: #{gcn_forward.5} parent=31 // pred_check
            _
          $region34: #{gcn_forward.5} parent=31 // pred_check_branch
            %181 = sbr.rel (0) target = $region36
          $region35: #{gcn_forward.5} parent=31 // pred_region
            // Predicated region
            $region37: #{gcn_forward.5} parent=35 // pred_check
              _
            $region38: #{gcn_forward.5} parent=35 // pred_check_branch
              %183 = sbr.rel (0) target = $region40
            $region39: #{gcn_forward.5} parent=35 // pred_region
              // Predicated region
              $region52: #{gcn_forward.5} parent=39 // pred_check
                _
              $region53: #{gcn_forward.5} parent=39 // pred_check_branch
                %261 = sbr.rel (0) target = $region55
              $region54: #{gcn_forward.5} parent=39 // pred_region
                loop: start=0, step=1, limit=1
                $region56: #{gcn_forward.5} parent=54 // loop_pre_header
                  _
                $region57: #{gcn_forward.5} parent=54 // loop_header
                  %s263 = sphi 0, %s267
                  %p264 = scmp.ge.s32.totalorder %s263, 1
                  %s268 = sphi %s179, %s179
                  %s269 = sphi %s173, %s173
                $region58: #{gcn_forward.5} parent=54 // loop_header_branch
                  %266 = sbr.rel (%p264) target = $region62
                $region59: #{gcn_forward.5} parent=54 // loop_body
                  %v270 = vld [vmem:[%s268] sm:$0xff]
                  %271 = vst [vmem:[%s269] sm:$0xff] %v270
                  %v272 = vld [vmem:[%s268 + $0x10] sm:$0xff]
                  %273 = vst [vmem:[%s269 + $0x8] sm:$0xff] %v272
                  %v274 = vld [vmem:[%s268 + $0x20] sm:$0xff]
                  %275 = vst [vmem:[%s269 + $0x10] sm:$0xff] %v274
                  %v276 = vld [vmem:[%s268 + $0x30] sm:$0xff]
                  %277 = vst [vmem:[%s269 + $0x18] sm:$0xff] %v276
                  %v278 = vld [vmem:[%s268 + $0x40] sm:$0xff]
                  %279 = vst [vmem:[%s269 + $0x20] sm:$0xff] %v278
                  %v280 = vld [vmem:[%s268 + $0x50] sm:$0xff]
                  %281 = vst [vmem:[%s269 + $0x28] sm:$0xff] %v280
                  %v282 = vld [vmem:[%s268 + $0x60] sm:$0xff]
                  %283 = vst [vmem:[%s269 + $0x30] sm:$0xff] %v282
                  %v284 = vld [vmem:[%s268 + $0x70] sm:$0xff]
                  %285 = vst [vmem:[%s269 + $0x38] sm:$0xff] %v284
                  %v286 = vld [vmem:[%s268 + $0x80] sm:$0xff]
                  %287 = vst [vmem:[%s269 + $0x40] sm:$0xff] %v286
                  %v288 = vld [vmem:[%s268 + $0x90] sm:$0xff]
                  %289 = vst [vmem:[%s269 + $0x48] sm:$0xff] %v288
                  %v290 = vld [vmem:[%s268 + $0xa0] sm:$0xff]
                  %291 = vst [vmem:[%s269 + $0x50] sm:$0xff] %v290
                  %v292 = vld [vmem:[%s268 + $0xb0] sm:$0xff]
                  %293 = vst [vmem:[%s269 + $0x58] sm:$0xff] %v292
                  %v294 = vld [vmem:[%s268 + $0xc0] sm:$0xff]
                  %295 = vst [vmem:[%s269 + $0x60] sm:$0xff] %v294
                  %v296 = vld [vmem:[%s268 + $0xd0] sm:$0xff]
                  %297 = vst [vmem:[%s269 + $0x68] sm:$0xff] %v296
                  %v298 = vld [vmem:[%s268 + $0xe0] sm:$0xff]
                  %299 = vst [vmem:[%s269 + $0x70] sm:$0xff] %v298
                  %v300 = vld [vmem:[%s268 + $0xf0] sm:$0xff]
                  %301 = vst [vmem:[%s269 + $0x78] sm:$0xff] %v300
                  %v302 = vld [vmem:[%s268 + $0x100] sm:$0xff]
                  %303 = vst [vmem:[%s269 + $0x80] sm:$0xff] %v302
                  %v304 = vld [vmem:[%s268 + $0x110] sm:$0xff]
                  %305 = vst [vmem:[%s269 + $0x88] sm:$0xff] %v304
                  %v306 = vld [vmem:[%s268 + $0x120] sm:$0xff]
                  %307 = vst [vmem:[%s269 + $0x90] sm:$0xff] %v306
                  %v308 = vld [vmem:[%s268 + $0x130] sm:$0xff]
                  %309 = vst [vmem:[%s269 + $0x98] sm:$0xff] %v308
                  %v310 = vld [vmem:[%s268 + $0x140] sm:$0xff]
                  %311 = vst [vmem:[%s269 + $0xa0] sm:$0xff] %v310
                  %v312 = vld [vmem:[%s268 + $0x150] sm:$0xff]
                  %313 = vst [vmem:[%s269 + $0xa8] sm:$0xff] %v312
                  %v314 = vld [vmem:[%s268 + $0x160] sm:$0xff]
                  %315 = vst [vmem:[%s269 + $0xb0] sm:$0xff] %v314
                  %v316 = vld [vmem:[%s268 + $0x170] sm:$0xff]
                  %317 = vst [vmem:[%s269 + $0xb8] sm:$0xff] %v316
                  %v318 = vld [vmem:[%s268 + $0x180] sm:$0xff]
                  %319 = vst [vmem:[%s269 + $0xc0] sm:$0xff] %v318
                  %v320 = vld [vmem:[%s268 + $0x190] sm:$0xff]
                  %321 = vst [vmem:[%s269 + $0xc8] sm:$0xff] %v320
                  %v322 = vld [vmem:[%s268 + $0x1a0] sm:$0xff]
                  %323 = vst [vmem:[%s269 + $0xd0] sm:$0xff] %v322
                  %v324 = vld [vmem:[%s268 + $0x1b0] sm:$0xff]
                  %325 = vst [vmem:[%s269 + $0xd8] sm:$0xff] %v324
                  %v326 = vld [vmem:[%s268 + $0x1c0] sm:$0xff]
                  %327 = vst [vmem:[%s269 + $0xe0] sm:$0xff] %v326
                  %v328 = vld [vmem:[%s268 + $0x1d0] sm:$0xff]
                  %329 = vst [vmem:[%s269 + $0xe8] sm:$0xff] %v328
                  %v330 = vld [vmem:[%s268 + $0x1e0] sm:$0xff]
                  %331 = vst [vmem:[%s269 + $0xf0] sm:$0xff] %v330
                  %v332 = vld [vmem:[%s268 + $0x1f0] sm:$0xff]
                  %333 = vst [vmem:[%s269 + $0xf8] sm:$0xff] %v332
                $region60: #{gcn_forward.5} parent=54 // loop_footer
                  %s267 = sadd.s32 1, %s263
                $region61: #{gcn_forward.5} parent=54 // loop_footer_branch
                  %262 = sbr.rel target = $region57
                $region62: #{gcn_forward.5} parent=54 // loop_exit
                  _
              $region55: #{gcn_forward.5} parent=39 // pred_fallthru
                _
              // Predicated region
              $region63: #{gcn_forward.5} parent=39 // pred_check
                _
              $region64: #{gcn_forward.5} parent=39 // pred_check_branch
                %335 = sbr.rel target = $region66
              $region65: #{gcn_forward.5} parent=39 // pred_region
                _
              $region66: #{gcn_forward.5} parent=39 // pred_fallthru
                _
            $region40: #{gcn_forward.5} parent=35 // pred_fallthru
              _
            // Predicated region
            $region41: #{gcn_forward.5} parent=35 // pred_check
              _
            $region42: #{gcn_forward.5} parent=35 // pred_check_branch
              %185 = sbr.rel target = $region44
            $region43: #{gcn_forward.5} parent=35 // pred_region
              %s187 = ssub.s32 256, 1
              loop: start=0, step=1, limit=1
              $region45: #{gcn_forward.5} parent=43 // loop_pre_header
                _
              $region46: #{gcn_forward.5} parent=43 // loop_header
                %s189 = sphi 0, %s193
                %p190 = scmp.ge.s32.totalorder %s189, 1
                %s194 = sphi %s179, %s179
                %s195 = sphi %s173, %s173
              $region47: #{gcn_forward.5} parent=43 // loop_header_branch
                %192 = sbr.rel (%p190) target = $region51
              $region48: #{gcn_forward.5} parent=43 // loop_body
                %v196 = vld [vmem:[%s194] sm:%s187]
                %197 = vst [vmem:[%s195] sm:%s187] %v196
                %v198 = vld [vmem:[%s194 + $0x10] sm:%s187]
                %199 = vst [vmem:[%s195 + $0x8] sm:%s187] %v198
                %v200 = vld [vmem:[%s194 + $0x20] sm:%s187]
                %201 = vst [vmem:[%s195 + $0x10] sm:%s187] %v200
                %v202 = vld [vmem:[%s194 + $0x30] sm:%s187]
                %203 = vst [vmem:[%s195 + $0x18] sm:%s187] %v202
                %v204 = vld [vmem:[%s194 + $0x40] sm:%s187]
                %205 = vst [vmem:[%s195 + $0x20] sm:%s187] %v204
                %v206 = vld [vmem:[%s194 + $0x50] sm:%s187]
                %207 = vst [vmem:[%s195 + $0x28] sm:%s187] %v206
                %v208 = vld [vmem:[%s194 + $0x60] sm:%s187]
                %209 = vst [vmem:[%s195 + $0x30] sm:%s187] %v208
                %v210 = vld [vmem:[%s194 + $0x70] sm:%s187]
                %211 = vst [vmem:[%s195 + $0x38] sm:%s187] %v210
                %v212 = vld [vmem:[%s194 + $0x80] sm:%s187]
                %213 = vst [vmem:[%s195 + $0x40] sm:%s187] %v212
                %v214 = vld [vmem:[%s194 + $0x90] sm:%s187]
                %215 = vst [vmem:[%s195 + $0x48] sm:%s187] %v214
                %v216 = vld [vmem:[%s194 + $0xa0] sm:%s187]
                %217 = vst [vmem:[%s195 + $0x50] sm:%s187] %v216
                %v218 = vld [vmem:[%s194 + $0xb0] sm:%s187]
                %219 = vst [vmem:[%s195 + $0x58] sm:%s187] %v218
                %v220 = vld [vmem:[%s194 + $0xc0] sm:%s187]
                %221 = vst [vmem:[%s195 + $0x60] sm:%s187] %v220
                %v222 = vld [vmem:[%s194 + $0xd0] sm:%s187]
                %223 = vst [vmem:[%s195 + $0x68] sm:%s187] %v222
                %v224 = vld [vmem:[%s194 + $0xe0] sm:%s187]
                %225 = vst [vmem:[%s195 + $0x70] sm:%s187] %v224
                %v226 = vld [vmem:[%s194 + $0xf0] sm:%s187]
                %227 = vst [vmem:[%s195 + $0x78] sm:%s187] %v226
                %v228 = vld [vmem:[%s194 + $0x100] sm:%s187]
                %229 = vst [vmem:[%s195 + $0x80] sm:%s187] %v228
                %v230 = vld [vmem:[%s194 + $0x110] sm:%s187]
                %231 = vst [vmem:[%s195 + $0x88] sm:%s187] %v230
                %v232 = vld [vmem:[%s194 + $0x120] sm:%s187]
                %233 = vst [vmem:[%s195 + $0x90] sm:%s187] %v232
                %v234 = vld [vmem:[%s194 + $0x130] sm:%s187]
                %235 = vst [vmem:[%s195 + $0x98] sm:%s187] %v234
                %v236 = vld [vmem:[%s194 + $0x140] sm:%s187]
                %237 = vst [vmem:[%s195 + $0xa0] sm:%s187] %v236
                %v238 = vld [vmem:[%s194 + $0x150] sm:%s187]
                %239 = vst [vmem:[%s195 + $0xa8] sm:%s187] %v238
                %v240 = vld [vmem:[%s194 + $0x160] sm:%s187]
                %241 = vst [vmem:[%s195 + $0xb0] sm:%s187] %v240
                %v242 = vld [vmem:[%s194 + $0x170] sm:%s187]
                %243 = vst [vmem:[%s195 + $0xb8] sm:%s187] %v242
                %v244 = vld [vmem:[%s194 + $0x180] sm:%s187]
                %245 = vst [vmem:[%s195 + $0xc0] sm:%s187] %v244
                %v246 = vld [vmem:[%s194 + $0x190] sm:%s187]
                %247 = vst [vmem:[%s195 + $0xc8] sm:%s187] %v246
                %v248 = vld [vmem:[%s194 + $0x1a0] sm:%s187]
                %249 = vst [vmem:[%s195 + $0xd0] sm:%s187] %v248
                %v250 = vld [vmem:[%s194 + $0x1b0] sm:%s187]
                %251 = vst [vmem:[%s195 + $0xd8] sm:%s187] %v250
                %v252 = vld [vmem:[%s194 + $0x1c0] sm:%s187]
                %253 = vst [vmem:[%s195 + $0xe0] sm:%s187] %v252
                %v254 = vld [vmem:[%s194 + $0x1d0] sm:%s187]
                %255 = vst [vmem:[%s195 + $0xe8] sm:%s187] %v254
                %v256 = vld [vmem:[%s194 + $0x1e0] sm:%s187]
                %257 = vst [vmem:[%s195 + $0xf0] sm:%s187] %v256
                %v258 = vld [vmem:[%s194 + $0x1f0] sm:%s187]
                %259 = vst [vmem:[%s195 + $0xf8] sm:%s187] %v258
              $region49: #{gcn_forward.5} parent=43 // loop_footer
                %s193 = sadd.s32 1, %s189
              $region50: #{gcn_forward.5} parent=43 // loop_footer_branch
                %188 = sbr.rel target = $region46
              $region51: #{gcn_forward.5} parent=43 // loop_exit
                _
            $region44: #{gcn_forward.5} parent=35 // pred_fallthru
              _
          $region36: #{gcn_forward.5} parent=31 // pred_fallthru
            _
          %336 = vnop
        $region32: #{gcn_forward.5} parent=27 // pred_fallthru
          _
      $region28: #{gcn_forward.5} parent=5 // pred_fallthru
        _
      %p337 = scmp.le.s32.totalorder 1, %s10
      %p338 = scmp.lt.s32.totalorder %s10, 5
      %p339 = pnand %p337, %p338
      %p340 = pneg %p339
      // Predicated region
      $region67: #{gcn_forward.5} parent=5 // pred_check
        _
      $region68: #{gcn_forward.5} parent=5 // pred_check_branch
        %342 = sbr.rel (%p339) target = $region70
      $region69: #{gcn_forward.5} parent=5 // pred_region
        %s343 = ssub.s32 %s10, 1
        %s344 = sand.u32 %s37, 1
        %s345 = sand.u32 %s37, 1
        %s346 = smul.addr %s345, 256
        %s347 = scalar_lea.vmem [#allocation3], %s346
        // Predicated region
        $region71: #{gcn_forward.5} parent=69 // pred_check
          %p348 = pneg %p50
        $region72: #{gcn_forward.5} parent=69 // pred_check_branch
          %350 = sbr.rel (%p348) target = $region74
        $region73: #{gcn_forward.5} parent=69 // pred_region
          _
        $region74: #{gcn_forward.5} parent=69 // pred_fallthru
          _
        %s351 = sand.u32 %s37, 1
        %s352 = sand.u32 %s37, 1
        %s353 = smul.addr %s352, 256
        %s354 = scalar_lea.vmem [#allocation3], %s353
        %p355 = pneg %p50
        %p356 = pneg %p47
        %p357 = pneg %p71
        %p358 = pneg %p68
        %p359 = pneg %p92
        %p360 = pneg %p89
        %p361 = pneg %p113
        %p362 = pneg %p110
        %p363 = pneg %p139
        %p364 = pneg %p136
        %s365 = smul.u32 32, %s19
        %p366 = scmp.lt.s32.totalorder %s365, 63
        %s367 = scalar_select %p366, %s365, 63
        %s368 = smul.addr %s367, 4
        %s369 = scalar_lea.vmem %s4, %s368
        %s370 = smul.u32 32, %s19
        %s371 = smul.u32 2, %s20
        %s372 = smul.u32 32, %s19
        %p373 = scmp.lt.s32.totalorder %s372, 63
        %s374 = scalar_select %p373, %s372, 63
        %s375 = smul.addr %s374, 4
        %s376 = scalar_lea.vmem %s4, %s375
        %s377 = smul.u32 32, %s19
        %p379 = scmp.eq.s32.totalorder %s20, 0
        // Predicated region
        $region75: #{gcn_forward.5} parent=69 // pred_check
          %p380 = pneg %p379
        $region76: #{gcn_forward.5} parent=69 // pred_check_branch
          %382 = sbr.rel (%p380) target = $region78
        $region77: #{gcn_forward.5} parent=69 // pred_region
          %383 = vst [vmem:[#allocation2] sm:$0xff] 0.0
          %384 = vst [vmem:[#allocation2 + $0x8] sm:$0xff] 0.0
          %385 = vst [vmem:[#allocation2 + $0x10] sm:$0xff] 0.0
          %386 = vst [vmem:[#allocation2 + $0x18] sm:$0xff] 0.0
          %387 = vst [vmem:[#allocation2 + $0x20] sm:$0xff] 0.0
          %388 = vst [vmem:[#allocation2 + $0x28] sm:$0xff] 0.0
          %389 = vst [vmem:[#allocation2 + $0x30] sm:$0xff] 0.0
          %390 = vst [vmem:[#allocation2 + $0x38] sm:$0xff] 0.0
          %391 = vst [vmem:[#allocation2 + $0x40] sm:$0xff] 0.0
          %392 = vst [vmem:[#allocation2 + $0x48] sm:$0xff] 0.0
          %393 = vst [vmem:[#allocation2 + $0x50] sm:$0xff] 0.0
          %394 = vst [vmem:[#allocation2 + $0x58] sm:$0xff] 0.0
          %395 = vst [vmem:[#allocation2 + $0x60] sm:$0xff] 0.0
          %396 = vst [vmem:[#allocation2 + $0x68] sm:$0xff] 0.0
          %397 = vst [vmem:[#allocation2 + $0x70] sm:$0xff] 0.0
          %398 = vst [vmem:[#allocation2 + $0x78] sm:$0xff] 0.0
          %399 = vst [vmem:[#allocation2 + $0x80] sm:$0xff] 0.0
          %400 = vst [vmem:[#allocation2 + $0x88] sm:$0xff] 0.0
          %401 = vst [vmem:[#allocation2 + $0x90] sm:$0xff] 0.0
          %402 = vst [vmem:[#allocation2 + $0x98] sm:$0xff] 0.0
          %403 = vst [vmem:[#allocation2 + $0xa0] sm:$0xff] 0.0
          %404 = vst [vmem:[#allocation2 + $0xa8] sm:$0xff] 0.0
          %405 = vst [vmem:[#allocation2 + $0xb0] sm:$0xff] 0.0
          %406 = vst [vmem:[#allocation2 + $0xb8] sm:$0xff] 0.0
          %407 = vst [vmem:[#allocation2 + $0xc0] sm:$0xff] 0.0
          %408 = vst [vmem:[#allocation2 + $0xc8] sm:$0xff] 0.0
          %409 = vst [vmem:[#allocation2 + $0xd0] sm:$0xff] 0.0
          %410 = vst [vmem:[#allocation2 + $0xd8] sm:$0xff] 0.0
          %411 = vst [vmem:[#allocation2 + $0xe0] sm:$0xff] 0.0
          %412 = vst [vmem:[#allocation2 + $0xe8] sm:$0xff] 0.0
          %413 = vst [vmem:[#allocation2 + $0xf0] sm:$0xff] 0.0
          %414 = vst [vmem:[#allocation2 + $0xf8] sm:$0xff] 0.0
        $region78: #{gcn_forward.5} parent=69 // pred_fallthru
          _
        %s415 = smul.u32 %s20, 256
        %v416 = vld [vmem:[#allocation2] sm:$0xff]
        %v417 = vld [vmem:[#allocation2 + $0x8] sm:$0xff]
        %v418 = vld [vmem:[#allocation2 + $0x10] sm:$0xff]
        %v419 = vld [vmem:[#allocation2 + $0x18] sm:$0xff]
        %v420 = vld [vmem:[#allocation2 + $0x20] sm:$0xff]
        %v421 = vld [vmem:[#allocation2 + $0x28] sm:$0xff]
        %v422 = vld [vmem:[#allocation2 + $0x30] sm:$0xff]
        %v423 = vld [vmem:[#allocation2 + $0x38] sm:$0xff]
        %v424 = vld [vmem:[#allocation2 + $0x40] sm:$0xff]
        %v425 = vld [vmem:[#allocation2 + $0x48] sm:$0xff]
        %v426 = vld [vmem:[#allocation2 + $0x50] sm:$0xff]
        %v427 = vld [vmem:[#allocation2 + $0x58] sm:$0xff]
        %v428 = vld [vmem:[#allocation2 + $0x60] sm:$0xff]
        %v429 = vld [vmem:[#allocation2 + $0x68] sm:$0xff]
        %v430 = vld [vmem:[#allocation2 + $0x70] sm:$0xff]
        %v431 = vld [vmem:[#allocation2 + $0x78] sm:$0xff]
        %v432 = vld [vmem:[#allocation2 + $0x80] sm:$0xff]
        %v433 = vld [vmem:[#allocation2 + $0x88] sm:$0xff]
        %v434 = vld [vmem:[#allocation2 + $0x90] sm:$0xff]
        %v435 = vld [vmem:[#allocation2 + $0x98] sm:$0xff]
        %v436 = vld [vmem:[#allocation2 + $0xa0] sm:$0xff]
        %v437 = vld [vmem:[#allocation2 + $0xa8] sm:$0xff]
        %v438 = vld [vmem:[#allocation2 + $0xb0] sm:$0xff]
        %v439 = vld [vmem:[#allocation2 + $0xb8] sm:$0xff]
        %v440 = vld [vmem:[#allocation2 + $0xc0] sm:$0xff]
        %v441 = vld [vmem:[#allocation2 + $0xc8] sm:$0xff]
        %v442 = vld [vmem:[#allocation2 + $0xd0] sm:$0xff]
        %v443 = vld [vmem:[#allocation2 + $0xd8] sm:$0xff]
        %v444 = vld [vmem:[#allocation2 + $0xe0] sm:$0xff]
        %v445 = vld [vmem:[#allocation2 + $0xe8] sm:$0xff]
        %v446 = vld [vmem:[#allocation2 + $0xf0] sm:$0xff]
        %v447 = vld [vmem:[#allocation2 + $0xf8] sm:$0xff]
        %v448 = vld [vmem:[%s347] sm:$0xff]
        %v449 = vld [vmem:[%s347 + $0x8] sm:$0xff]
        %v450 = vld [vmem:[%s347 + $0x10] sm:$0xff]
        %v451 = vld [vmem:[%s347 + $0x18] sm:$0xff]
        %v452 = vld [vmem:[%s347 + $0x20] sm:$0xff]
        %v453 = vld [vmem:[%s347 + $0x28] sm:$0xff]
        %v454 = vld [vmem:[%s347 + $0x30] sm:$0xff]
        %v455 = vld [vmem:[%s347 + $0x38] sm:$0xff]
        %v456 = vld [vmem:[%s347 + $0x40] sm:$0xff]
        %v457 = vld [vmem:[%s347 + $0x48] sm:$0xff]
        %v458 = vld [vmem:[%s347 + $0x50] sm:$0xff]
        %v459 = vld [vmem:[%s347 + $0x58] sm:$0xff]
        %v460 = vld [vmem:[%s347 + $0x60] sm:$0xff]
        %v461 = vld [vmem:[%s347 + $0x68] sm:$0xff]
        %v462 = vld [vmem:[%s347 + $0x70] sm:$0xff]
        %v463 = vld [vmem:[%s347 + $0x78] sm:$0xff]
        %v464 = vld [vmem:[%s347 + $0x80] sm:$0xff]
        %v465 = vld [vmem:[%s347 + $0x88] sm:$0xff]
        %v466 = vld [vmem:[%s347 + $0x90] sm:$0xff]
        %v467 = vld [vmem:[%s347 + $0x98] sm:$0xff]
        %v468 = vld [vmem:[%s347 + $0xa0] sm:$0xff]
        %v469 = vld [vmem:[%s347 + $0xa8] sm:$0xff]
        %v470 = vld [vmem:[%s347 + $0xb0] sm:$0xff]
        %v471 = vld [vmem:[%s347 + $0xb8] sm:$0xff]
        %v472 = vld [vmem:[%s347 + $0xc0] sm:$0xff]
        %v473 = vld [vmem:[%s347 + $0xc8] sm:$0xff]
        %v474 = vld [vmem:[%s347 + $0xd0] sm:$0xff]
        %v475 = vld [vmem:[%s347 + $0xd8] sm:$0xff]
        %v476 = vld [vmem:[%s347 + $0xe0] sm:$0xff]
        %v477 = vld [vmem:[%s347 + $0xe8] sm:$0xff]
        %v478 = vld [vmem:[%s347 + $0xf0] sm:$0xff]
        %v479 = vld [vmem:[%s347 + $0xf8] sm:$0xff]
        %s480 = sshra.s32 %s415, 3
        %s481 = sand.u32 %s415, 7
        %s482 = smul.addr %s480, 4
        %s483 = scalar_lea.vmem %s1, %s482
        %v484 = vld [vmem:[%s483] sm:$0xf]
        %v485 = vld [vmem:[%s483 + $0x4] sm:$0xf]
        %v486 = vld [vmem:[%s483 + $0x8] sm:$0xf]
        %v487 = vld [vmem:[%s483 + $0xc] sm:$0xf]
        %v488 = vld [vmem:[%s483 + $0x10] sm:$0xf]
        %v489 = vld [vmem:[%s483 + $0x14] sm:$0xf]
        %v490 = vld [vmem:[%s483 + $0x18] sm:$0xf]
        %v491 = vld [vmem:[%s483 + $0x1c] sm:$0xf]
        %v492 = vld [vmem:[%s483 + $0x20] sm:$0xf]
        %v493 = vld [vmem:[%s483 + $0x24] sm:$0xf]
        %v494 = vld [vmem:[%s483 + $0x28] sm:$0xf]
        %v495 = vld [vmem:[%s483 + $0x2c] sm:$0xf]
        %v496 = vld [vmem:[%s483 + $0x30] sm:$0xf]
        %v497 = vld [vmem:[%s483 + $0x34] sm:$0xf]
        %v498 = vld [vmem:[%s483 + $0x38] sm:$0xf]
        %v499 = vld [vmem:[%s483 + $0x3c] sm:$0xf]
        %v500 = vld [vmem:[%s483 + $0x40] sm:$0xf]
        %v501 = vld [vmem:[%s483 + $0x44] sm:$0xf]
        %v502 = vld [vmem:[%s483 + $0x48] sm:$0xf]
        %v503 = vld [vmem:[%s483 + $0x4c] sm:$0xf]
        %v504 = vld [vmem:[%s483 + $0x50] sm:$0xf]
        %v505 = vld [vmem:[%s483 + $0x54] sm:$0xf]
        %v506 = vld [vmem:[%s483 + $0x58] sm:$0xf]
        %v507 = vld [vmem:[%s483 + $0x5c] sm:$0xf]
        %v508 = vld [vmem:[%s483 + $0x60] sm:$0xf]
        %v509 = vld [vmem:[%s483 + $0x64] sm:$0xf]
        %v510 = vld [vmem:[%s483 + $0x68] sm:$0xf]
        %v511 = vld [vmem:[%s483 + $0x6c] sm:$0xf]
        %v512 = vld [vmem:[%s483 + $0x70] sm:$0xf]
        %v513 = vld [vmem:[%s483 + $0x74] sm:$0xf]
        %v514 = vld [vmem:[%s483 + $0x78] sm:$0xf]
        %v515 = vld [vmem:[%s483 + $0x7c] sm:$0xf]
        %v548 = vunpack.c.l.b16 %v448
        %v549 = vunpack.c.h.b16 %v448
        %v550 = vunpack.c.l.b16 %v449
        %v551 = vunpack.c.h.b16 %v449
        %v552 = vunpack.c.l.b16 %v450
        %v553 = vunpack.c.h.b16 %v450
        %v554 = vunpack.c.l.b16 %v451
        %v555 = vunpack.c.h.b16 %v451
        %v556 = vunpack.c.l.b16 %v452
        %v557 = vunpack.c.h.b16 %v452
        %v558 = vunpack.c.l.b16 %v453
        %v559 = vunpack.c.h.b16 %v453
        %v560 = vunpack.c.l.b16 %v454
        %v561 = vunpack.c.h.b16 %v454
        %v562 = vunpack.c.l.b16 %v455
        %v563 = vunpack.c.h.b16 %v455
        %v564 = vunpack.c.l.b16 %v456
        %v565 = vunpack.c.h.b16 %v456
        %v566 = vunpack.c.l.b16 %v457
        %v567 = vunpack.c.h.b16 %v457
        %v568 = vunpack.c.l.b16 %v458
        %v569 = vunpack.c.h.b16 %v458
        %v570 = vunpack.c.l.b16 %v459
        %v571 = vunpack.c.h.b16 %v459
        %v572 = vunpack.c.l.b16 %v460
        %v573 = vunpack.c.h.b16 %v460
        %v574 = vunpack.c.l.b16 %v461
        %v575 = vunpack.c.h.b16 %v461
        %v576 = vunpack.c.l.b16 %v462
        %v577 = vunpack.c.h.b16 %v462
        %v578 = vunpack.c.l.b16 %v463
        %v579 = vunpack.c.h.b16 %v463
        %v580 = vunpack.c.l.b16 %v464
        %v581 = vunpack.c.h.b16 %v464
        %v582 = vunpack.c.l.b16 %v465
        %v583 = vunpack.c.h.b16 %v465
        %v584 = vunpack.c.l.b16 %v466
        %v585 = vunpack.c.h.b16 %v466
        %v586 = vunpack.c.l.b16 %v467
        %v587 = vunpack.c.h.b16 %v467
        %v588 = vunpack.c.l.b16 %v468
        %v589 = vunpack.c.h.b16 %v468
        %v590 = vunpack.c.l.b16 %v469
        %v591 = vunpack.c.h.b16 %v469
        %v592 = vunpack.c.l.b16 %v470
        %v593 = vunpack.c.h.b16 %v470
        %v594 = vunpack.c.l.b16 %v471
        %v595 = vunpack.c.h.b16 %v471
        %v596 = vunpack.c.l.b16 %v472
        %v597 = vunpack.c.h.b16 %v472
        %v598 = vunpack.c.l.b16 %v473
        %v599 = vunpack.c.h.b16 %v473
        %v600 = vunpack.c.l.b16 %v474
        %v601 = vunpack.c.h.b16 %v474
        %v602 = vunpack.c.l.b16 %v475
        %v603 = vunpack.c.h.b16 %v475
        %v604 = vunpack.c.l.b16 %v476
        %v605 = vunpack.c.h.b16 %v476
        %v606 = vunpack.c.l.b16 %v477
        %v607 = vunpack.c.h.b16 %v477
        %v608 = vunpack.c.l.b16 %v478
        %v609 = vunpack.c.h.b16 %v478
        %v610 = vunpack.c.l.b16 %v479
        %v611 = vunpack.c.h.b16 %v479
        %v612 = vpack.c.b16 %v550, %v548
        %v613 = vpack.c.b16 %v551, %v549
        %v614 = vpack.c.b16 %v554, %v552
        %v615 = vpack.c.b16 %v555, %v553
        %v616 = vpack.c.b16 %v558, %v556
        %v617 = vpack.c.b16 %v559, %v557
        %v618 = vpack.c.b16 %v562, %v560
        %v619 = vpack.c.b16 %v563, %v561
        %v620 = vpack.c.b16 %v566, %v564
        %v621 = vpack.c.b16 %v567, %v565
        %v622 = vpack.c.b16 %v570, %v568
        %v623 = vpack.c.b16 %v571, %v569
        %v624 = vpack.c.b16 %v574, %v572
        %v625 = vpack.c.b16 %v575, %v573
        %v626 = vpack.c.b16 %v578, %v576
        %v627 = vpack.c.b16 %v579, %v577
        %v628 = vpack.c.b16 %v582, %v580
        %v629 = vpack.c.b16 %v583, %v581
        %v630 = vpack.c.b16 %v586, %v584
        %v631 = vpack.c.b16 %v587, %v585
        %v632 = vpack.c.b16 %v590, %v588
        %v633 = vpack.c.b16 %v591, %v589
        %v634 = vpack.c.b16 %v594, %v592
        %v635 = vpack.c.b16 %v595, %v593
        %v636 = vpack.c.b16 %v598, %v596
        %v637 = vpack.c.b16 %v599, %v597
        %v638 = vpack.c.b16 %v602, %v600
        %v639 = vpack.c.b16 %v603, %v601
        %v640 = vpack.c.b16 %v606, %v604
        %v641 = vpack.c.b16 %v607, %v605
        %v642 = vpack.c.b16 %v610, %v608
        %v643 = vpack.c.b16 %v611, %v609
        %v708 = vunpack.c.l.b16 %v484
        %v709 = vunpack.c.l.b16 %v485
        %v710 = vunpack.c.l.b16 %v486
        %v711 = vunpack.c.l.b16 %v487
        %v712 = vunpack.c.l.b16 %v488
        %v713 = vunpack.c.l.b16 %v489
        %v714 = vunpack.c.l.b16 %v490
        %v715 = vunpack.c.l.b16 %v491
        %v716 = vunpack.c.l.b16 %v492
        %v717 = vunpack.c.l.b16 %v493
        %v718 = vunpack.c.l.b16 %v494
        %v719 = vunpack.c.l.b16 %v495
        %v720 = vunpack.c.l.b16 %v496
        %v721 = vunpack.c.l.b16 %v497
        %v722 = vunpack.c.l.b16 %v498
        %v723 = vunpack.c.l.b16 %v499
        %v724 = vunpack.c.l.b16 %v500
        %v725 = vunpack.c.l.b16 %v501
        %v726 = vunpack.c.l.b16 %v502
        %v727 = vunpack.c.l.b16 %v503
        %v728 = vunpack.c.l.b16 %v504
        %v729 = vunpack.c.l.b16 %v505
        %v730 = vunpack.c.l.b16 %v506
        %v731 = vunpack.c.l.b16 %v507
        %v732 = vunpack.c.l.b16 %v508
        %v733 = vunpack.c.l.b16 %v509
        %v734 = vunpack.c.l.b16 %v510
        %v735 = vunpack.c.l.b16 %v511
        %v736 = vunpack.c.l.b16 %v512
        %v737 = vunpack.c.l.b16 %v513
        %v738 = vunpack.c.l.b16 %v514
        %v739 = vunpack.c.l.b16 %v515
        %v740 = vpack.c.b16 %v709, %v708
        %v741 = vpack.c.b16 %v711, %v710
        %v742 = vpack.c.b16 %v713, %v712
        %v743 = vpack.c.b16 %v715, %v714
        %v744 = vpack.c.b16 %v717, %v716
        %v745 = vpack.c.b16 %v719, %v718
        %v746 = vpack.c.b16 %v721, %v720
        %v747 = vpack.c.b16 %v723, %v722
        %v748 = vpack.c.b16 %v725, %v724
        %v749 = vpack.c.b16 %v727, %v726
        %v750 = vpack.c.b16 %v729, %v728
        %v751 = vpack.c.b16 %v731, %v730
        %v752 = vpack.c.b16 %v733, %v732
        %v753 = vpack.c.b16 %v735, %v734
        %v754 = vpack.c.b16 %v737, %v736
        %v755 = vpack.c.b16 %v739, %v738
        %772 = vmatprep.subr.bf16.mxu0 0
        %773 = vmatpush1.bf16.msra.mxu0 %v747
        %774 = vmatprep.subr.bf16.mxu0 0
        %775 = vmatpush1.bf16.msra.mxu0 %v746
        %776 = vmatprep.subr.bf16.mxu0 0
        %777 = vmatpush1.bf16.msra.mxu0 %v745
        %778 = vmatprep.subr.bf16.mxu0 0
        %779 = vmatpush1.bf16.msra.mxu0 %v744
        %780 = vmatprep.subr.bf16.mxu0 0
        %781 = vmatpush1.bf16.msra.mxu0 %v743
        %782 = vmatprep.subr.bf16.mxu0 0
        %783 = vmatpush1.bf16.msra.mxu0 %v742
        %784 = vmatprep.subr.bf16.mxu0 0
        %785 = vmatpush1.bf16.msra.mxu0 %v741
        %786 = vmatprep.subr.bf16.mxu0 0
        %787 = vmatpush1.bf16.msra.mxu0 %v740
        %788 = vmatprep.subr.bf16.mxu0 0
        %789 = vmatpush2.bf16.msra.mxu0 %v755
        %790 = vmatprep.subr.bf16.mxu0 0
        %791 = vmatpush2.bf16.msra.mxu0 %v754
        %792 = vmatprep.subr.bf16.mxu0 0
        %793 = vmatpush2.bf16.msra.mxu0 %v753
        %794 = vmatprep.subr.bf16.mxu0 0
        %795 = vmatpush2.bf16.msra.mxu0 %v752
        %796 = vmatprep.subr.bf16.mxu0 0
        %797 = vmatpush2.bf16.msra.mxu0 %v751
        %798 = vmatprep.subr.bf16.mxu0 0
        %799 = vmatpush2.bf16.msra.mxu0 %v750
        %800 = vmatprep.subr.bf16.mxu0 0
        %801 = vmatpush2.bf16.msra.mxu0 %v749
        %802 = vmatprep.subr.bf16.mxu0 0
        %803 = vmatpush2.bf16.msra.mxu0 %v748
        %804 = vmatprep.mubr.bf16.mxu0 %v613
        %805 = vmatmul.mubr.bf16.gmra.mxu0 %v612
        %v806 = vpop.f32.mrf.mxu0
        %v807 = vadd.f32 0.0, %v806
        %v808 = vpop.f32.mrf.mxu0
        %v809 = vpop.f32.mrf.mxu0
        %v810 = vadd.f32 0.0, %v809
        %v811 = vpop.f32.mrf.mxu0
        %812 = vmatprep.mubr.bf16.mxu0 %v615
        %813 = vmatmul.mubr.bf16.gmra.mxu0 %v614
        %v814 = vpop.f32.mrf.mxu0
        %v815 = vadd.f32 0.0, %v814
        %v816 = vpop.f32.mrf.mxu0
        %v817 = vpop.f32.mrf.mxu0
        %v818 = vadd.f32 0.0, %v817
        %v819 = vpop.f32.mrf.mxu0
        %820 = vmatprep.mubr.bf16.mxu0 %v617
        %821 = vmatmul.mubr.bf16.gmra.mxu0 %v616
        %v822 = vpop.f32.mrf.mxu0
        %v823 = vadd.f32 0.0, %v822
        %v824 = vpop.f32.mrf.mxu0
        %v825 = vpop.f32.mrf.mxu0
        %v826 = vadd.f32 0.0, %v825
        %v827 = vpop.f32.mrf.mxu0
        %828 = vmatprep.mubr.bf16.mxu0 %v619
        %829 = vmatmul.mubr.bf16.gmra.mxu0 %v618
        %v830 = vpop.f32.mrf.mxu0
        %v831 = vadd.f32 0.0, %v830
        %v832 = vpop.f32.mrf.mxu0
        %v833 = vpop.f32.mrf.mxu0
        %v834 = vadd.f32 0.0, %v833
        %v835 = vpop.f32.mrf.mxu0
        %836 = vmatprep.mubr.bf16.mxu0 %v621
        %837 = vmatmul.mubr.bf16.gmra.mxu0 %v620
        %v838 = vpop.f32.mrf.mxu0
        %v839 = vadd.f32 0.0, %v838
        %v840 = vpop.f32.mrf.mxu0
        %v841 = vpop.f32.mrf.mxu0
        %v842 = vadd.f32 0.0, %v841
        %v843 = vpop.f32.mrf.mxu0
        %844 = vmatprep.mubr.bf16.mxu0 %v623
        %845 = vmatmul.mubr.bf16.gmra.mxu0 %v622
        %v846 = vpop.f32.mrf.mxu0
        %v847 = vadd.f32 0.0, %v846
        %v848 = vpop.f32.mrf.mxu0
        %v849 = vpop.f32.mrf.mxu0
        %v850 = vadd.f32 0.0, %v849
        %v851 = vpop.f32.mrf.mxu0
        %852 = vmatprep.mubr.bf16.mxu0 %v625
        %853 = vmatmul.mubr.bf16.gmra.mxu0 %v624
        %v854 = vpop.f32.mrf.mxu0
        %v855 = vadd.f32 0.0, %v854
        %v856 = vpop.f32.mrf.mxu0
        %v857 = vpop.f32.mrf.mxu0
        %v858 = vadd.f32 0.0, %v857
        %v859 = vpop.f32.mrf.mxu0
        %860 = vmatprep.mubr.bf16.mxu0 %v627
        %861 = vmatmul.mubr.bf16.gmra.mxu0 %v626
        %v862 = vpop.f32.mrf.mxu0
        %v863 = vadd.f32 0.0, %v862
        %v864 = vpop.f32.mrf.mxu0
        %v865 = vpop.f32.mrf.mxu0
        %v866 = vadd.f32 0.0, %v865
        %v867 = vpop.f32.mrf.mxu0
        %868 = vmatprep.mubr.bf16.mxu0 %v629
        %869 = vmatmul.mubr.bf16.gmra.mxu0 %v628
        %v870 = vpop.f32.mrf.mxu0
        %v871 = vadd.f32 0.0, %v870
        %v872 = vpop.f32.mrf.mxu0
        %v873 = vpop.f32.mrf.mxu0
        %v874 = vadd.f32 0.0, %v873
        %v875 = vpop.f32.mrf.mxu0
        %876 = vmatprep.mubr.bf16.mxu0 %v631
        %877 = vmatmul.mubr.bf16.gmra.mxu0 %v630
        %v878 = vpop.f32.mrf.mxu0
        %v879 = vadd.f32 0.0, %v878
        %v880 = vpop.f32.mrf.mxu0
        %v881 = vpop.f32.mrf.mxu0
        %v882 = vadd.f32 0.0, %v881
        %v883 = vpop.f32.mrf.mxu0
        %884 = vmatprep.mubr.bf16.mxu0 %v633
        %885 = vmatmul.mubr.bf16.gmra.mxu0 %v632
        %v886 = vpop.f32.mrf.mxu0
        %v887 = vadd.f32 0.0, %v886
        %v888 = vpop.f32.mrf.mxu0
        %v889 = vpop.f32.mrf.mxu0
        %v890 = vadd.f32 0.0, %v889
        %v891 = vpop.f32.mrf.mxu0
        %892 = vmatprep.mubr.bf16.mxu0 %v635
        %893 = vmatmul.mubr.bf16.gmra.mxu0 %v634
        %v894 = vpop.f32.mrf.mxu0
        %v895 = vadd.f32 0.0, %v894
        %v896 = vpop.f32.mrf.mxu0
        %v897 = vpop.f32.mrf.mxu0
        %v898 = vadd.f32 0.0, %v897
        %v899 = vpop.f32.mrf.mxu0
        %900 = vmatprep.mubr.bf16.mxu0 %v637
        %901 = vmatmul.mubr.bf16.gmra.mxu0 %v636
        %v902 = vpop.f32.mrf.mxu0
        %v903 = vadd.f32 0.0, %v902
        %v904 = vpop.f32.mrf.mxu0
        %v905 = vpop.f32.mrf.mxu0
        %v906 = vadd.f32 0.0, %v905
        %v907 = vpop.f32.mrf.mxu0
        %908 = vmatprep.mubr.bf16.mxu0 %v639
        %909 = vmatmul.mubr.bf16.gmra.mxu0 %v638
        %v910 = vpop.f32.mrf.mxu0
        %v911 = vadd.f32 0.0, %v910
        %v912 = vpop.f32.mrf.mxu0
        %v913 = vpop.f32.mrf.mxu0
        %v914 = vadd.f32 0.0, %v913
        %v915 = vpop.f32.mrf.mxu0
        %916 = vmatprep.mubr.bf16.mxu0 %v641
        %917 = vmatmul.mubr.bf16.gmra.mxu0 %v640
        %v918 = vpop.f32.mrf.mxu0
        %v919 = vadd.f32 0.0, %v918
        %v920 = vpop.f32.mrf.mxu0
        %v921 = vpop.f32.mrf.mxu0
        %v922 = vadd.f32 0.0, %v921
        %v923 = vpop.f32.mrf.mxu0
        %924 = vmatprep.mubr.bf16.mxu0 %v643
        %925 = vmatmul.mubr.bf16.gmra.mxu0 %v642
        %v926 = vpop.f32.mrf.mxu0
        %v927 = vadd.f32 0.0, %v926
        %v928 = vpop.f32.mrf.mxu0
        %v929 = vpop.f32.mrf.mxu0
        %v930 = vadd.f32 0.0, %v929
        %v931 = vpop.f32.mrf.mxu0
        %932 = vdwg.mxu0
        %v933 = vadd.f32 %v416, %v807
        %v934 = vadd.f32 %v417, %v810
        %v935 = vadd.f32 %v418, %v815
        %v936 = vadd.f32 %v419, %v818
        %v937 = vadd.f32 %v420, %v823
        %v938 = vadd.f32 %v421, %v826
        %v939 = vadd.f32 %v422, %v831
        %v940 = vadd.f32 %v423, %v834
        %v941 = vadd.f32 %v424, %v839
        %v942 = vadd.f32 %v425, %v842
        %v943 = vadd.f32 %v426, %v847
        %v944 = vadd.f32 %v427, %v850
        %v945 = vadd.f32 %v428, %v855
        %v946 = vadd.f32 %v429, %v858
        %v947 = vadd.f32 %v430, %v863
        %v948 = vadd.f32 %v431, %v866
        %v949 = vadd.f32 %v432, %v871
        %v950 = vadd.f32 %v433, %v874
        %v951 = vadd.f32 %v434, %v879
        %v952 = vadd.f32 %v435, %v882
        %v953 = vadd.f32 %v436, %v887
        %v954 = vadd.f32 %v437, %v890
        %v955 = vadd.f32 %v438, %v895
        %v956 = vadd.f32 %v439, %v898
        %v957 = vadd.f32 %v440, %v903
        %v958 = vadd.f32 %v441, %v906
        %v959 = vadd.f32 %v442, %v911
        %v960 = vadd.f32 %v443, %v914
        %v961 = vadd.f32 %v444, %v919
        %v962 = vadd.f32 %v445, %v922
        %v963 = vadd.f32 %v446, %v927
        %v964 = vadd.f32 %v447, %v930
        %965 = vst [vmem:[#allocation2] sm:$0xff] %v933
        %966 = vst [vmem:[#allocation2 + $0x8] sm:$0xff] %v934
        %967 = vst [vmem:[#allocation2 + $0x10] sm:$0xff] %v935
        %968 = vst [vmem:[#allocation2 + $0x18] sm:$0xff] %v936
        %969 = vst [vmem:[#allocation2 + $0x20] sm:$0xff] %v937
        %970 = vst [vmem:[#allocation2 + $0x28] sm:$0xff] %v938
        %971 = vst [vmem:[#allocation2 + $0x30] sm:$0xff] %v939
        %972 = vst [vmem:[#allocation2 + $0x38] sm:$0xff] %v940
        %973 = vst [vmem:[#allocation2 + $0x40] sm:$0xff] %v941
        %974 = vst [vmem:[#allocation2 + $0x48] sm:$0xff] %v942
        %975 = vst [vmem:[#allocation2 + $0x50] sm:$0xff] %v943
        %976 = vst [vmem:[#allocation2 + $0x58] sm:$0xff] %v944
        %977 = vst [vmem:[#allocation2 + $0x60] sm:$0xff] %v945
        %978 = vst [vmem:[#allocation2 + $0x68] sm:$0xff] %v946
        %979 = vst [vmem:[#allocation2 + $0x70] sm:$0xff] %v947
        %980 = vst [vmem:[#allocation2 + $0x78] sm:$0xff] %v948
        %981 = vst [vmem:[#allocation2 + $0x80] sm:$0xff] %v949
        %982 = vst [vmem:[#allocation2 + $0x88] sm:$0xff] %v950
        %983 = vst [vmem:[#allocation2 + $0x90] sm:$0xff] %v951
        %984 = vst [vmem:[#allocation2 + $0x98] sm:$0xff] %v952
        %985 = vst [vmem:[#allocation2 + $0xa0] sm:$0xff] %v953
        %986 = vst [vmem:[#allocation2 + $0xa8] sm:$0xff] %v954
        %987 = vst [vmem:[#allocation2 + $0xb0] sm:$0xff] %v955
        %988 = vst [vmem:[#allocation2 + $0xb8] sm:$0xff] %v956
        %989 = vst [vmem:[#allocation2 + $0xc0] sm:$0xff] %v957
        %990 = vst [vmem:[#allocation2 + $0xc8] sm:$0xff] %v958
        %991 = vst [vmem:[#allocation2 + $0xd0] sm:$0xff] %v959
        %992 = vst [vmem:[#allocation2 + $0xd8] sm:$0xff] %v960
        %993 = vst [vmem:[#allocation2 + $0xe0] sm:$0xff] %v961
        %994 = vst [vmem:[#allocation2 + $0xe8] sm:$0xff] %v962
        %995 = vst [vmem:[#allocation2 + $0xf0] sm:$0xff] %v963
        %996 = vst [vmem:[#allocation2 + $0xf8] sm:$0xff] %v964
        %p997 = scmp.eq.s32.totalorder %s20, 1
        // Predicated region
        $region79: #{gcn_forward.5} parent=69 // pred_check
          %p998 = pneg %p997
        $region80: #{gcn_forward.5} parent=69 // pred_check_branch
          %1000 = sbr.rel (%p998) target = $region82
        $region81: #{gcn_forward.5} parent=69 // pred_region
          %v1001 = vld [vmem:[#allocation2] sm:$0xff]
          %v1002 = vld [vmem:[#allocation2 + $0x8] sm:$0xff]
          %v1003 = vld [vmem:[#allocation2 + $0x10] sm:$0xff]
          %v1004 = vld [vmem:[#allocation2 + $0x18] sm:$0xff]
          %v1005 = vld [vmem:[#allocation2 + $0x20] sm:$0xff]
          %v1006 = vld [vmem:[#allocation2 + $0x28] sm:$0xff]
          %v1007 = vld [vmem:[#allocation2 + $0x30] sm:$0xff]
          %v1008 = vld [vmem:[#allocation2 + $0x38] sm:$0xff]
          %v1009 = vld [vmem:[#allocation2 + $0x40] sm:$0xff]
          %v1010 = vld [vmem:[#allocation2 + $0x48] sm:$0xff]
          %v1011 = vld [vmem:[#allocation2 + $0x50] sm:$0xff]
          %v1012 = vld [vmem:[#allocation2 + $0x58] sm:$0xff]
          %v1013 = vld [vmem:[#allocation2 + $0x60] sm:$0xff]
          %v1014 = vld [vmem:[#allocation2 + $0x68] sm:$0xff]
          %v1015 = vld [vmem:[#allocation2 + $0x70] sm:$0xff]
          %v1016 = vld [vmem:[#allocation2 + $0x78] sm:$0xff]
          %v1017 = vld [vmem:[#allocation2 + $0x80] sm:$0xff]
          %v1018 = vld [vmem:[#allocation2 + $0x88] sm:$0xff]
          %v1019 = vld [vmem:[#allocation2 + $0x90] sm:$0xff]
          %v1020 = vld [vmem:[#allocation2 + $0x98] sm:$0xff]
          %v1021 = vld [vmem:[#allocation2 + $0xa0] sm:$0xff]
          %v1022 = vld [vmem:[#allocation2 + $0xa8] sm:$0xff]
          %v1023 = vld [vmem:[#allocation2 + $0xb0] sm:$0xff]
          %v1024 = vld [vmem:[#allocation2 + $0xb8] sm:$0xff]
          %v1025 = vld [vmem:[#allocation2 + $0xc0] sm:$0xff]
          %v1026 = vld [vmem:[#allocation2 + $0xc8] sm:$0xff]
          %v1027 = vld [vmem:[#allocation2 + $0xd0] sm:$0xff]
          %v1028 = vld [vmem:[#allocation2 + $0xd8] sm:$0xff]
          %v1029 = vld [vmem:[#allocation2 + $0xe0] sm:$0xff]
          %v1030 = vld [vmem:[#allocation2 + $0xe8] sm:$0xff]
          %v1031 = vld [vmem:[#allocation2 + $0xf0] sm:$0xff]
          %v1032 = vld [vmem:[#allocation2 + $0xf8] sm:$0xff]
          %v1033 = vld [vmem:[%s2] sm:$0xff]
          %v1034 = vld [vmem:[%s2 + $0x8] sm:$0xff]
          %v1035 = vld [vmem:[%s2 + $0x10] sm:$0xff]
          %v1036 = vld [vmem:[%s2 + $0x18] sm:$0xff]
          %v1037 = vld [vmem:[%s2 + $0x20] sm:$0xff]
          %v1038 = vld [vmem:[%s2 + $0x28] sm:$0xff]
          %v1039 = vld [vmem:[%s2 + $0x30] sm:$0xff]
          %v1040 = vld [vmem:[%s2 + $0x38] sm:$0xff]
          %v1041 = vld [vmem:[%s2 + $0x40] sm:$0xff]
          %v1042 = vld [vmem:[%s2 + $0x48] sm:$0xff]
          %v1043 = vld [vmem:[%s2 + $0x50] sm:$0xff]
          %v1044 = vld [vmem:[%s2 + $0x58] sm:$0xff]
          %v1045 = vld [vmem:[%s2 + $0x60] sm:$0xff]
          %v1046 = vld [vmem:[%s2 + $0x68] sm:$0xff]
          %v1047 = vld [vmem:[%s2 + $0x70] sm:$0xff]
          %v1048 = vld [vmem:[%s2 + $0x78] sm:$0xff]
          %v1049 = vld [vmem:[%s3] sm:$0x1]
          %v1051 = vlaneseq
          %v1052 = vshrl.u32 %v1051, 7
          %v1053 = vsub.s32 0, %v1052
          %v1054 = vrot.slane %v1049, %v1053
          %1056 = vmatprep.subr.mxu0 0.0
          %1057 = vmatpush1.msra.mxu0 %v1048
          %1058 = vmatprep.subr.mxu0 0.0
          %1059 = vmatpush1.msra.mxu0 %v1047
          %1060 = vmatprep.subr.mxu0 0.0
          %1061 = vmatpush1.msra.mxu0 %v1046
          %1062 = vmatprep.subr.mxu0 0.0
          %1063 = vmatpush1.msra.mxu0 %v1045
          %1064 = vmatprep.subr.mxu0 0.0
          %1065 = vmatpush1.msra.mxu0 %v1044
          %1066 = vmatprep.subr.mxu0 0.0
          %1067 = vmatpush1.msra.mxu0 %v1043
          %1068 = vmatprep.subr.mxu0 0.0
          %1069 = vmatpush1.msra.mxu0 %v1042
          %1070 = vmatprep.subr.mxu0 0.0
          %1071 = vmatpush1.msra.mxu0 %v1041
          %1072 = vmatprep.subr.mxu0 0.0
          %1073 = vmatpush1.msra.mxu0 %v1040
          %1074 = vmatprep.subr.mxu0 0.0
          %1075 = vmatpush1.msra.mxu0 %v1039
          %1076 = vmatprep.subr.mxu0 0.0
          %1077 = vmatpush1.msra.mxu0 %v1038
          %1078 = vmatprep.subr.mxu0 0.0
          %1079 = vmatpush1.msra.mxu0 %v1037
          %1080 = vmatprep.subr.mxu0 0.0
          %1081 = vmatpush1.msra.mxu0 %v1036
          %1082 = vmatprep.subr.mxu0 0.0
          %1083 = vmatpush1.msra.mxu0 %v1035
          %1084 = vmatprep.subr.mxu0 0.0
          %1085 = vmatpush1.msra.mxu0 %v1034
          %1086 = vmatprep.subr.mxu0 0.0
          %1087 = vmatpush1.msra.mxu0 %v1033
          %1088 = vmatprep.subr.mxu0 0.0
          %1089 = vmatpush2.msra.mxu0 0.0
          %1090 = vmatprep.subr.mxu0 0.0
          %1091 = vmatpush2.msra.mxu0 0.0
          %1092 = vmatprep.subr.mxu0 0.0
          %1093 = vmatpush2.msra.mxu0 0.0
          %1094 = vmatprep.subr.mxu0 0.0
          %1095 = vmatpush2.msra.mxu0 0.0
          %1096 = vmatprep.subr.mxu0 0.0
          %1097 = vmatpush2.msra.mxu0 0.0
          %1098 = vmatprep.subr.mxu0 0.0
          %1099 = vmatpush2.msra.mxu0 0.0
          %1100 = vmatprep.subr.mxu0 0.0
          %1101 = vmatpush2.msra.mxu0 0.0
          %1102 = vmatprep.subr.mxu0 0.0
          %1103 = vmatpush2.msra.mxu0 0.0
          %1104 = vmatprep.subr.mxu0 0.0
          %1105 = vmatpush2.msra.mxu0 0.0
          %1106 = vmatprep.subr.mxu0 0.0
          %1107 = vmatpush2.msra.mxu0 0.0
          %1108 = vmatprep.subr.mxu0 0.0
          %1109 = vmatpush2.msra.mxu0 0.0
          %1110 = vmatprep.subr.mxu0 0.0
          %1111 = vmatpush2.msra.mxu0 0.0
          %1112 = vmatprep.subr.mxu0 0.0
          %1113 = vmatpush2.msra.mxu0 0.0
          %1114 = vmatprep.subr.mxu0 0.0
          %1115 = vmatpush2.msra.mxu0 0.0
          %1116 = vmatprep.subr.mxu0 0.0
          %1117 = vmatpush2.msra.mxu0 0.0
          %1118 = vmatprep.subr.mxu0 0.0
          %1119 = vmatpush2.msra.mxu0 0.0
          %1120 = vmatprep.mubr.f32.mxu0 0.0
          %1121 = vmatmul.mubr.f32.gmra.mxu0 %v1001
          %v1122 = vpop.f32.mrf.mxu0
          %v1123 = vadd.f32 %v1054, %v1122
          %v1124 = vpop.f32.mrf.mxu0
          %1125 = vmatprep.mubr.f32.mxu0 0.0
          %1126 = vmatmul.mubr.f32.gmra.mxu0 %v1002
          %v1127 = vpop.f32.mrf.mxu0
          %v1128 = vadd.f32 %v1054, %v1127
          %v1129 = vpop.f32.mrf.mxu0
          %1130 = vmatprep.mubr.f32.mxu0 0.0
          %1131 = vmatmul.mubr.f32.gmra.mxu0 %v1003
          %v1132 = vpop.f32.mrf.mxu0
          %v1133 = vadd.f32 %v1054, %v1132
          %v1134 = vpop.f32.mrf.mxu0
          %1135 = vmatprep.mubr.f32.mxu0 0.0
          %1136 = vmatmul.mubr.f32.gmra.mxu0 %v1004
          %v1137 = vpop.f32.mrf.mxu0
          %v1138 = vadd.f32 %v1054, %v1137
          %v1139 = vpop.f32.mrf.mxu0
          %1140 = vmatprep.mubr.f32.mxu0 0.0
          %1141 = vmatmul.mubr.f32.gmra.mxu0 %v1005
          %v1142 = vpop.f32.mrf.mxu0
          %v1143 = vadd.f32 %v1054, %v1142
          %v1144 = vpop.f32.mrf.mxu0
          %1145 = vmatprep.mubr.f32.mxu0 0.0
          %1146 = vmatmul.mubr.f32.gmra.mxu0 %v1006
          %v1147 = vpop.f32.mrf.mxu0
          %v1148 = vadd.f32 %v1054, %v1147
          %v1149 = vpop.f32.mrf.mxu0
          %1150 = vmatprep.mubr.f32.mxu0 0.0
          %1151 = vmatmul.mubr.f32.gmra.mxu0 %v1007
          %v1152 = vpop.f32.mrf.mxu0
          %v1153 = vadd.f32 %v1054, %v1152
          %v1154 = vpop.f32.mrf.mxu0
          %1155 = vmatprep.mubr.f32.mxu0 0.0
          %1156 = vmatmul.mubr.f32.gmra.mxu0 %v1008
          %v1157 = vpop.f32.mrf.mxu0
          %v1158 = vadd.f32 %v1054, %v1157
          %v1159 = vpop.f32.mrf.mxu0
          %1160 = vmatprep.mubr.f32.mxu0 0.0
          %1161 = vmatmul.mubr.f32.gmra.mxu0 %v1009
          %v1162 = vpop.f32.mrf.mxu0
          %v1163 = vadd.f32 %v1054, %v1162
          %v1164 = vpop.f32.mrf.mxu0
          %1165 = vmatprep.mubr.f32.mxu0 0.0
          %1166 = vmatmul.mubr.f32.gmra.mxu0 %v1010
          %v1167 = vpop.f32.mrf.mxu0
          %v1168 = vadd.f32 %v1054, %v1167
          %v1169 = vpop.f32.mrf.mxu0
          %1170 = vmatprep.mubr.f32.mxu0 0.0
          %1171 = vmatmul.mubr.f32.gmra.mxu0 %v1011
          %v1172 = vpop.f32.mrf.mxu0
          %v1173 = vadd.f32 %v1054, %v1172
          %v1174 = vpop.f32.mrf.mxu0
          %1175 = vmatprep.mubr.f32.mxu0 0.0
          %1176 = vmatmul.mubr.f32.gmra.mxu0 %v1012
          %v1177 = vpop.f32.mrf.mxu0
          %v1178 = vadd.f32 %v1054, %v1177
          %v1179 = vpop.f32.mrf.mxu0
          %1180 = vmatprep.mubr.f32.mxu0 0.0
          %1181 = vmatmul.mubr.f32.gmra.mxu0 %v1013
          %v1182 = vpop.f32.mrf.mxu0
          %v1183 = vadd.f32 %v1054, %v1182
          %v1184 = vpop.f32.mrf.mxu0
          %1185 = vmatprep.mubr.f32.mxu0 0.0
          %1186 = vmatmul.mubr.f32.gmra.mxu0 %v1014
          %v1187 = vpop.f32.mrf.mxu0
          %v1188 = vadd.f32 %v1054, %v1187
          %v1189 = vpop.f32.mrf.mxu0
          %1190 = vmatprep.mubr.f32.mxu0 0.0
          %1191 = vmatmul.mubr.f32.gmra.mxu0 %v1015
          %v1192 = vpop.f32.mrf.mxu0
          %v1193 = vadd.f32 %v1054, %v1192
          %v1194 = vpop.f32.mrf.mxu0
          %1195 = vmatprep.mubr.f32.mxu0 0.0
          %1196 = vmatmul.mubr.f32.gmra.mxu0 %v1016
          %v1197 = vpop.f32.mrf.mxu0
          %v1198 = vadd.f32 %v1054, %v1197
          %v1199 = vpop.f32.mrf.mxu0
          %1200 = vmatprep.mubr.f32.mxu0 0.0
          %1201 = vmatmul.mubr.f32.gmra.mxu0 %v1017
          %v1202 = vpop.f32.mrf.mxu0
          %v1203 = vadd.f32 %v1054, %v1202
          %v1204 = vpop.f32.mrf.mxu0
          %1205 = vmatprep.mubr.f32.mxu0 0.0
          %1206 = vmatmul.mubr.f32.gmra.mxu0 %v1018
          %v1207 = vpop.f32.mrf.mxu0
          %v1208 = vadd.f32 %v1054, %v1207
          %v1209 = vpop.f32.mrf.mxu0
          %1210 = vmatprep.mubr.f32.mxu0 0.0
          %1211 = vmatmul.mubr.f32.gmra.mxu0 %v1019
          %v1212 = vpop.f32.mrf.mxu0
          %v1213 = vadd.f32 %v1054, %v1212
          %v1214 = vpop.f32.mrf.mxu0
          %1215 = vmatprep.mubr.f32.mxu0 0.0
          %1216 = vmatmul.mubr.f32.gmra.mxu0 %v1020
          %v1217 = vpop.f32.mrf.mxu0
          %v1218 = vadd.f32 %v1054, %v1217
          %v1219 = vpop.f32.mrf.mxu0
          %1220 = vmatprep.mubr.f32.mxu0 0.0
          %1221 = vmatmul.mubr.f32.gmra.mxu0 %v1021
          %v1222 = vpop.f32.mrf.mxu0
          %v1223 = vadd.f32 %v1054, %v1222
          %v1224 = vpop.f32.mrf.mxu0
          %1225 = vmatprep.mubr.f32.mxu0 0.0
          %1226 = vmatmul.mubr.f32.gmra.mxu0 %v1022
          %v1227 = vpop.f32.mrf.mxu0
          %v1228 = vadd.f32 %v1054, %v1227
          %v1229 = vpop.f32.mrf.mxu0
          %1230 = vmatprep.mubr.f32.mxu0 0.0
          %1231 = vmatmul.mubr.f32.gmra.mxu0 %v1023
          %v1232 = vpop.f32.mrf.mxu0
          %v1233 = vadd.f32 %v1054, %v1232
          %v1234 = vpop.f32.mrf.mxu0
          %1235 = vmatprep.mubr.f32.mxu0 0.0
          %1236 = vmatmul.mubr.f32.gmra.mxu0 %v1024
          %v1237 = vpop.f32.mrf.mxu0
          %v1238 = vadd.f32 %v1054, %v1237
          %v1239 = vpop.f32.mrf.mxu0
          %1240 = vmatprep.mubr.f32.mxu0 0.0
          %1241 = vmatmul.mubr.f32.gmra.mxu0 %v1025
          %v1242 = vpop.f32.mrf.mxu0
          %v1243 = vadd.f32 %v1054, %v1242
          %v1244 = vpop.f32.mrf.mxu0
          %1245 = vmatprep.mubr.f32.mxu0 0.0
          %1246 = vmatmul.mubr.f32.gmra.mxu0 %v1026
          %v1247 = vpop.f32.mrf.mxu0
          %v1248 = vadd.f32 %v1054, %v1247
          %v1249 = vpop.f32.mrf.mxu0
          %1250 = vmatprep.mubr.f32.mxu0 0.0
          %1251 = vmatmul.mubr.f32.gmra.mxu0 %v1027
          %v1252 = vpop.f32.mrf.mxu0
          %v1253 = vadd.f32 %v1054, %v1252
          %v1254 = vpop.f32.mrf.mxu0
          %1255 = vmatprep.mubr.f32.mxu0 0.0
          %1256 = vmatmul.mubr.f32.gmra.mxu0 %v1028
          %v1257 = vpop.f32.mrf.mxu0
          %v1258 = vadd.f32 %v1054, %v1257
          %v1259 = vpop.f32.mrf.mxu0
          %1260 = vmatprep.mubr.f32.mxu0 0.0
          %1261 = vmatmul.mubr.f32.gmra.mxu0 %v1029
          %v1262 = vpop.f32.mrf.mxu0
          %v1263 = vadd.f32 %v1054, %v1262
          %v1264 = vpop.f32.mrf.mxu0
          %1265 = vmatprep.mubr.f32.mxu0 0.0
          %1266 = vmatmul.mubr.f32.gmra.mxu0 %v1030
          %v1267 = vpop.f32.mrf.mxu0
          %v1268 = vadd.f32 %v1054, %v1267
          %v1269 = vpop.f32.mrf.mxu0
          %1270 = vmatprep.mubr.f32.mxu0 0.0
          %1271 = vmatmul.mubr.f32.gmra.mxu0 %v1031
          %v1272 = vpop.f32.mrf.mxu0
          %v1273 = vadd.f32 %v1054, %v1272
          %v1274 = vpop.f32.mrf.mxu0
          %1275 = vmatprep.mubr.f32.mxu0 0.0
          %1276 = vmatmul.mubr.f32.gmra.mxu0 %v1032
          %v1277 = vpop.f32.mrf.mxu0
          %v1278 = vadd.f32 %v1054, %v1277
          %v1279 = vpop.f32.mrf.mxu0
          %1280 = vdwg.mxu0
          %v1281 = vmax.f32 %v1123, 0.0
          %v1282 = vmax.f32 %v1128, 0.0
          %v1283 = vmax.f32 %v1133, 0.0
          %v1284 = vmax.f32 %v1138, 0.0
          %v1285 = vmax.f32 %v1143, 0.0
          %v1286 = vmax.f32 %v1148, 0.0
          %v1287 = vmax.f32 %v1153, 0.0
          %v1288 = vmax.f32 %v1158, 0.0
          %v1289 = vmax.f32 %v1163, 0.0
          %v1290 = vmax.f32 %v1168, 0.0
          %v1291 = vmax.f32 %v1173, 0.0
          %v1292 = vmax.f32 %v1178, 0.0
          %v1293 = vmax.f32 %v1183, 0.0
          %v1294 = vmax.f32 %v1188, 0.0
          %v1295 = vmax.f32 %v1193, 0.0
          %v1296 = vmax.f32 %v1198, 0.0
          %v1297 = vmax.f32 %v1203, 0.0
          %v1298 = vmax.f32 %v1208, 0.0
          %v1299 = vmax.f32 %v1213, 0.0
          %v1300 = vmax.f32 %v1218, 0.0
          %v1301 = vmax.f32 %v1223, 0.0
          %v1302 = vmax.f32 %v1228, 0.0
          %v1303 = vmax.f32 %v1233, 0.0
          %v1304 = vmax.f32 %v1238, 0.0
          %v1305 = vmax.f32 %v1243, 0.0
          %v1306 = vmax.f32 %v1248, 0.0
          %v1307 = vmax.f32 %v1253, 0.0
          %v1308 = vmax.f32 %v1258, 0.0
          %v1309 = vmax.f32 %v1263, 0.0
          %v1310 = vmax.f32 %v1268, 0.0
          %v1311 = vmax.f32 %v1273, 0.0
          %v1312 = vmax.f32 %v1278, 0.0
          %v1313 = vpack.c.bf16 %v1282, %v1281
          %v1314 = vpack.c.bf16 %v1284, %v1283
          %v1315 = vpack.c.bf16 %v1286, %v1285
          %v1316 = vpack.c.bf16 %v1288, %v1287
          %v1317 = vpack.c.bf16 %v1290, %v1289
          %v1318 = vpack.c.bf16 %v1292, %v1291
          %v1319 = vpack.c.bf16 %v1294, %v1293
          %v1320 = vpack.c.bf16 %v1296, %v1295
          %v1321 = vpack.c.bf16 %v1298, %v1297
          %v1322 = vpack.c.bf16 %v1300, %v1299
          %v1323 = vpack.c.bf16 %v1302, %v1301
          %v1324 = vpack.c.bf16 %v1304, %v1303
          %v1325 = vpack.c.bf16 %v1306, %v1305
          %v1326 = vpack.c.bf16 %v1308, %v1307
          %v1327 = vpack.c.bf16 %v1310, %v1309
          %v1328 = vpack.c.bf16 %v1312, %v1311
          %v1345 = vunpack.c.l.b16 %v1313
          %v1346 = vunpack.c.h.b16 %v1313
          %v1347 = vunpack.c.l.b16 %v1314
          %v1348 = vunpack.c.h.b16 %v1314
          %v1349 = vunpack.c.l.b16 %v1315
          %v1350 = vunpack.c.h.b16 %v1315
          %v1351 = vunpack.c.l.b16 %v1316
          %v1352 = vunpack.c.h.b16 %v1316
          %v1353 = vunpack.c.l.b16 %v1317
          %v1354 = vunpack.c.h.b16 %v1317
          %v1355 = vunpack.c.l.b16 %v1318
          %v1356 = vunpack.c.h.b16 %v1318
          %v1357 = vunpack.c.l.b16 %v1319
          %v1358 = vunpack.c.h.b16 %v1319
          %v1359 = vunpack.c.l.b16 %v1320
          %v1360 = vunpack.c.h.b16 %v1320
          %v1361 = vunpack.c.l.b16 %v1321
          %v1362 = vunpack.c.h.b16 %v1321
          %v1363 = vunpack.c.l.b16 %v1322
          %v1364 = vunpack.c.h.b16 %v1322
          %v1365 = vunpack.c.l.b16 %v1323
          %v1366 = vunpack.c.h.b16 %v1323
          %v1367 = vunpack.c.l.b16 %v1324
          %v1368 = vunpack.c.h.b16 %v1324
          %v1369 = vunpack.c.l.b16 %v1325
          %v1370 = vunpack.c.h.b16 %v1325
          %v1371 = vunpack.c.l.b16 %v1326
          %v1372 = vunpack.c.h.b16 %v1326
          %v1373 = vunpack.c.l.b16 %v1327
          %v1374 = vunpack.c.h.b16 %v1327
          %v1375 = vunpack.c.l.b16 %v1328
          %v1376 = vunpack.c.h.b16 %v1328
          %v1377 = vpack.c.b16 %v1345, %v1345
          %v1378 = vpack.c.b16 %v1346, %v1346
          %v1379 = vpack.c.b16 %v1347, %v1347
          %v1380 = vpack.c.b16 %v1348, %v1348
          %v1381 = vpack.c.b16 %v1349, %v1349
          %v1382 = vpack.c.b16 %v1350, %v1350
          %v1383 = vpack.c.b16 %v1351, %v1351
          %v1384 = vpack.c.b16 %v1352, %v1352
          %v1385 = vpack.c.b16 %v1353, %v1353
          %v1386 = vpack.c.b16 %v1354, %v1354
          %v1387 = vpack.c.b16 %v1355, %v1355
          %v1388 = vpack.c.b16 %v1356, %v1356
          %v1389 = vpack.c.b16 %v1357, %v1357
          %v1390 = vpack.c.b16 %v1358, %v1358
          %v1391 = vpack.c.b16 %v1359, %v1359
          %v1392 = vpack.c.b16 %v1360, %v1360
          %v1393 = vpack.c.b16 %v1361, %v1361
          %v1394 = vpack.c.b16 %v1362, %v1362
          %v1395 = vpack.c.b16 %v1363, %v1363
          %v1396 = vpack.c.b16 %v1364, %v1364
          %v1397 = vpack.c.b16 %v1365, %v1365
          %v1398 = vpack.c.b16 %v1366, %v1366
          %v1399 = vpack.c.b16 %v1367, %v1367
          %v1400 = vpack.c.b16 %v1368, %v1368
          %v1401 = vpack.c.b16 %v1369, %v1369
          %v1402 = vpack.c.b16 %v1370, %v1370
          %v1403 = vpack.c.b16 %v1371, %v1371
          %v1404 = vpack.c.b16 %v1372, %v1372
          %v1405 = vpack.c.b16 %v1373, %v1373
          %v1406 = vpack.c.b16 %v1374, %v1374
          %v1407 = vpack.c.b16 %v1375, %v1375
          %v1408 = vpack.c.b16 %v1376, %v1376
          %1441 = vst [vmem:[%s376] sm:$0xf] %v1377
          %1442 = vst [vmem:[%s376 + $0x4] sm:$0xf] %v1378
          %1443 = vst [vmem:[%s376 + $0x8] sm:$0xf] %v1379
          %1444 = vst [vmem:[%s376 + $0xc] sm:$0xf] %v1380
          %1445 = vst [vmem:[%s376 + $0x10] sm:$0xf] %v1381
          %1446 = vst [vmem:[%s376 + $0x14] sm:$0xf] %v1382
          %1447 = vst [vmem:[%s376 + $0x18] sm:$0xf] %v1383
          %1448 = vst [vmem:[%s376 + $0x1c] sm:$0xf] %v1384
          %1449 = vst [vmem:[%s376 + $0x20] sm:$0xf] %v1385
          %1450 = vst [vmem:[%s376 + $0x24] sm:$0xf] %v1386
          %1451 = vst [vmem:[%s376 + $0x28] sm:$0xf] %v1387
          %1452 = vst [vmem:[%s376 + $0x2c] sm:$0xf] %v1388
          %1453 = vst [vmem:[%s376 + $0x30] sm:$0xf] %v1389
          %1454 = vst [vmem:[%s376 + $0x34] sm:$0xf] %v1390
          %1455 = vst [vmem:[%s376 + $0x38] sm:$0xf] %v1391
          %1456 = vst [vmem:[%s376 + $0x3c] sm:$0xf] %v1392
          %1457 = vst [vmem:[%s376 + $0x40] sm:$0xf] %v1393
          %1458 = vst [vmem:[%s376 + $0x44] sm:$0xf] %v1394
          %1459 = vst [vmem:[%s376 + $0x48] sm:$0xf] %v1395
          %1460 = vst [vmem:[%s376 + $0x4c] sm:$0xf] %v1396
          %1461 = vst [vmem:[%s376 + $0x50] sm:$0xf] %v1397
          %1462 = vst [vmem:[%s376 + $0x54] sm:$0xf] %v1398
          %1463 = vst [vmem:[%s376 + $0x58] sm:$0xf] %v1399
          %1464 = vst [vmem:[%s376 + $0x5c] sm:$0xf] %v1400
          %1465 = vst [vmem:[%s376 + $0x60] sm:$0xf] %v1401
          %1466 = vst [vmem:[%s376 + $0x64] sm:$0xf] %v1402
          %1467 = vst [vmem:[%s376 + $0x68] sm:$0xf] %v1403
          %1468 = vst [vmem:[%s376 + $0x6c] sm:$0xf] %v1404
          %1469 = vst [vmem:[%s376 + $0x70] sm:$0xf] %v1405
          %1470 = vst [vmem:[%s376 + $0x74] sm:$0xf] %v1406
          %1471 = vst [vmem:[%s376 + $0x78] sm:$0xf] %v1407
          %1472 = vst [vmem:[%s376 + $0x7c] sm:$0xf] %v1408
        $region82: #{gcn_forward.5} parent=69 // pred_fallthru
          _
        %s1473 = smul.u32 32, %s19
        %p1474 = scmp.lt.s32.totalorder %s1473, 63
        %s1475 = scalar_select %p1474, %s1473, 63
        %s1476 = smul.addr %s1475, 4
        %s1477 = scalar_lea.vmem %s4, %s1476
        // Predicated region
        $region83: #{gcn_forward.5} parent=69 // pred_check
          %p1478 = pneg %p136
        $region84: #{gcn_forward.5} parent=69 // pred_check_branch
          %1480 = sbr.rel (%p1478) target = $region86
        $region85: #{gcn_forward.5} parent=69 // pred_region
          %s1481 = smul.u32 32, %s19
        $region86: #{gcn_forward.5} parent=69 // pred_fallthru
          _
      $region70: #{gcn_forward.5} parent=5 // pred_fallthru
        _
      %p1482 = scmp.le.s32.totalorder 2, %s10
      // Predicated region
      $region87: #{gcn_forward.5} parent=5 // pred_check
        %p1483 = pneg %p1482
      $region88: #{gcn_forward.5} parent=5 // pred_check_branch
        %1485 = sbr.rel (%p1483) target = $region90
      $region89: #{gcn_forward.5} parent=5 // pred_region
        %s1486 = ssub.s32 %s10, 2
        // Predicated region
        $region91: #{gcn_forward.5} parent=89 // pred_check
          %p1487 = pneg %p142
        $region92: #{gcn_forward.5} parent=89 // pred_check_branch
          %1489 = sbr.rel (%p1487) target = $region94
        $region93: #{gcn_forward.5} parent=89 // pred_region
          %s1490 = smul.u32 32, %s21
          %p1491 = scmp.lt.s32.totalorder %s1490, 63
          %s1492 = scalar_select %p1491, %s1490, 63
          %s1493 = smul.addr %s1492, 4
          %s1494 = scalar_lea.vmem %s4, %s1493
        $region94: #{gcn_forward.5} parent=89 // pred_fallthru
          _
      $region90: #{gcn_forward.5} parent=5 // pred_fallthru
        _
    $region6: #{gcn_forward.5} parent=1 // loop_footer
      %s14 = sadd.s32 1, %s10
    $region7: #{gcn_forward.5} parent=1 // loop_footer_branch
      %9 = sbr.rel target = $region3
    $region8: #{gcn_forward.5} parent=1 // loop_exit
      _

// kernel: gcn_forward.4
$region0: #{gcn_forward.4}
  #allocation0 [shape = 'u32[]', space=smem, size = 0x4, offset = 0x4, fixed_abs, tag = 'smem constant byte address 0x4 - core index']
  #allocation1 [shape = 'u32[144,128]{1,0:T(1,128)}', space=vmem, size = 0x12000, scoped, tag = 'internal scratch']
  #allocation2 [shape = 'f32[256,128]{1,0:T(8,128)}', space=vmem, size = 0x20000, scoped, tag = 'scratch operand']
  %s0 = inlined_call_operand.hbm [shape: bf16[512,512], index: 0, kind: input, shape index: {}]
  %s1 = inlined_call_operand.vmem [shape: bf16[512,128], index: 1, kind: input, shape index: {}]
  %s2 = inlined_call_operand.vmem [shape: f32[128,128], index: 2, kind: input, shape index: {}]
  %s3 = inlined_call_operand.vmem [shape: f32[1,128], index: 3, kind: input, shape index: {}]
  %s4 = inlined_call_operand.vmem [shape: bf16[512,128], index: 4, kind: output, shape index: {}]
  %s5 = sld [smem:[#allocation0]]
  $region61: #{gcn_forward.4} parent=0
    _
  %s7 = ssub.s32 1, %s5
  %s8 = scalar_select 0, %s7, %s5
  $region1: #{gcn_forward.4} parent=0
    #allocation3 [shape = 'u8[262144]{0}', space=vmem, size = 0x40000, scoped, tag = 'input window, operand 0']
    #allocation4 [shape = 's32[2]{0}', space=sflag, size = 0x8, scoped, tag = 'scoped memory for gcn_forward.4']
    %9 = vsyncpa [#allocation4], 0
    %s10 = scalar_lea.sflag [#allocation4], 1
    %11 = vsyncpa %s10, 0
    loop: start=0, step=1, limit=6
    $region2: #{gcn_forward.4} parent=1 // loop_pre_header
      _
    $region3: #{gcn_forward.4} parent=1 // loop_header
      %s13 = sphi 0, %s17
      %p14 = scmp.ge.s32.totalorder %s13, 6
      %s20 = sphi 0, %s32
      %s21 = sphi 0, %s28
      %s22 = sphi 0, %s20
      %s23 = sphi 0, %s21
      %s24 = sphi 0, %s22
      %s25 = sphi 0, %s23
      %s37 = sphi 0, %s39
      %s40 = sphi 0, %s37
      %s41 = sphi 0, %s40
      %s57 = sphi 0, %s41
      %s61 = sphi 0, %s61
      %s63 = sphi 0, %s61
      %s64 = sphi 0, %s63
      %s78 = sphi 0, %s64
      %s82 = sphi 0, %s82
      %s84 = sphi 0, %s82
      %s85 = sphi 0, %s84
      %s99 = sphi 0, %s85
      %s103 = sphi 0, %s103
      %s105 = sphi 0, %s103
      %s106 = sphi 0, %s105
      %s120 = sphi 0, %s106
      %s126 = sphi 0, %s128
      %s129 = sphi 0, %s126
      %s130 = sphi 0, %s129
      %s146 = sphi 0, %s130
    $region4: #{gcn_forward.4} parent=1 // loop_header_branch
      %16 = sbr.rel (%p14) target = $region8
    $region5: #{gcn_forward.4} parent=1 // loop_body
      %s18 = ssub.s32 %s13, 1
      %s19 = ssub.s32 %s13, 2
      %s26 = sadd.s32 1, %s21
      %p27 = scmp.ge.s32.totalorder %s26, 2
      %s28 = scalar_select %p27, 0, %s26
      %s29 = sadd.s32 1, %s20
      %s30 = scalar_select %p27, %s29, %s20
      %p31 = scmp.ge.s32.totalorder %s30, 2
      %s32 = scalar_select %p31, 0, %s30
      %s33 = ssub.s32 %s20, %s32
      %s34 = ssub.s32 %s21, %s28
      %s35 = sor.u32 %s33, %s34
      %p36 = scmp.eq.s32.totalorder %s35, 0
      %s38 = sadd.s32 %s37, 1
      %s39 = scalar_select %p36, %s37, %s38
      %p42 = pneg %p36
      %p43 = scmp.eq.s32.totalorder %s13, 3
      %p44 = por %p42, %p43
      %p45 = scmp.ne.s32.totalorder %s37, %s40
      %p46 = scmp.eq.s32.totalorder %s13, 0
      %p47 = por %p45, %p46
      %p48 = scmp.ne.s32.totalorder %s37, %s40
      %p49 = scmp.eq.s32.totalorder %s18, 3
      %p50 = por %p48, %p49
      %p51 = scmp.ne.s32.totalorder %s40, %s41
      %p52 = scmp.eq.s32.totalorder %s18, 0
      %p53 = por %p51, %p52
      %p54 = scmp.ne.s32.totalorder %s40, %s41
      %p55 = scmp.eq.s32.totalorder %s19, 3
      %p56 = por %p54, %p55
      %p58 = scmp.ne.s32.totalorder %s41, %s57
      %p59 = scmp.eq.s32.totalorder %s19, 0
      %p60 = por %p58, %p59
      %s62 = sadd.s32 %s61, 1
      %p65 = scmp.eq.s32.totalorder %s13, 3
      %p66 = scmp.ne.s32.totalorder %s61, %s63
      %p67 = scmp.eq.s32.totalorder %s13, 0
      %p68 = por %p66, %p67
      %p69 = scmp.ne.s32.totalorder %s61, %s63
      %p70 = scmp.eq.s32.totalorder %s18, 3
      %p71 = por %p69, %p70
      %p72 = scmp.ne.s32.totalorder %s63, %s64
      %p73 = scmp.eq.s32.totalorder %s18, 0
      %p74 = por %p72, %p73
      %p75 = scmp.ne.s32.totalorder %s63, %s64
      %p76 = scmp.eq.s32.totalorder %s19, 3
      %p77 = por %p75, %p76
      %p79 = scmp.ne.s32.totalorder %s64, %s78
      %p80 = scmp.eq.s32.totalorder %s19, 0
      %p81 = por %p79, %p80
      %s83 = sadd.s32 %s82, 1
      %p86 = scmp.eq.s32.totalorder %s13, 3
      %p87 = scmp.ne.s32.totalorder %s82, %s84
      %p88 = scmp.eq.s32.totalorder %s13, 0
      %p89 = por %p87, %p88
      %p90 = scmp.ne.s32.totalorder %s82, %s84
      %p91 = scmp.eq.s32.totalorder %s18, 3
      %p92 = por %p90, %p91
      %p93 = scmp.ne.s32.totalorder %s84, %s85
      %p94 = scmp.eq.s32.totalorder %s18, 0
      %p95 = por %p93, %p94
      %p96 = scmp.ne.s32.totalorder %s84, %s85
      %p97 = scmp.eq.s32.totalorder %s19, 3
      %p98 = por %p96, %p97
      %p100 = scmp.ne.s32.totalorder %s85, %s99
      %p101 = scmp.eq.s32.totalorder %s19, 0
      %p102 = por %p100, %p101
      %s104 = sadd.s32 %s103, 1
      %p107 = scmp.eq.s32.totalorder %s13, 3
      %p108 = scmp.ne.s32.totalorder %s103, %s105
      %p109 = scmp.eq.s32.totalorder %s13, 0
      %p110 = por %p108, %p109
      %p111 = scmp.ne.s32.totalorder %s103, %s105
      %p112 = scmp.eq.s32.totalorder %s18, 3
      %p113 = por %p111, %p112
      %p114 = scmp.ne.s32.totalorder %s105, %s106
      %p115 = scmp.eq.s32.totalorder %s18, 0
      %p116 = por %p114, %p115
      %p117 = scmp.ne.s32.totalorder %s105, %s106
      %p118 = scmp.eq.s32.totalorder %s19, 3
      %p119 = por %p117, %p118
      %p121 = scmp.ne.s32.totalorder %s106, %s120
      %p122 = scmp.eq.s32.totalorder %s19, 0
      %p123 = por %p121, %p122
      %s124 = ssub.s32 %s20, %s32
      %p125 = scmp.eq.s32.totalorder %s124, 0
      %s127 = sadd.s32 %s126, 1
      %s128 = scalar_select %p125, %s126, %s127
      %p131 = pneg %p125
      %p132 = scmp.eq.s32.totalorder %s13, 3
      %p133 = por %p131, %p132
      %p134 = scmp.ne.s32.totalorder %s126, %s129
      %p135 = scmp.eq.s32.totalorder %s13, 0
      %p136 = por %p134, %p135
      %p137 = scmp.ne.s32.totalorder %s126, %s129
      %p138 = scmp.eq.s32.totalorder %s18, 3
      %p139 = por %p137, %p138
      %p140 = scmp.ne.s32.totalorder %s129, %s130
      %p141 = scmp.eq.s32.totalorder %s18, 0
      %p142 = por %p140, %p141
      %p143 = scmp.ne.s32.totalorder %s129, %s130
      %p144 = scmp.eq.s32.totalorder %s19, 3
      %p145 = por %p143, %p144
      %p147 = scmp.ne.s32.totalorder %s130, %s146
      %p148 = scmp.eq.s32.totalorder %s19, 0
      %p149 = por %p147, %p148
      %p150 = scmp.le.s32.totalorder 1, %s13
      %p151 = scmp.lt.s32.totalorder %s13, 5
      %p152 = pnand %p150, %p151
      %p153 = pneg %p152
      // Predicated region
      $region9: #{gcn_forward.4} parent=5 // pred_check
        _
      $region10: #{gcn_forward.4} parent=5 // pred_check_branch
        %155 = sbr.rel (%p152) target = $region12
      $region11: #{gcn_forward.4} parent=5 // pred_region
        %s156 = ssub.s32 %s13, 1
        // Predicated region
        $region13: #{gcn_forward.4} parent=11 // pred_check
          %p157 = pneg %p74
        $region14: #{gcn_forward.4} parent=11 // pred_check_branch
          %159 = sbr.rel (%p157) target = $region16
        $region15: #{gcn_forward.4} parent=11 // pred_region
          _
        $region16: #{gcn_forward.4} parent=11 // pred_fallthru
          _
        // Predicated region
        $region17: #{gcn_forward.4} parent=11 // pred_check
          %p160 = pneg %p95
        $region18: #{gcn_forward.4} parent=11 // pred_check_branch
          %162 = sbr.rel (%p160) target = $region20
        $region19: #{gcn_forward.4} parent=11 // pred_region
          _
        $region20: #{gcn_forward.4} parent=11 // pred_fallthru
          _
        // Predicated region
        $region21: #{gcn_forward.4} parent=11 // pred_check
          %p163 = pneg %p116
        $region22: #{gcn_forward.4} parent=11 // pred_check_branch
          %165 = sbr.rel (%p163) target = $region24
        $region23: #{gcn_forward.4} parent=11 // pred_region
          _
        $region24: #{gcn_forward.4} parent=11 // pred_fallthru
          _
      $region12: #{gcn_forward.4} parent=5 // pred_fallthru
        _
      %p166 = scmp.lt.s32.totalorder %s13, 4
      // Predicated region
      $region25: #{gcn_forward.4} parent=5 // pred_check
        %p167 = pneg %p166
      $region26: #{gcn_forward.4} parent=5 // pred_check_branch
        %169 = sbr.rel (%p167) target = $region28
      $region27: #{gcn_forward.4} parent=5 // pred_region
        // Predicated region
        $region29: #{gcn_forward.4} parent=27 // pred_check
          %p170 = pneg %p47
        $region30: #{gcn_forward.4} parent=27 // pred_check_branch
          %172 = sbr.rel (%p170) target = $region32
        $region31: #{gcn_forward.4} parent=27 // pred_region
          %s173 = sand.u32 %s37, 1
          %s174 = scalar_lea.sflag [#allocation4], %s173
          %s175 = sand.u32 %s37, 1
          %s176 = smul.addr %s175, 256
          %s177 = scalar_lea.vmem [#allocation3], %s176
          %s178 = smul.u32 32, %s20
          %s179 = smul.u32 2, %s21
          %s181 = ssub.s32 4096, 4096
          %182 = vsyncadd %s174, %s181
          %s183 = smul.addr %s178, 4
          %s184 = sadd.s32 %s179, %s183
          %s185 = smul.addr %s184, 64
          %s186 = scalar_lea.hbm %s0, %s185
          %s187 = sshll.u32 %s177, 4
          %s188 = int_to_ptr.vmem [resolvable:$true] %s187
          %193 = dma.hbm_to_vmem [thread:$0]  %s186, 4096, %s188, %s174, 256, 128, 8
        $region32: #{gcn_forward.4} parent=27 // pred_fallthru
          _
      $region28: #{gcn_forward.4} parent=5 // pred_fallthru
        _
      %p194 = scmp.le.s32.totalorder 1, %s13
      %p195 = scmp.lt.s32.totalorder %s13, 5
      %p196 = pnand %p194, %p195
      %p197 = pneg %p196
      // Predicated region
      $region33: #{gcn_forward.4} parent=5 // pred_check
        _
      $region34: #{gcn_forward.4} parent=5 // pred_check_branch
        %199 = sbr.rel (%p196) target = $region36
      $region35: #{gcn_forward.4} parent=5 // pred_region
        %s200 = ssub.s32 %s13, 1
        %s201 = sand.u32 %s40, 1
        %s202 = scalar_lea.sflag [#allocation4], %s201
        %s203 = sand.u32 %s40, 1
        %s204 = smul.addr %s203, 256
        %s205 = scalar_lea.vmem [#allocation3], %s204
        // Predicated region
        $region37: #{gcn_forward.4} parent=35 // pred_check
          %p206 = pneg %p53
        $region38: #{gcn_forward.4} parent=35 // pred_check_branch
          %208 = sbr.rel (%p206) target = $region40
        $region39: #{gcn_forward.4} parent=35 // pred_region
          %209 = dma.done %s202, 4096
        $region40: #{gcn_forward.4} parent=35 // pred_fallthru
          _
        %s210 = sand.u32 %s40, 1
        %s211 = scalar_lea.sflag [#allocation4], %s210
        %s212 = sand.u32 %s40, 1
        %s213 = smul.addr %s212, 256
        %s214 = scalar_lea.vmem [#allocation3], %s213
        %p215 = pneg %p53
        %p216 = pneg %p50
        %p217 = pneg %p74
        %p218 = pneg %p71
        %p219 = pneg %p95
        %p220 = pneg %p92
        %p221 = pneg %p116
        %p222 = pneg %p113
        %p223 = pneg %p142
        %p224 = pneg %p139
        %s225 = smul.u32 32, %s22
        %p226 = scmp.lt.s32.totalorder %s225, 63
        %s227 = scalar_select %p226, %s225, 63
        %s228 = smul.addr %s227, 4
        %s229 = scalar_lea.vmem %s4, %s228
        %s230 = smul.u32 32, %s22
        %s231 = smul.u32 2, %s23
        %s232 = smul.u32 32, %s22
        %p233 = scmp.lt.s32.totalorder %s232, 63
        %s234 = scalar_select %p233, %s232, 63
        %s235 = smul.addr %s234, 4
        %s236 = scalar_lea.vmem %s4, %s235
        %s237 = smul.u32 32, %s22
        %p239 = scmp.eq.s32.totalorder %s23, 0
        // Predicated region
        $region41: #{gcn_forward.4} parent=35 // pred_check
          %p240 = pneg %p239
        $region42: #{gcn_forward.4} parent=35 // pred_check_branch
          %242 = sbr.rel (%p240) target = $region44
        $region43: #{gcn_forward.4} parent=35 // pred_region
          %243 = vst [vmem:[#allocation2] sm:$0xff] 0.0
          %244 = vst [vmem:[#allocation2 + $0x8] sm:$0xff] 0.0
          %245 = vst [vmem:[#allocation2 + $0x10] sm:$0xff] 0.0
          %246 = vst [vmem:[#allocation2 + $0x18] sm:$0xff] 0.0
          %247 = vst [vmem:[#allocation2 + $0x20] sm:$0xff] 0.0
          %248 = vst [vmem:[#allocation2 + $0x28] sm:$0xff] 0.0
          %249 = vst [vmem:[#allocation2 + $0x30] sm:$0xff] 0.0
          %250 = vst [vmem:[#allocation2 + $0x38] sm:$0xff] 0.0
          %251 = vst [vmem:[#allocation2 + $0x40] sm:$0xff] 0.0
          %252 = vst [vmem:[#allocation2 + $0x48] sm:$0xff] 0.0
          %253 = vst [vmem:[#allocation2 + $0x50] sm:$0xff] 0.0
          %254 = vst [vmem:[#allocation2 + $0x58] sm:$0xff] 0.0
          %255 = vst [vmem:[#allocation2 + $0x60] sm:$0xff] 0.0
          %256 = vst [vmem:[#allocation2 + $0x68] sm:$0xff] 0.0
          %257 = vst [vmem:[#allocation2 + $0x70] sm:$0xff] 0.0
          %258 = vst [vmem:[#allocation2 + $0x78] sm:$0xff] 0.0
          %259 = vst [vmem:[#allocation2 + $0x80] sm:$0xff] 0.0
          %260 = vst [vmem:[#allocation2 + $0x88] sm:$0xff] 0.0
          %261 = vst [vmem:[#allocation2 + $0x90] sm:$0xff] 0.0
          %262 = vst [vmem:[#allocation2 + $0x98] sm:$0xff] 0.0
          %263 = vst [vmem:[#allocation2 + $0xa0] sm:$0xff] 0.0
          %264 = vst [vmem:[#allocation2 + $0xa8] sm:$0xff] 0.0
          %265 = vst [vmem:[#allocation2 + $0xb0] sm:$0xff] 0.0
          %266 = vst [vmem:[#allocation2 + $0xb8] sm:$0xff] 0.0
          %267 = vst [vmem:[#allocation2 + $0xc0] sm:$0xff] 0.0
          %268 = vst [vmem:[#allocation2 + $0xc8] sm:$0xff] 0.0
          %269 = vst [vmem:[#allocation2 + $0xd0] sm:$0xff] 0.0
          %270 = vst [vmem:[#allocation2 + $0xd8] sm:$0xff] 0.0
          %271 = vst [vmem:[#allocation2 + $0xe0] sm:$0xff] 0.0
          %272 = vst [vmem:[#allocation2 + $0xe8] sm:$0xff] 0.0
          %273 = vst [vmem:[#allocation2 + $0xf0] sm:$0xff] 0.0
          %274 = vst [vmem:[#allocation2 + $0xf8] sm:$0xff] 0.0
        $region44: #{gcn_forward.4} parent=35 // pred_fallthru
          _
        %s275 = smul.u32 %s23, 256
        %v276 = vld [vmem:[#allocation2] sm:$0xff]
        %v277 = vld [vmem:[#allocation2 + $0x8] sm:$0xff]
        %v278 = vld [vmem:[#allocation2 + $0x10] sm:$0xff]
        %v279 = vld [vmem:[#allocation2 + $0x18] sm:$0xff]
        %v280 = vld [vmem:[#allocation2 + $0x20] sm:$0xff]
        %v281 = vld [vmem:[#allocation2 + $0x28] sm:$0xff]
        %v282 = vld [vmem:[#allocation2 + $0x30] sm:$0xff]
        %v283 = vld [vmem:[#allocation2 + $0x38] sm:$0xff]
        %v284 = vld [vmem:[#allocation2 + $0x40] sm:$0xff]
        %v285 = vld [vmem:[#allocation2 + $0x48] sm:$0xff]
        %v286 = vld [vmem:[#allocation2 + $0x50] sm:$0xff]
        %v287 = vld [vmem:[#allocation2 + $0x58] sm:$0xff]
        %v288 = vld [vmem:[#allocation2 + $0x60] sm:$0xff]
        %v289 = vld [vmem:[#allocation2 + $0x68] sm:$0xff]
        %v290 = vld [vmem:[#allocation2 + $0x70] sm:$0xff]
        %v291 = vld [vmem:[#allocation2 + $0x78] sm:$0xff]
        %v292 = vld [vmem:[#allocation2 + $0x80] sm:$0xff]
        %v293 = vld [vmem:[#allocation2 + $0x88] sm:$0xff]
        %v294 = vld [vmem:[#allocation2 + $0x90] sm:$0xff]
        %v295 = vld [vmem:[#allocation2 + $0x98] sm:$0xff]
        %v296 = vld [vmem:[#allocation2 + $0xa0] sm:$0xff]
        %v297 = vld [vmem:[#allocation2 + $0xa8] sm:$0xff]
        %v298 = vld [vmem:[#allocation2 + $0xb0] sm:$0xff]
        %v299 = vld [vmem:[#allocation2 + $0xb8] sm:$0xff]
        %v300 = vld [vmem:[#allocation2 + $0xc0] sm:$0xff]
        %v301 = vld [vmem:[#allocation2 + $0xc8] sm:$0xff]
        %v302 = vld [vmem:[#allocation2 + $0xd0] sm:$0xff]
        %v303 = vld [vmem:[#allocation2 + $0xd8] sm:$0xff]
        %v304 = vld [vmem:[#allocation2 + $0xe0] sm:$0xff]
        %v305 = vld [vmem:[#allocation2 + $0xe8] sm:$0xff]
        %v306 = vld [vmem:[#allocation2 + $0xf0] sm:$0xff]
        %v307 = vld [vmem:[#allocation2 + $0xf8] sm:$0xff]
        %v308 = vld [vmem:[%s205] sm:$0xff]
        %v309 = vld [vmem:[%s205 + $0x8] sm:$0xff]
        %v310 = vld [vmem:[%s205 + $0x10] sm:$0xff]
        %v311 = vld [vmem:[%s205 + $0x18] sm:$0xff]
        %v312 = vld [vmem:[%s205 + $0x20] sm:$0xff]
        %v313 = vld [vmem:[%s205 + $0x28] sm:$0xff]
        %v314 = vld [vmem:[%s205 + $0x30] sm:$0xff]
        %v315 = vld [vmem:[%s205 + $0x38] sm:$0xff]
        %v316 = vld [vmem:[%s205 + $0x40] sm:$0xff]
        %v317 = vld [vmem:[%s205 + $0x48] sm:$0xff]
        %v318 = vld [vmem:[%s205 + $0x50] sm:$0xff]
        %v319 = vld [vmem:[%s205 + $0x58] sm:$0xff]
        %v320 = vld [vmem:[%s205 + $0x60] sm:$0xff]
        %v321 = vld [vmem:[%s205 + $0x68] sm:$0xff]
        %v322 = vld [vmem:[%s205 + $0x70] sm:$0xff]
        %v323 = vld [vmem:[%s205 + $0x78] sm:$0xff]
        %v324 = vld [vmem:[%s205 + $0x80] sm:$0xff]
        %v325 = vld [vmem:[%s205 + $0x88] sm:$0xff]
        %v326 = vld [vmem:[%s205 + $0x90] sm:$0xff]
        %v327 = vld [vmem:[%s205 + $0x98] sm:$0xff]
        %v328 = vld [vmem:[%s205 + $0xa0] sm:$0xff]
        %v329 = vld [vmem:[%s205 + $0xa8] sm:$0xff]
        %v330 = vld [vmem:[%s205 + $0xb0] sm:$0xff]
        %v331 = vld [vmem:[%s205 + $0xb8] sm:$0xff]
        %v332 = vld [vmem:[%s205 + $0xc0] sm:$0xff]
        %v333 = vld [vmem:[%s205 + $0xc8] sm:$0xff]
        %v334 = vld [vmem:[%s205 + $0xd0] sm:$0xff]
        %v335 = vld [vmem:[%s205 + $0xd8] sm:$0xff]
        %v336 = vld [vmem:[%s205 + $0xe0] sm:$0xff]
        %v337 = vld [vmem:[%s205 + $0xe8] sm:$0xff]
        %v338 = vld [vmem:[%s205 + $0xf0] sm:$0xff]
        %v339 = vld [vmem:[%s205 + $0xf8] sm:$0xff]
        %s340 = sshra.s32 %s275, 3
        %s341 = sand.u32 %s275, 7
        %s342 = smul.addr %s340, 4
        %s343 = scalar_lea.vmem %s1, %s342
        %v344 = vld [vmem:[%s343] sm:$0xf]
        %v345 = vld [vmem:[%s343 + $0x4] sm:$0xf]
        %v346 = vld [vmem:[%s343 + $0x8] sm:$0xf]
        %v347 = vld [vmem:[%s343 + $0xc] sm:$0xf]
        %v348 = vld [vmem:[%s343 + $0x10] sm:$0xf]
        %v349 = vld [vmem:[%s343 + $0x14] sm:$0xf]
        %v350 = vld [vmem:[%s343 + $0x18] sm:$0xf]
        %v351 = vld [vmem:[%s343 + $0x1c] sm:$0xf]
        %v352 = vld [vmem:[%s343 + $0x20] sm:$0xf]
        %v353 = vld [vmem:[%s343 + $0x24] sm:$0xf]
        %v354 = vld [vmem:[%s343 + $0x28] sm:$0xf]
        %v355 = vld [vmem:[%s343 + $0x2c] sm:$0xf]
        %v356 = vld [vmem:[%s343 + $0x30] sm:$0xf]
        %v357 = vld [vmem:[%s343 + $0x34] sm:$0xf]
        %v358 = vld [vmem:[%s343 + $0x38] sm:$0xf]
        %v359 = vld [vmem:[%s343 + $0x3c] sm:$0xf]
        %v360 = vld [vmem:[%s343 + $0x40] sm:$0xf]
        %v361 = vld [vmem:[%s343 + $0x44] sm:$0xf]
        %v362 = vld [vmem:[%s343 + $0x48] sm:$0xf]
        %v363 = vld [vmem:[%s343 + $0x4c] sm:$0xf]
        %v364 = vld [vmem:[%s343 + $0x50] sm:$0xf]
        %v365 = vld [vmem:[%s343 + $0x54] sm:$0xf]
        %v366 = vld [vmem:[%s343 + $0x58] sm:$0xf]
        %v367 = vld [vmem:[%s343 + $0x5c] sm:$0xf]
        %v368 = vld [vmem:[%s343 + $0x60] sm:$0xf]
        %v369 = vld [vmem:[%s343 + $0x64] sm:$0xf]
        %v370 = vld [vmem:[%s343 + $0x68] sm:$0xf]
        %v371 = vld [vmem:[%s343 + $0x6c] sm:$0xf]
        %v372 = vld [vmem:[%s343 + $0x70] sm:$0xf]
        %v373 = vld [vmem:[%s343 + $0x74] sm:$0xf]
        %v374 = vld [vmem:[%s343 + $0x78] sm:$0xf]
        %v375 = vld [vmem:[%s343 + $0x7c] sm:$0xf]
        %v408 = vunpack.c.l.b16 %v308
        %v409 = vunpack.c.h.b16 %v308
        %v410 = vunpack.c.l.b16 %v309
        %v411 = vunpack.c.h.b16 %v309
        %v412 = vunpack.c.l.b16 %v310
        %v413 = vunpack.c.h.b16 %v310
        %v414 = vunpack.c.l.b16 %v311
        %v415 = vunpack.c.h.b16 %v311
        %v416 = vunpack.c.l.b16 %v312
        %v417 = vunpack.c.h.b16 %v312
        %v418 = vunpack.c.l.b16 %v313
        %v419 = vunpack.c.h.b16 %v313
        %v420 = vunpack.c.l.b16 %v314
        %v421 = vunpack.c.h.b16 %v314
        %v422 = vunpack.c.l.b16 %v315
        %v423 = vunpack.c.h.b16 %v315
        %v424 = vunpack.c.l.b16 %v316
        %v425 = vunpack.c.h.b16 %v316
        %v426 = vunpack.c.l.b16 %v317
        %v427 = vunpack.c.h.b16 %v317
        %v428 = vunpack.c.l.b16 %v318
        %v429 = vunpack.c.h.b16 %v318
        %v430 = vunpack.c.l.b16 %v319
        %v431 = vunpack.c.h.b16 %v319
        %v432 = vunpack.c.l.b16 %v320
        %v433 = vunpack.c.h.b16 %v320
        %v434 = vunpack.c.l.b16 %v321
        %v435 = vunpack.c.h.b16 %v321
        %v436 = vunpack.c.l.b16 %v322
        %v437 = vunpack.c.h.b16 %v322
        %v438 = vunpack.c.l.b16 %v323
        %v439 = vunpack.c.h.b16 %v323
        %v440 = vunpack.c.l.b16 %v324
        %v441 = vunpack.c.h.b16 %v324
        %v442 = vunpack.c.l.b16 %v325
        %v443 = vunpack.c.h.b16 %v325
        %v444 = vunpack.c.l.b16 %v326
        %v445 = vunpack.c.h.b16 %v326
        %v446 = vunpack.c.l.b16 %v327
        %v447 = vunpack.c.h.b16 %v327
        %v448 = vunpack.c.l.b16 %v328
        %v449 = vunpack.c.h.b16 %v328
        %v450 = vunpack.c.l.b16 %v329
        %v451 = vunpack.c.h.b16 %v329
        %v452 = vunpack.c.l.b16 %v330
        %v453 = vunpack.c.h.b16 %v330
        %v454 = vunpack.c.l.b16 %v331
        %v455 = vunpack.c.h.b16 %v331
        %v456 = vunpack.c.l.b16 %v332
        %v457 = vunpack.c.h.b16 %v332
        %v458 = vunpack.c.l.b16 %v333
        %v459 = vunpack.c.h.b16 %v333
        %v460 = vunpack.c.l.b16 %v334
        %v461 = vunpack.c.h.b16 %v334
        %v462 = vunpack.c.l.b16 %v335
        %v463 = vunpack.c.h.b16 %v335
        %v464 = vunpack.c.l.b16 %v336
        %v465 = vunpack.c.h.b16 %v336
        %v466 = vunpack.c.l.b16 %v337
        %v467 = vunpack.c.h.b16 %v337
        %v468 = vunpack.c.l.b16 %v338
        %v469 = vunpack.c.h.b16 %v338
        %v470 = vunpack.c.l.b16 %v339
        %v471 = vunpack.c.h.b16 %v339
        %v472 = vpack.c.b16 %v410, %v408
        %v473 = vpack.c.b16 %v411, %v409
        %v474 = vpack.c.b16 %v414, %v412
        %v475 = vpack.c.b16 %v415, %v413
        %v476 = vpack.c.b16 %v418, %v416
        %v477 = vpack.c.b16 %v419, %v417
        %v478 = vpack.c.b16 %v422, %v420
        %v479 = vpack.c.b16 %v423, %v421
        %v480 = vpack.c.b16 %v426, %v424
        %v481 = vpack.c.b16 %v427, %v425
        %v482 = vpack.c.b16 %v430, %v428
        %v483 = vpack.c.b16 %v431, %v429
        %v484 = vpack.c.b16 %v434, %v432
        %v485 = vpack.c.b16 %v435, %v433
        %v486 = vpack.c.b16 %v438, %v436
        %v487 = vpack.c.b16 %v439, %v437
        %v488 = vpack.c.b16 %v442, %v440
        %v489 = vpack.c.b16 %v443, %v441
        %v490 = vpack.c.b16 %v446, %v444
        %v491 = vpack.c.b16 %v447, %v445
        %v492 = vpack.c.b16 %v450, %v448
        %v493 = vpack.c.b16 %v451, %v449
        %v494 = vpack.c.b16 %v454, %v452
        %v495 = vpack.c.b16 %v455, %v453
        %v496 = vpack.c.b16 %v458, %v456
        %v497 = vpack.c.b16 %v459, %v457
        %v498 = vpack.c.b16 %v462, %v460
        %v499 = vpack.c.b16 %v463, %v461
        %v500 = vpack.c.b16 %v466, %v464
        %v501 = vpack.c.b16 %v467, %v465
        %v502 = vpack.c.b16 %v470, %v468
        %v503 = vpack.c.b16 %v471, %v469
        %v568 = vunpack.c.l.b16 %v344
        %v569 = vunpack.c.l.b16 %v345
        %v570 = vunpack.c.l.b16 %v346
        %v571 = vunpack.c.l.b16 %v347
        %v572 = vunpack.c.l.b16 %v348
        %v573 = vunpack.c.l.b16 %v349
        %v574 = vunpack.c.l.b16 %v350
        %v575 = vunpack.c.l.b16 %v351
        %v576 = vunpack.c.l.b16 %v352
        %v577 = vunpack.c.l.b16 %v353
        %v578 = vunpack.c.l.b16 %v354
        %v579 = vunpack.c.l.b16 %v355
        %v580 = vunpack.c.l.b16 %v356
        %v581 = vunpack.c.l.b16 %v357
        %v582 = vunpack.c.l.b16 %v358
        %v583 = vunpack.c.l.b16 %v359
        %v584 = vunpack.c.l.b16 %v360
        %v585 = vunpack.c.l.b16 %v361
        %v586 = vunpack.c.l.b16 %v362
        %v587 = vunpack.c.l.b16 %v363
        %v588 = vunpack.c.l.b16 %v364
        %v589 = vunpack.c.l.b16 %v365
        %v590 = vunpack.c.l.b16 %v366
        %v591 = vunpack.c.l.b16 %v367
        %v592 = vunpack.c.l.b16 %v368
        %v593 = vunpack.c.l.b16 %v369
        %v594 = vunpack.c.l.b16 %v370
        %v595 = vunpack.c.l.b16 %v371
        %v596 = vunpack.c.l.b16 %v372
        %v597 = vunpack.c.l.b16 %v373
        %v598 = vunpack.c.l.b16 %v374
        %v599 = vunpack.c.l.b16 %v375
        %v600 = vpack.c.b16 %v569, %v568
        %v601 = vpack.c.b16 %v571, %v570
        %v602 = vpack.c.b16 %v573, %v572
        %v603 = vpack.c.b16 %v575, %v574
        %v604 = vpack.c.b16 %v577, %v576
        %v605 = vpack.c.b16 %v579, %v578
        %v606 = vpack.c.b16 %v581, %v580
        %v607 = vpack.c.b16 %v583, %v582
        %v608 = vpack.c.b16 %v585, %v584
        %v609 = vpack.c.b16 %v587, %v586
        %v610 = vpack.c.b16 %v589, %v588
        %v611 = vpack.c.b16 %v591, %v590
        %v612 = vpack.c.b16 %v593, %v592
        %v613 = vpack.c.b16 %v595, %v594
        %v614 = vpack.c.b16 %v597, %v596
        %v615 = vpack.c.b16 %v599, %v598
        %632 = vmatprep.subr.bf16.mxu0 0
        %633 = vmatpush1.bf16.msra.mxu0 %v607
        %634 = vmatprep.subr.bf16.mxu0 0
        %635 = vmatpush1.bf16.msra.mxu0 %v606
        %636 = vmatprep.subr.bf16.mxu0 0
        %637 = vmatpush1.bf16.msra.mxu0 %v605
        %638 = vmatprep.subr.bf16.mxu0 0
        %639 = vmatpush1.bf16.msra.mxu0 %v604
        %640 = vmatprep.subr.bf16.mxu0 0
        %641 = vmatpush1.bf16.msra.mxu0 %v603
        %642 = vmatprep.subr.bf16.mxu0 0
        %643 = vmatpush1.bf16.msra.mxu0 %v602
        %644 = vmatprep.subr.bf16.mxu0 0
        %645 = vmatpush1.bf16.msra.mxu0 %v601
        %646 = vmatprep.subr.bf16.mxu0 0
        %647 = vmatpush1.bf16.msra.mxu0 %v600
        %648 = vmatprep.subr.bf16.mxu0 0
        %649 = vmatpush2.bf16.msra.mxu0 %v615
        %650 = vmatprep.subr.bf16.mxu0 0
        %651 = vmatpush2.bf16.msra.mxu0 %v614
        %652 = vmatprep.subr.bf16.mxu0 0
        %653 = vmatpush2.bf16.msra.mxu0 %v613
        %654 = vmatprep.subr.bf16.mxu0 0
        %655 = vmatpush2.bf16.msra.mxu0 %v612
        %656 = vmatprep.subr.bf16.mxu0 0
        %657 = vmatpush2.bf16.msra.mxu0 %v611
        %658 = vmatprep.subr.bf16.mxu0 0
        %659 = vmatpush2.bf16.msra.mxu0 %v610
        %660 = vmatprep.subr.bf16.mxu0 0
        %661 = vmatpush2.bf16.msra.mxu0 %v609
        %662 = vmatprep.subr.bf16.mxu0 0
        %663 = vmatpush2.bf16.msra.mxu0 %v608
        %664 = vmatprep.mubr.bf16.mxu0 %v473
        %665 = vmatmul.mubr.bf16.gmra.mxu0 %v472
        %v666 = vpop.f32.mrf.mxu0
        %v667 = vadd.f32 0.0, %v666
        %v668 = vpop.f32.mrf.mxu0
        %v669 = vpop.f32.mrf.mxu0
        %v670 = vadd.f32 0.0, %v669
        %v671 = vpop.f32.mrf.mxu0
        %672 = vmatprep.mubr.bf16.mxu0 %v475
        %673 = vmatmul.mubr.bf16.gmra.mxu0 %v474
        %v674 = vpop.f32.mrf.mxu0
        %v675 = vadd.f32 0.0, %v674
        %v676 = vpop.f32.mrf.mxu0
        %v677 = vpop.f32.mrf.mxu0
        %v678 = vadd.f32 0.0, %v677
        %v679 = vpop.f32.mrf.mxu0
        %680 = vmatprep.mubr.bf16.mxu0 %v477
        %681 = vmatmul.mubr.bf16.gmra.mxu0 %v476
        %v682 = vpop.f32.mrf.mxu0
        %v683 = vadd.f32 0.0, %v682
        %v684 = vpop.f32.mrf.mxu0
        %v685 = vpop.f32.mrf.mxu0
        %v686 = vadd.f32 0.0, %v685
        %v687 = vpop.f32.mrf.mxu0
        %688 = vmatprep.mubr.bf16.mxu0 %v479
        %689 = vmatmul.mubr.bf16.gmra.mxu0 %v478
        %v690 = vpop.f32.mrf.mxu0
        %v691 = vadd.f32 0.0, %v690
        %v692 = vpop.f32.mrf.mxu0
        %v693 = vpop.f32.mrf.mxu0
        %v694 = vadd.f32 0.0, %v693
        %v695 = vpop.f32.mrf.mxu0
        %696 = vmatprep.mubr.bf16.mxu0 %v481
        %697 = vmatmul.mubr.bf16.gmra.mxu0 %v480
        %v698 = vpop.f32.mrf.mxu0
        %v699 = vadd.f32 0.0, %v698
        %v700 = vpop.f32.mrf.mxu0
        %v701 = vpop.f32.mrf.mxu0
        %v702 = vadd.f32 0.0, %v701
        %v703 = vpop.f32.mrf.mxu0
        %704 = vmatprep.mubr.bf16.mxu0 %v483
        %705 = vmatmul.mubr.bf16.gmra.mxu0 %v482
        %v706 = vpop.f32.mrf.mxu0
        %v707 = vadd.f32 0.0, %v706
        %v708 = vpop.f32.mrf.mxu0
        %v709 = vpop.f32.mrf.mxu0
        %v710 = vadd.f32 0.0, %v709
        %v711 = vpop.f32.mrf.mxu0
        %712 = vmatprep.mubr.bf16.mxu0 %v485
        %713 = vmatmul.mubr.bf16.gmra.mxu0 %v484
        %v714 = vpop.f32.mrf.mxu0
        %v715 = vadd.f32 0.0, %v714
        %v716 = vpop.f32.mrf.mxu0
        %v717 = vpop.f32.mrf.mxu0
        %v718 = vadd.f32 0.0, %v717
        %v719 = vpop.f32.mrf.mxu0
        %720 = vmatprep.mubr.bf16.mxu0 %v487
        %721 = vmatmul.mubr.bf16.gmra.mxu0 %v486
        %v722 = vpop.f32.mrf.mxu0
        %v723 = vadd.f32 0.0, %v722
        %v724 = vpop.f32.mrf.mxu0
        %v725 = vpop.f32.mrf.mxu0
        %v726 = vadd.f32 0.0, %v725
        %v727 = vpop.f32.mrf.mxu0
        %728 = vmatprep.mubr.bf16.mxu0 %v489
        %729 = vmatmul.mubr.bf16.gmra.mxu0 %v488
        %v730 = vpop.f32.mrf.mxu0
        %v731 = vadd.f32 0.0, %v730
        %v732 = vpop.f32.mrf.mxu0
        %v733 = vpop.f32.mrf.mxu0
        %v734 = vadd.f32 0.0, %v733
        %v735 = vpop.f32.mrf.mxu0
        %736 = vmatprep.mubr.bf16.mxu0 %v491
        %737 = vmatmul.mubr.bf16.gmra.mxu0 %v490
        %v738 = vpop.f32.mrf.mxu0
        %v739 = vadd.f32 0.0, %v738
        %v740 = vpop.f32.mrf.mxu0
        %v741 = vpop.f32.mrf.mxu0
        %v742 = vadd.f32 0.0, %v741
        %v743 = vpop.f32.mrf.mxu0
        %744 = vmatprep.mubr.bf16.mxu0 %v493
        %745 = vmatmul.mubr.bf16.gmra.mxu0 %v492
        %v746 = vpop.f32.mrf.mxu0
        %v747 = vadd.f32 0.0, %v746
        %v748 = vpop.f32.mrf.mxu0
        %v749 = vpop.f32.mrf.mxu0
        %v750 = vadd.f32 0.0, %v749
        %v751 = vpop.f32.mrf.mxu0
        %752 = vmatprep.mubr.bf16.mxu0 %v495
        %753 = vmatmul.mubr.bf16.gmra.mxu0 %v494
        %v754 = vpop.f32.mrf.mxu0
        %v755 = vadd.f32 0.0, %v754
        %v756 = vpop.f32.mrf.mxu0
        %v757 = vpop.f32.mrf.mxu0
        %v758 = vadd.f32 0.0, %v757
        %v759 = vpop.f32.mrf.mxu0
        %760 = vmatprep.mubr.bf16.mxu0 %v497
        %761 = vmatmul.mubr.bf16.gmra.mxu0 %v496
        %v762 = vpop.f32.mrf.mxu0
        %v763 = vadd.f32 0.0, %v762
        %v764 = vpop.f32.mrf.mxu0
        %v765 = vpop.f32.mrf.mxu0
        %v766 = vadd.f32 0.0, %v765
        %v767 = vpop.f32.mrf.mxu0
        %768 = vmatprep.mubr.bf16.mxu0 %v499
        %769 = vmatmul.mubr.bf16.gmra.mxu0 %v498
        %v770 = vpop.f32.mrf.mxu0
        %v771 = vadd.f32 0.0, %v770
        %v772 = vpop.f32.mrf.mxu0
        %v773 = vpop.f32.mrf.mxu0
        %v774 = vadd.f32 0.0, %v773
        %v775 = vpop.f32.mrf.mxu0
        %776 = vmatprep.mubr.bf16.mxu0 %v501
        %777 = vmatmul.mubr.bf16.gmra.mxu0 %v500
        %v778 = vpop.f32.mrf.mxu0
        %v779 = vadd.f32 0.0, %v778
        %v780 = vpop.f32.mrf.mxu0
        %v781 = vpop.f32.mrf.mxu0
        %v782 = vadd.f32 0.0, %v781
        %v783 = vpop.f32.mrf.mxu0
        %784 = vmatprep.mubr.bf16.mxu0 %v503
        %785 = vmatmul.mubr.bf16.gmra.mxu0 %v502
        %v786 = vpop.f32.mrf.mxu0
        %v787 = vadd.f32 0.0, %v786
        %v788 = vpop.f32.mrf.mxu0
        %v789 = vpop.f32.mrf.mxu0
        %v790 = vadd.f32 0.0, %v789
        %v791 = vpop.f32.mrf.mxu0
        %792 = vdwg.mxu0
        %v793 = vadd.f32 %v276, %v667
        %v794 = vadd.f32 %v277, %v670
        %v795 = vadd.f32 %v278, %v675
        %v796 = vadd.f32 %v279, %v678
        %v797 = vadd.f32 %v280, %v683
        %v798 = vadd.f32 %v281, %v686
        %v799 = vadd.f32 %v282, %v691
        %v800 = vadd.f32 %v283, %v694
        %v801 = vadd.f32 %v284, %v699
        %v802 = vadd.f32 %v285, %v702
        %v803 = vadd.f32 %v286, %v707
        %v804 = vadd.f32 %v287, %v710
        %v805 = vadd.f32 %v288, %v715
        %v806 = vadd.f32 %v289, %v718
        %v807 = vadd.f32 %v290, %v723
        %v808 = vadd.f32 %v291, %v726
        %v809 = vadd.f32 %v292, %v731
        %v810 = vadd.f32 %v293, %v734
        %v811 = vadd.f32 %v294, %v739
        %v812 = vadd.f32 %v295, %v742
        %v813 = vadd.f32 %v296, %v747
        %v814 = vadd.f32 %v297, %v750
        %v815 = vadd.f32 %v298, %v755
        %v816 = vadd.f32 %v299, %v758
        %v817 = vadd.f32 %v300, %v763
        %v818 = vadd.f32 %v301, %v766
        %v819 = vadd.f32 %v302, %v771
        %v820 = vadd.f32 %v303, %v774
        %v821 = vadd.f32 %v304, %v779
        %v822 = vadd.f32 %v305, %v782
        %v823 = vadd.f32 %v306, %v787
        %v824 = vadd.f32 %v307, %v790
        %825 = vst [vmem:[#allocation2] sm:$0xff] %v793
        %826 = vst [vmem:[#allocation2 + $0x8] sm:$0xff] %v794
        %827 = vst [vmem:[#allocation2 + $0x10] sm:$0xff] %v795
        %828 = vst [vmem:[#allocation2 + $0x18] sm:$0xff] %v796
        %829 = vst [vmem:[#allocation2 + $0x20] sm:$0xff] %v797
        %830 = vst [vmem:[#allocation2 + $0x28] sm:$0xff] %v798
        %831 = vst [vmem:[#allocation2 + $0x30] sm:$0xff] %v799
        %832 = vst [vmem:[#allocation2 + $0x38] sm:$0xff] %v800
        %833 = vst [vmem:[#allocation2 + $0x40] sm:$0xff] %v801
        %834 = vst [vmem:[#allocation2 + $0x48] sm:$0xff] %v802
        %835 = vst [vmem:[#allocation2 + $0x50] sm:$0xff] %v803
        %836 = vst [vmem:[#allocation2 + $0x58] sm:$0xff] %v804
        %837 = vst [vmem:[#allocation2 + $0x60] sm:$0xff] %v805
        %838 = vst [vmem:[#allocation2 + $0x68] sm:$0xff] %v806
        %839 = vst [vmem:[#allocation2 + $0x70] sm:$0xff] %v807
        %840 = vst [vmem:[#allocation2 + $0x78] sm:$0xff] %v808
        %841 = vst [vmem:[#allocation2 + $0x80] sm:$0xff] %v809
        %842 = vst [vmem:[#allocation2 + $0x88] sm:$0xff] %v810
        %843 = vst [vmem:[#allocation2 + $0x90] sm:$0xff] %v811
        %844 = vst [vmem:[#allocation2 + $0x98] sm:$0xff] %v812
        %845 = vst [vmem:[#allocation2 + $0xa0] sm:$0xff] %v813
        %846 = vst [vmem:[#allocation2 + $0xa8] sm:$0xff] %v814
        %847 = vst [vmem:[#allocation2 + $0xb0] sm:$0xff] %v815
        %848 = vst [vmem:[#allocation2 + $0xb8] sm:$0xff] %v816
        %849 = vst [vmem:[#allocation2 + $0xc0] sm:$0xff] %v817
        %850 = vst [vmem:[#allocation2 + $0xc8] sm:$0xff] %v818
        %851 = vst [vmem:[#allocation2 + $0xd0] sm:$0xff] %v819
        %852 = vst [vmem:[#allocation2 + $0xd8] sm:$0xff] %v820
        %853 = vst [vmem:[#allocation2 + $0xe0] sm:$0xff] %v821
        %854 = vst [vmem:[#allocation2 + $0xe8] sm:$0xff] %v822
        %855 = vst [vmem:[#allocation2 + $0xf0] sm:$0xff] %v823
        %856 = vst [vmem:[#allocation2 + $0xf8] sm:$0xff] %v824
        %p857 = scmp.eq.s32.totalorder %s23, 1
        // Predicated region
        $region45: #{gcn_forward.4} parent=35 // pred_check
          %p858 = pneg %p857
        $region46: #{gcn_forward.4} parent=35 // pred_check_branch
          %860 = sbr.rel (%p858) target = $region48
        $region47: #{gcn_forward.4} parent=35 // pred_region
          %v861 = vld [vmem:[#allocation2] sm:$0xff]
          %v862 = vld [vmem:[#allocation2 + $0x8] sm:$0xff]
          %v863 = vld [vmem:[#allocation2 + $0x10] sm:$0xff]
          %v864 = vld [vmem:[#allocation2 + $0x18] sm:$0xff]
          %v865 = vld [vmem:[#allocation2 + $0x20] sm:$0xff]
          %v866 = vld [vmem:[#allocation2 + $0x28] sm:$0xff]
          %v867 = vld [vmem:[#allocation2 + $0x30] sm:$0xff]
          %v868 = vld [vmem:[#allocation2 + $0x38] sm:$0xff]
          %v869 = vld [vmem:[#allocation2 + $0x40] sm:$0xff]
          %v870 = vld [vmem:[#allocation2 + $0x48] sm:$0xff]
          %v871 = vld [vmem:[#allocation2 + $0x50] sm:$0xff]
          %v872 = vld [vmem:[#allocation2 + $0x58] sm:$0xff]
          %v873 = vld [vmem:[#allocation2 + $0x60] sm:$0xff]
          %v874 = vld [vmem:[#allocation2 + $0x68] sm:$0xff]
          %v875 = vld [vmem:[#allocation2 + $0x70] sm:$0xff]
          %v876 = vld [vmem:[#allocation2 + $0x78] sm:$0xff]
          %v877 = vld [vmem:[#allocation2 + $0x80] sm:$0xff]
          %v878 = vld [vmem:[#allocation2 + $0x88] sm:$0xff]
          %v879 = vld [vmem:[#allocation2 + $0x90] sm:$0xff]
          %v880 = vld [vmem:[#allocation2 + $0x98] sm:$0xff]
          %v881 = vld [vmem:[#allocation2 + $0xa0] sm:$0xff]
          %v882 = vld [vmem:[#allocation2 + $0xa8] sm:$0xff]
          %v883 = vld [vmem:[#allocation2 + $0xb0] sm:$0xff]
          %v884 = vld [vmem:[#allocation2 + $0xb8] sm:$0xff]
          %v885 = vld [vmem:[#allocation2 + $0xc0] sm:$0xff]
          %v886 = vld [vmem:[#allocation2 + $0xc8] sm:$0xff]
          %v887 = vld [vmem:[#allocation2 + $0xd0] sm:$0xff]
          %v888 = vld [vmem:[#allocation2 + $0xd8] sm:$0xff]
          %v889 = vld [vmem:[#allocation2 + $0xe0] sm:$0xff]
          %v890 = vld [vmem:[#allocation2 + $0xe8] sm:$0xff]
          %v891 = vld [vmem:[#allocation2 + $0xf0] sm:$0xff]
          %v892 = vld [vmem:[#allocation2 + $0xf8] sm:$0xff]
          %v893 = vld [vmem:[%s2] sm:$0xff]
          %v894 = vld [vmem:[%s2 + $0x8] sm:$0xff]
          %v895 = vld [vmem:[%s2 + $0x10] sm:$0xff]
          %v896 = vld [vmem:[%s2 + $0x18] sm:$0xff]
          %v897 = vld [vmem:[%s2 + $0x20] sm:$0xff]
          %v898 = vld [vmem:[%s2 + $0x28] sm:$0xff]
          %v899 = vld [vmem:[%s2 + $0x30] sm:$0xff]
          %v900 = vld [vmem:[%s2 + $0x38] sm:$0xff]
          %v901 = vld [vmem:[%s2 + $0x40] sm:$0xff]
          %v902 = vld [vmem:[%s2 + $0x48] sm:$0xff]
          %v903 = vld [vmem:[%s2 + $0x50] sm:$0xff]
          %v904 = vld [vmem:[%s2 + $0x58] sm:$0xff]
          %v905 = vld [vmem:[%s2 + $0x60] sm:$0xff]
          %v906 = vld [vmem:[%s2 + $0x68] sm:$0xff]
          %v907 = vld [vmem:[%s2 + $0x70] sm:$0xff]
          %v908 = vld [vmem:[%s2 + $0x78] sm:$0xff]
          %v909 = vld [vmem:[%s3] sm:$0x1]
          %v911 = vlaneseq
          %v912 = vshrl.u32 %v911, 7
          %v913 = vsub.s32 0, %v912
          %v914 = vrot.slane %v909, %v913
          %916 = vmatprep.subr.mxu0 0.0
          %917 = vmatpush1.msra.mxu0 %v908
          %918 = vmatprep.subr.mxu0 0.0
          %919 = vmatpush1.msra.mxu0 %v907
          %920 = vmatprep.subr.mxu0 0.0
          %921 = vmatpush1.msra.mxu0 %v906
          %922 = vmatprep.subr.mxu0 0.0
          %923 = vmatpush1.msra.mxu0 %v905
          %924 = vmatprep.subr.mxu0 0.0
          %925 = vmatpush1.msra.mxu0 %v904
          %926 = vmatprep.subr.mxu0 0.0
          %927 = vmatpush1.msra.mxu0 %v903
          %928 = vmatprep.subr.mxu0 0.0
          %929 = vmatpush1.msra.mxu0 %v902
          %930 = vmatprep.subr.mxu0 0.0
          %931 = vmatpush1.msra.mxu0 %v901
          %932 = vmatprep.subr.mxu0 0.0
          %933 = vmatpush1.msra.mxu0 %v900
          %934 = vmatprep.subr.mxu0 0.0
          %935 = vmatpush1.msra.mxu0 %v899
          %936 = vmatprep.subr.mxu0 0.0
          %937 = vmatpush1.msra.mxu0 %v898
          %938 = vmatprep.subr.mxu0 0.0
          %939 = vmatpush1.msra.mxu0 %v897
          %940 = vmatprep.subr.mxu0 0.0
          %941 = vmatpush1.msra.mxu0 %v896
          %942 = vmatprep.subr.mxu0 0.0
          %943 = vmatpush1.msra.mxu0 %v895
          %944 = vmatprep.subr.mxu0 0.0
          %945 = vmatpush1.msra.mxu0 %v894
          %946 = vmatprep.subr.mxu0 0.0
          %947 = vmatpush1.msra.mxu0 %v893
          %948 = vmatprep.subr.mxu0 0.0
          %949 = vmatpush2.msra.mxu0 0.0
          %950 = vmatprep.subr.mxu0 0.0
          %951 = vmatpush2.msra.mxu0 0.0
          %952 = vmatprep.subr.mxu0 0.0
          %953 = vmatpush2.msra.mxu0 0.0
          %954 = vmatprep.subr.mxu0 0.0
          %955 = vmatpush2.msra.mxu0 0.0
          %956 = vmatprep.subr.mxu0 0.0
          %957 = vmatpush2.msra.mxu0 0.0
          %958 = vmatprep.subr.mxu0 0.0
          %959 = vmatpush2.msra.mxu0 0.0
          %960 = vmatprep.subr.mxu0 0.0
          %961 = vmatpush2.msra.mxu0 0.0
          %962 = vmatprep.subr.mxu0 0.0
          %963 = vmatpush2.msra.mxu0 0.0
          %964 = vmatprep.subr.mxu0 0.0
          %965 = vmatpush2.msra.mxu0 0.0
          %966 = vmatprep.subr.mxu0 0.0
          %967 = vmatpush2.msra.mxu0 0.0
          %968 = vmatprep.subr.mxu0 0.0
          %969 = vmatpush2.msra.mxu0 0.0
          %970 = vmatprep.subr.mxu0 0.0
          %971 = vmatpush2.msra.mxu0 0.0
          %972 = vmatprep.subr.mxu0 0.0
          %973 = vmatpush2.msra.mxu0 0.0
          %974 = vmatprep.subr.mxu0 0.0
          %975 = vmatpush2.msra.mxu0 0.0
          %976 = vmatprep.subr.mxu0 0.0
          %977 = vmatpush2.msra.mxu0 0.0
          %978 = vmatprep.subr.mxu0 0.0
          %979 = vmatpush2.msra.mxu0 0.0
          %980 = vmatprep.mubr.f32.mxu0 0.0
          %981 = vmatmul.mubr.f32.gmra.mxu0 %v861
          %v982 = vpop.f32.mrf.mxu0
          %v983 = vadd.f32 %v914, %v982
          %v984 = vpop.f32.mrf.mxu0
          %985 = vmatprep.mubr.f32.mxu0 0.0
          %986 = vmatmul.mubr.f32.gmra.mxu0 %v862
          %v987 = vpop.f32.mrf.mxu0
          %v988 = vadd.f32 %v914, %v987
          %v989 = vpop.f32.mrf.mxu0
          %990 = vmatprep.mubr.f32.mxu0 0.0
          %991 = vmatmul.mubr.f32.gmra.mxu0 %v863
          %v992 = vpop.f32.mrf.mxu0
          %v993 = vadd.f32 %v914, %v992
          %v994 = vpop.f32.mrf.mxu0
          %995 = vmatprep.mubr.f32.mxu0 0.0
          %996 = vmatmul.mubr.f32.gmra.mxu0 %v864
          %v997 = vpop.f32.mrf.mxu0
          %v998 = vadd.f32 %v914, %v997
          %v999 = vpop.f32.mrf.mxu0
          %1000 = vmatprep.mubr.f32.mxu0 0.0
          %1001 = vmatmul.mubr.f32.gmra.mxu0 %v865
          %v1002 = vpop.f32.mrf.mxu0
          %v1003 = vadd.f32 %v914, %v1002
          %v1004 = vpop.f32.mrf.mxu0
          %1005 = vmatprep.mubr.f32.mxu0 0.0
          %1006 = vmatmul.mubr.f32.gmra.mxu0 %v866
          %v1007 = vpop.f32.mrf.mxu0
          %v1008 = vadd.f32 %v914, %v1007
          %v1009 = vpop.f32.mrf.mxu0
          %1010 = vmatprep.mubr.f32.mxu0 0.0
          %1011 = vmatmul.mubr.f32.gmra.mxu0 %v867
          %v1012 = vpop.f32.mrf.mxu0
          %v1013 = vadd.f32 %v914, %v1012
          %v1014 = vpop.f32.mrf.mxu0
          %1015 = vmatprep.mubr.f32.mxu0 0.0
          %1016 = vmatmul.mubr.f32.gmra.mxu0 %v868
          %v1017 = vpop.f32.mrf.mxu0
          %v1018 = vadd.f32 %v914, %v1017
          %v1019 = vpop.f32.mrf.mxu0
          %1020 = vmatprep.mubr.f32.mxu0 0.0
          %1021 = vmatmul.mubr.f32.gmra.mxu0 %v869
          %v1022 = vpop.f32.mrf.mxu0
          %v1023 = vadd.f32 %v914, %v1022
          %v1024 = vpop.f32.mrf.mxu0
          %1025 = vmatprep.mubr.f32.mxu0 0.0
          %1026 = vmatmul.mubr.f32.gmra.mxu0 %v870
          %v1027 = vpop.f32.mrf.mxu0
          %v1028 = vadd.f32 %v914, %v1027
          %v1029 = vpop.f32.mrf.mxu0
          %1030 = vmatprep.mubr.f32.mxu0 0.0
          %1031 = vmatmul.mubr.f32.gmra.mxu0 %v871
          %v1032 = vpop.f32.mrf.mxu0
          %v1033 = vadd.f32 %v914, %v1032
          %v1034 = vpop.f32.mrf.mxu0
          %1035 = vmatprep.mubr.f32.mxu0 0.0
          %1036 = vmatmul.mubr.f32.gmra.mxu0 %v872
          %v1037 = vpop.f32.mrf.mxu0
          %v1038 = vadd.f32 %v914, %v1037
          %v1039 = vpop.f32.mrf.mxu0
          %1040 = vmatprep.mubr.f32.mxu0 0.0
          %1041 = vmatmul.mubr.f32.gmra.mxu0 %v873
          %v1042 = vpop.f32.mrf.mxu0
          %v1043 = vadd.f32 %v914, %v1042
          %v1044 = vpop.f32.mrf.mxu0
          %1045 = vmatprep.mubr.f32.mxu0 0.0
          %1046 = vmatmul.mubr.f32.gmra.mxu0 %v874
          %v1047 = vpop.f32.mrf.mxu0
          %v1048 = vadd.f32 %v914, %v1047
          %v1049 = vpop.f32.mrf.mxu0
          %1050 = vmatprep.mubr.f32.mxu0 0.0
          %1051 = vmatmul.mubr.f32.gmra.mxu0 %v875
          %v1052 = vpop.f32.mrf.mxu0
          %v1053 = vadd.f32 %v914, %v1052
          %v1054 = vpop.f32.mrf.mxu0
          %1055 = vmatprep.mubr.f32.mxu0 0.0
          %1056 = vmatmul.mubr.f32.gmra.mxu0 %v876
          %v1057 = vpop.f32.mrf.mxu0
          %v1058 = vadd.f32 %v914, %v1057
          %v1059 = vpop.f32.mrf.mxu0
          %1060 = vmatprep.mubr.f32.mxu0 0.0
          %1061 = vmatmul.mubr.f32.gmra.mxu0 %v877
          %v1062 = vpop.f32.mrf.mxu0
          %v1063 = vadd.f32 %v914, %v1062
          %v1064 = vpop.f32.mrf.mxu0
          %1065 = vmatprep.mubr.f32.mxu0 0.0
          %1066 = vmatmul.mubr.f32.gmra.mxu0 %v878
          %v1067 = vpop.f32.mrf.mxu0
          %v1068 = vadd.f32 %v914, %v1067
          %v1069 = vpop.f32.mrf.mxu0
          %1070 = vmatprep.mubr.f32.mxu0 0.0
          %1071 = vmatmul.mubr.f32.gmra.mxu0 %v879
          %v1072 = vpop.f32.mrf.mxu0
          %v1073 = vadd.f32 %v914, %v1072
          %v1074 = vpop.f32.mrf.mxu0
          %1075 = vmatprep.mubr.f32.mxu0 0.0
          %1076 = vmatmul.mubr.f32.gmra.mxu0 %v880
          %v1077 = vpop.f32.mrf.mxu0
          %v1078 = vadd.f32 %v914, %v1077
          %v1079 = vpop.f32.mrf.mxu0
          %1080 = vmatprep.mubr.f32.mxu0 0.0
          %1081 = vmatmul.mubr.f32.gmra.mxu0 %v881
          %v1082 = vpop.f32.mrf.mxu0
          %v1083 = vadd.f32 %v914, %v1082
          %v1084 = vpop.f32.mrf.mxu0
          %1085 = vmatprep.mubr.f32.mxu0 0.0
          %1086 = vmatmul.mubr.f32.gmra.mxu0 %v882
          %v1087 = vpop.f32.mrf.mxu0
          %v1088 = vadd.f32 %v914, %v1087
          %v1089 = vpop.f32.mrf.mxu0
          %1090 = vmatprep.mubr.f32.mxu0 0.0
          %1091 = vmatmul.mubr.f32.gmra.mxu0 %v883
          %v1092 = vpop.f32.mrf.mxu0
          %v1093 = vadd.f32 %v914, %v1092
          %v1094 = vpop.f32.mrf.mxu0
          %1095 = vmatprep.mubr.f32.mxu0 0.0
          %1096 = vmatmul.mubr.f32.gmra.mxu0 %v884
          %v1097 = vpop.f32.mrf.mxu0
          %v1098 = vadd.f32 %v914, %v1097
          %v1099 = vpop.f32.mrf.mxu0
          %1100 = vmatprep.mubr.f32.mxu0 0.0
          %1101 = vmatmul.mubr.f32.gmra.mxu0 %v885
          %v1102 = vpop.f32.mrf.mxu0
          %v1103 = vadd.f32 %v914, %v1102
          %v1104 = vpop.f32.mrf.mxu0
          %1105 = vmatprep.mubr.f32.mxu0 0.0
          %1106 = vmatmul.mubr.f32.gmra.mxu0 %v886
          %v1107 = vpop.f32.mrf.mxu0
          %v1108 = vadd.f32 %v914, %v1107
          %v1109 = vpop.f32.mrf.mxu0
          %1110 = vmatprep.mubr.f32.mxu0 0.0
          %1111 = vmatmul.mubr.f32.gmra.mxu0 %v887
          %v1112 = vpop.f32.mrf.mxu0
          %v1113 = vadd.f32 %v914, %v1112
          %v1114 = vpop.f32.mrf.mxu0
          %1115 = vmatprep.mubr.f32.mxu0 0.0
          %1116 = vmatmul.mubr.f32.gmra.mxu0 %v888
          %v1117 = vpop.f32.mrf.mxu0
          %v1118 = vadd.f32 %v914, %v1117
          %v1119 = vpop.f32.mrf.mxu0
          %1120 = vmatprep.mubr.f32.mxu0 0.0
          %1121 = vmatmul.mubr.f32.gmra.mxu0 %v889
          %v1122 = vpop.f32.mrf.mxu0
          %v1123 = vadd.f32 %v914, %v1122
          %v1124 = vpop.f32.mrf.mxu0
          %1125 = vmatprep.mubr.f32.mxu0 0.0
          %1126 = vmatmul.mubr.f32.gmra.mxu0 %v890
          %v1127 = vpop.f32.mrf.mxu0
          %v1128 = vadd.f32 %v914, %v1127
          %v1129 = vpop.f32.mrf.mxu0
          %1130 = vmatprep.mubr.f32.mxu0 0.0
          %1131 = vmatmul.mubr.f32.gmra.mxu0 %v891
          %v1132 = vpop.f32.mrf.mxu0
          %v1133 = vadd.f32 %v914, %v1132
          %v1134 = vpop.f32.mrf.mxu0
          %1135 = vmatprep.mubr.f32.mxu0 0.0
          %1136 = vmatmul.mubr.f32.gmra.mxu0 %v892
          %v1137 = vpop.f32.mrf.mxu0
          %v1138 = vadd.f32 %v914, %v1137
          %v1139 = vpop.f32.mrf.mxu0
          %1140 = vdwg.mxu0
          %v1141 = vmax.f32 %v983, 0.0
          %v1142 = vmax.f32 %v988, 0.0
          %v1143 = vmax.f32 %v993, 0.0
          %v1144 = vmax.f32 %v998, 0.0
          %v1145 = vmax.f32 %v1003, 0.0
          %v1146 = vmax.f32 %v1008, 0.0
          %v1147 = vmax.f32 %v1013, 0.0
          %v1148 = vmax.f32 %v1018, 0.0
          %v1149 = vmax.f32 %v1023, 0.0
          %v1150 = vmax.f32 %v1028, 0.0
          %v1151 = vmax.f32 %v1033, 0.0
          %v1152 = vmax.f32 %v1038, 0.0
          %v1153 = vmax.f32 %v1043, 0.0
          %v1154 = vmax.f32 %v1048, 0.0
          %v1155 = vmax.f32 %v1053, 0.0
          %v1156 = vmax.f32 %v1058, 0.0
          %v1157 = vmax.f32 %v1063, 0.0
          %v1158 = vmax.f32 %v1068, 0.0
          %v1159 = vmax.f32 %v1073, 0.0
          %v1160 = vmax.f32 %v1078, 0.0
          %v1161 = vmax.f32 %v1083, 0.0
          %v1162 = vmax.f32 %v1088, 0.0
          %v1163 = vmax.f32 %v1093, 0.0
          %v1164 = vmax.f32 %v1098, 0.0
          %v1165 = vmax.f32 %v1103, 0.0
          %v1166 = vmax.f32 %v1108, 0.0
          %v1167 = vmax.f32 %v1113, 0.0
          %v1168 = vmax.f32 %v1118, 0.0
          %v1169 = vmax.f32 %v1123, 0.0
          %v1170 = vmax.f32 %v1128, 0.0
          %v1171 = vmax.f32 %v1133, 0.0
          %v1172 = vmax.f32 %v1138, 0.0
          %v1173 = vpack.c.bf16 %v1142, %v1141
          %v1174 = vpack.c.bf16 %v1144, %v1143
          %v1175 = vpack.c.bf16 %v1146, %v1145
          %v1176 = vpack.c.bf16 %v1148, %v1147
          %v1177 = vpack.c.bf16 %v1150, %v1149
          %v1178 = vpack.c.bf16 %v1152, %v1151
          %v1179 = vpack.c.bf16 %v1154, %v1153
          %v1180 = vpack.c.bf16 %v1156, %v1155
          %v1181 = vpack.c.bf16 %v1158, %v1157
          %v1182 = vpack.c.bf16 %v1160, %v1159
          %v1183 = vpack.c.bf16 %v1162, %v1161
          %v1184 = vpack.c.bf16 %v1164, %v1163
          %v1185 = vpack.c.bf16 %v1166, %v1165
          %v1186 = vpack.c.bf16 %v1168, %v1167
          %v1187 = vpack.c.bf16 %v1170, %v1169
          %v1188 = vpack.c.bf16 %v1172, %v1171
          %v1205 = vunpack.c.l.b16 %v1173
          %v1206 = vunpack.c.h.b16 %v1173
          %v1207 = vunpack.c.l.b16 %v1174
          %v1208 = vunpack.c.h.b16 %v1174
          %v1209 = vunpack.c.l.b16 %v1175
          %v1210 = vunpack.c.h.b16 %v1175
          %v1211 = vunpack.c.l.b16 %v1176
          %v1212 = vunpack.c.h.b16 %v1176
          %v1213 = vunpack.c.l.b16 %v1177
          %v1214 = vunpack.c.h.b16 %v1177
          %v1215 = vunpack.c.l.b16 %v1178
          %v1216 = vunpack.c.h.b16 %v1178
          %v1217 = vunpack.c.l.b16 %v1179
          %v1218 = vunpack.c.h.b16 %v1179
          %v1219 = vunpack.c.l.b16 %v1180
          %v1220 = vunpack.c.h.b16 %v1180
          %v1221 = vunpack.c.l.b16 %v1181
          %v1222 = vunpack.c.h.b16 %v1181
          %v1223 = vunpack.c.l.b16 %v1182
          %v1224 = vunpack.c.h.b16 %v1182
          %v1225 = vunpack.c.l.b16 %v1183
          %v1226 = vunpack.c.h.b16 %v1183
          %v1227 = vunpack.c.l.b16 %v1184
          %v1228 = vunpack.c.h.b16 %v1184
          %v1229 = vunpack.c.l.b16 %v1185
          %v1230 = vunpack.c.h.b16 %v1185
          %v1231 = vunpack.c.l.b16 %v1186
          %v1232 = vunpack.c.h.b16 %v1186
          %v1233 = vunpack.c.l.b16 %v1187
          %v1234 = vunpack.c.h.b16 %v1187
          %v1235 = vunpack.c.l.b16 %v1188
          %v1236 = vunpack.c.h.b16 %v1188
          %v1237 = vpack.c.b16 %v1205, %v1205
          %v1238 = vpack.c.b16 %v1206, %v1206
          %v1239 = vpack.c.b16 %v1207, %v1207
          %v1240 = vpack.c.b16 %v1208, %v1208
          %v1241 = vpack.c.b16 %v1209, %v1209
          %v1242 = vpack.c.b16 %v1210, %v1210
          %v1243 = vpack.c.b16 %v1211, %v1211
          %v1244 = vpack.c.b16 %v1212, %v1212
          %v1245 = vpack.c.b16 %v1213, %v1213
          %v1246 = vpack.c.b16 %v1214, %v1214
          %v1247 = vpack.c.b16 %v1215, %v1215
          %v1248 = vpack.c.b16 %v1216, %v1216
          %v1249 = vpack.c.b16 %v1217, %v1217
          %v1250 = vpack.c.b16 %v1218, %v1218
          %v1251 = vpack.c.b16 %v1219, %v1219
          %v1252 = vpack.c.b16 %v1220, %v1220
          %v1253 = vpack.c.b16 %v1221, %v1221
          %v1254 = vpack.c.b16 %v1222, %v1222
          %v1255 = vpack.c.b16 %v1223, %v1223
          %v1256 = vpack.c.b16 %v1224, %v1224
          %v1257 = vpack.c.b16 %v1225, %v1225
          %v1258 = vpack.c.b16 %v1226, %v1226
          %v1259 = vpack.c.b16 %v1227, %v1227
          %v1260 = vpack.c.b16 %v1228, %v1228
          %v1261 = vpack.c.b16 %v1229, %v1229
          %v1262 = vpack.c.b16 %v1230, %v1230
          %v1263 = vpack.c.b16 %v1231, %v1231
          %v1264 = vpack.c.b16 %v1232, %v1232
          %v1265 = vpack.c.b16 %v1233, %v1233
          %v1266 = vpack.c.b16 %v1234, %v1234
          %v1267 = vpack.c.b16 %v1235, %v1235
          %v1268 = vpack.c.b16 %v1236, %v1236
          %1301 = vst [vmem:[%s236] sm:$0xf] %v1237
          %1302 = vst [vmem:[%s236 + $0x4] sm:$0xf] %v1238
          %1303 = vst [vmem:[%s236 + $0x8] sm:$0xf] %v1239
          %1304 = vst [vmem:[%s236 + $0xc] sm:$0xf] %v1240
          %1305 = vst [vmem:[%s236 + $0x10] sm:$0xf] %v1241
          %1306 = vst [vmem:[%s236 + $0x14] sm:$0xf] %v1242
          %1307 = vst [vmem:[%s236 + $0x18] sm:$0xf] %v1243
          %1308 = vst [vmem:[%s236 + $0x1c] sm:$0xf] %v1244
          %1309 = vst [vmem:[%s236 + $0x20] sm:$0xf] %v1245
          %1310 = vst [vmem:[%s236 + $0x24] sm:$0xf] %v1246
          %1311 = vst [vmem:[%s236 + $0x28] sm:$0xf] %v1247
          %1312 = vst [vmem:[%s236 + $0x2c] sm:$0xf] %v1248
          %1313 = vst [vmem:[%s236 + $0x30] sm:$0xf] %v1249
          %1314 = vst [vmem:[%s236 + $0x34] sm:$0xf] %v1250
          %1315 = vst [vmem:[%s236 + $0x38] sm:$0xf] %v1251
          %1316 = vst [vmem:[%s236 + $0x3c] sm:$0xf] %v1252
          %1317 = vst [vmem:[%s236 + $0x40] sm:$0xf] %v1253
          %1318 = vst [vmem:[%s236 + $0x44] sm:$0xf] %v1254
          %1319 = vst [vmem:[%s236 + $0x48] sm:$0xf] %v1255
          %1320 = vst [vmem:[%s236 + $0x4c] sm:$0xf] %v1256
          %1321 = vst [vmem:[%s236 + $0x50] sm:$0xf] %v1257
          %1322 = vst [vmem:[%s236 + $0x54] sm:$0xf] %v1258
          %1323 = vst [vmem:[%s236 + $0x58] sm:$0xf] %v1259
          %1324 = vst [vmem:[%s236 + $0x5c] sm:$0xf] %v1260
          %1325 = vst [vmem:[%s236 + $0x60] sm:$0xf] %v1261
          %1326 = vst [vmem:[%s236 + $0x64] sm:$0xf] %v1262
          %1327 = vst [vmem:[%s236 + $0x68] sm:$0xf] %v1263
          %1328 = vst [vmem:[%s236 + $0x6c] sm:$0xf] %v1264
          %1329 = vst [vmem:[%s236 + $0x70] sm:$0xf] %v1265
          %1330 = vst [vmem:[%s236 + $0x74] sm:$0xf] %v1266
          %1331 = vst [vmem:[%s236 + $0x78] sm:$0xf] %v1267
          %1332 = vst [vmem:[%s236 + $0x7c] sm:$0xf] %v1268
        $region48: #{gcn_forward.4} parent=35 // pred_fallthru
          _
        %s1333 = smul.u32 32, %s22
        %p1334 = scmp.lt.s32.totalorder %s1333, 63
        %s1335 = scalar_select %p1334, %s1333, 63
        %s1336 = smul.addr %s1335, 4
        %s1337 = scalar_lea.vmem %s4, %s1336
        // Predicated region
        $region49: #{gcn_forward.4} parent=35 // pred_check
          %p1338 = pneg %p139
        $region50: #{gcn_forward.4} parent=35 // pred_check_branch
          %1340 = sbr.rel (%p1338) target = $region52
        $region51: #{gcn_forward.4} parent=35 // pred_region
          %s1341 = smul.u32 32, %s22
        $region52: #{gcn_forward.4} parent=35 // pred_fallthru
          _
      $region36: #{gcn_forward.4} parent=5 // pred_fallthru
        _
      %p1342 = scmp.le.s32.totalorder 2, %s13
      // Predicated region
      $region53: #{gcn_forward.4} parent=5 // pred_check
        %p1343 = pneg %p1342
      $region54: #{gcn_forward.4} parent=5 // pred_check_branch
        %1345 = sbr.rel (%p1343) target = $region56
      $region55: #{gcn_forward.4} parent=5 // pred_region
        %s1346 = ssub.s32 %s13, 2
        // Predicated region
        $region57: #{gcn_forward.4} parent=55 // pred_check
          %p1347 = pneg %p145
        $region58: #{gcn_forward.4} parent=55 // pred_check_branch
          %1349 = sbr.rel (%p1347) target = $region60
        $region59: #{gcn_forward.4} parent=55 // pred_region
          %s1350 = smul.u32 32, %s24
          %p1351 = scmp.lt.s32.totalorder %s1350, 63
          %s1352 = scalar_select %p1351, %s1350, 63
          %s1353 = smul.addr %s1352, 4
          %s1354 = scalar_lea.vmem %s4, %s1353
        $region60: #{gcn_forward.4} parent=55 // pred_fallthru
          _
      $region56: #{gcn_forward.4} parent=5 // pred_fallthru
        _
    $region6: #{gcn_forward.4} parent=1 // loop_footer
      %s17 = sadd.s32 1, %s13
    $region7: #{gcn_forward.4} parent=1 // loop_footer_branch
      %12 = sbr.rel target = $region3
    $region8: #{gcn_forward.4} parent=1 // loop_exit
      _
    %1355 = vsyncpa [#allocation4], 1
    %s1356 = scalar_lea.sflag [#allocation4], 1
    %1357 = vsyncpa %s1356, 1

// kernel: gcn_forward.7
$region0: #{gcn_forward.7}
  #allocation0 [shape = 'u32[]', space=smem, size = 0x4, offset = 0x4, fixed_abs, tag = 'smem constant byte address 0x4 - core index']
  #allocation1 [shape = 'u32[144,128]{1,0:T(1,128)}', space=vmem, size = 0x12000, scoped, tag = 'internal scratch']
  #allocation2 [shape = 'f32[8,128]{1,0:T(8,128)}', space=vmem, size = 0x1000, scoped, tag = 'scratch operand']
  %s0 = inlined_call_operand.vmem [shape: bf16[8,512], index: 0, kind: input, shape index: {}]
  %s1 = inlined_call_operand.vmem [shape: bf16[512,128], index: 1, kind: input, shape index: {}]
  %s2 = inlined_call_operand.vmem [shape: f32[128,128], index: 2, kind: input, shape index: {}]
  %s3 = inlined_call_operand.vmem [shape: f32[1,128], index: 3, kind: input, shape index: {}]
  %s4 = inlined_call_operand.vmem [shape: f32[128,128], index: 4, kind: input, shape index: {}]
  %s5 = inlined_call_operand.vmem [shape: f32[1,128], index: 5, kind: input, shape index: {}]
  %s6 = inlined_call_operand.hbm [shape: f32[8,128], index: 6, kind: output, shape index: {}]
  %s7 = sld [smem:[#allocation0]]
  $region42: #{gcn_forward.7} parent=0
    _
  %s9 = ssub.s32 1, %s7
  %s10 = scalar_select 0, %s9, %s7
  $region1: #{gcn_forward.7} parent=0
    #allocation3 [shape = 'u8[4096]{0}', space=vmem, size = 0x1000, scoped, tag = 'output window, operand 0, single buffered']
    #allocation4 [shape = 's32[1]{0}', space=sflag, size = 0x4, scoped, tag = 'scoped memory for gcn_forward.7']
    %11 = vsyncpa [#allocation4], 0
    // Predicated region
    $region2: #{gcn_forward.7} parent=1 // pred_check
      _
    $region3: #{gcn_forward.7} parent=1 // pred_check_branch
      %13 = sbr.rel (0) target = $region5
    $region4: #{gcn_forward.7} parent=1 // pred_region
      _
    $region5: #{gcn_forward.7} parent=1 // pred_fallthru
      _
    // Predicated region
    $region6: #{gcn_forward.7} parent=1 // pred_check
      _
    $region7: #{gcn_forward.7} parent=1 // pred_check_branch
      %15 = sbr.rel (0) target = $region9
    $region8: #{gcn_forward.7} parent=1 // pred_region
      _
    $region9: #{gcn_forward.7} parent=1 // pred_fallthru
      _
    // Predicated region
    $region10: #{gcn_forward.7} parent=1 // pred_check
      _
    $region11: #{gcn_forward.7} parent=1 // pred_check_branch
      %17 = sbr.rel (0) target = $region13
    $region12: #{gcn_forward.7} parent=1 // pred_region
      _
    $region13: #{gcn_forward.7} parent=1 // pred_fallthru
      _
    // Predicated region
    $region14: #{gcn_forward.7} parent=1 // pred_check
      _
    $region15: #{gcn_forward.7} parent=1 // pred_check_branch
      %19 = sbr.rel (0) target = $region17
    $region16: #{gcn_forward.7} parent=1 // pred_region
      _
    $region17: #{gcn_forward.7} parent=1 // pred_fallthru
      _
    // Predicated region
    $region18: #{gcn_forward.7} parent=1 // pred_check
      _
    $region19: #{gcn_forward.7} parent=1 // pred_check_branch
      %21 = sbr.rel (0) target = $region21
    $region20: #{gcn_forward.7} parent=1 // pred_region
      _
    $region21: #{gcn_forward.7} parent=1 // pred_fallthru
      _
    // Predicated region
    $region22: #{gcn_forward.7} parent=1 // pred_check
      _
    $region23: #{gcn_forward.7} parent=1 // pred_check_branch
      %23 = sbr.rel (0) target = $region25
    $region24: #{gcn_forward.7} parent=1 // pred_region
      _
    $region25: #{gcn_forward.7} parent=1 // pred_fallthru
      _
    %p25 = scmp.eq.s32.totalorder 0, 0
    // Predicated region
    $region26: #{gcn_forward.7} parent=1 // pred_check
      %p26 = pneg %p25
    $region27: #{gcn_forward.7} parent=1 // pred_check_branch
      %28 = sbr.rel (%p26) target = $region29
    $region28: #{gcn_forward.7} parent=1 // pred_region
      %29 = vst [vmem:[#allocation2] sm:$0xff] 0.0
    $region29: #{gcn_forward.7} parent=1 // pred_fallthru
      _
    %v30 = vld [vmem:[#allocation2] sm:$0xff]
    %v31 = vld [vmem:[%s0] sm:$0xff]
    %v32 = vld [vmem:[%s0 + $0x8] sm:$0xff]
    %v33 = vld [vmem:[%s1] sm:$0xf]
    %v34 = vld [vmem:[%s1 + $0x4] sm:$0xf]
    %v35 = vld [vmem:[%s1 + $0x8] sm:$0xf]
    %v36 = vld [vmem:[%s1 + $0xc] sm:$0xf]
    %v37 = vld [vmem:[%s1 + $0x10] sm:$0xf]
    %v38 = vld [vmem:[%s1 + $0x14] sm:$0xf]
    %v39 = vld [vmem:[%s1 + $0x18] sm:$0xf]
    %v40 = vld [vmem:[%s1 + $0x1c] sm:$0xf]
    %v41 = vld [vmem:[%s1 + $0x20] sm:$0xf]
    %v42 = vld [vmem:[%s1 + $0x24] sm:$0xf]
    %v43 = vld [vmem:[%s1 + $0x28] sm:$0xf]
    %v44 = vld [vmem:[%s1 + $0x2c] sm:$0xf]
    %v45 = vld [vmem:[%s1 + $0x30] sm:$0xf]
    %v46 = vld [vmem:[%s1 + $0x34] sm:$0xf]
    %v47 = vld [vmem:[%s1 + $0x38] sm:$0xf]
    %v48 = vld [vmem:[%s1 + $0x3c] sm:$0xf]
    %v49 = vld [vmem:[%s1 + $0x40] sm:$0xf]
    %v50 = vld [vmem:[%s1 + $0x44] sm:$0xf]
    %v51 = vld [vmem:[%s1 + $0x48] sm:$0xf]
    %v52 = vld [vmem:[%s1 + $0x4c] sm:$0xf]
    %v53 = vld [vmem:[%s1 + $0x50] sm:$0xf]
    %v54 = vld [vmem:[%s1 + $0x54] sm:$0xf]
    %v55 = vld [vmem:[%s1 + $0x58] sm:$0xf]
    %v56 = vld [vmem:[%s1 + $0x5c] sm:$0xf]
    %v57 = vld [vmem:[%s1 + $0x60] sm:$0xf]
    %v58 = vld [vmem:[%s1 + $0x64] sm:$0xf]
    %v59 = vld [vmem:[%s1 + $0x68] sm:$0xf]
    %v60 = vld [vmem:[%s1 + $0x6c] sm:$0xf]
    %v61 = vld [vmem:[%s1 + $0x70] sm:$0xf]
    %v62 = vld [vmem:[%s1 + $0x74] sm:$0xf]
    %v63 = vld [vmem:[%s1 + $0x78] sm:$0xf]
    %v64 = vld [vmem:[%s1 + $0x7c] sm:$0xf]
    %v65 = vld [vmem:[%s1 + $0x80] sm:$0xf]
    %v66 = vld [vmem:[%s1 + $0x84] sm:$0xf]
    %v67 = vld [vmem:[%s1 + $0x88] sm:$0xf]
    %v68 = vld [vmem:[%s1 + $0x8c] sm:$0xf]
    %v69 = vld [vmem:[%s1 + $0x90] sm:$0xf]
    %v70 = vld [vmem:[%s1 + $0x94] sm:$0xf]
    %v71 = vld [vmem:[%s1 + $0x98] sm:$0xf]
    %v72 = vld [vmem:[%s1 + $0x9c] sm:$0xf]
    %v73 = vld [vmem:[%s1 + $0xa0] sm:$0xf]
    %v74 = vld [vmem:[%s1 + $0xa4] sm:$0xf]
    %v75 = vld [vmem:[%s1 + $0xa8] sm:$0xf]
    %v76 = vld [vmem:[%s1 + $0xac] sm:$0xf]
    %v77 = vld [vmem:[%s1 + $0xb0] sm:$0xf]
    %v78 = vld [vmem:[%s1 + $0xb4] sm:$0xf]
    %v79 = vld [vmem:[%s1 + $0xb8] sm:$0xf]
    %v80 = vld [vmem:[%s1 + $0xbc] sm:$0xf]
    %v81 = vld [vmem:[%s1 + $0xc0] sm:$0xf]
    %v82 = vld [vmem:[%s1 + $0xc4] sm:$0xf]
    %v83 = vld [vmem:[%s1 + $0xc8] sm:$0xf]
    %v84 = vld [vmem:[%s1 + $0xcc] sm:$0xf]
    %v85 = vld [vmem:[%s1 + $0xd0] sm:$0xf]
    %v86 = vld [vmem:[%s1 + $0xd4] sm:$0xf]
    %v87 = vld [vmem:[%s1 + $0xd8] sm:$0xf]
    %v88 = vld [vmem:[%s1 + $0xdc] sm:$0xf]
    %v89 = vld [vmem:[%s1 + $0xe0] sm:$0xf]
    %v90 = vld [vmem:[%s1 + $0xe4] sm:$0xf]
    %v91 = vld [vmem:[%s1 + $0xe8] sm:$0xf]
    %v92 = vld [vmem:[%s1 + $0xec] sm:$0xf]
    %v93 = vld [vmem:[%s1 + $0xf0] sm:$0xf]
    %v94 = vld [vmem:[%s1 + $0xf4] sm:$0xf]
    %v95 = vld [vmem:[%s1 + $0xf8] sm:$0xf]
    %v96 = vld [vmem:[%s1 + $0xfc] sm:$0xf]
    %v99 = vunpack.c.l.b16 %v31
    %v100 = vunpack.c.h.b16 %v31
    %v101 = vunpack.c.l.b16 %v32
    %v102 = vunpack.c.h.b16 %v32
    %v103 = vpack.c.b16 %v99, %v99
    %v104 = vpack.c.b16 %v100, %v100
    %v105 = vpack.c.b16 %v101, %v101
    %v106 = vpack.c.b16 %v102, %v102
    %v175 = vunpack.c.l.b16 %v33
    %v176 = vunpack.c.l.b16 %v34
    %v177 = vunpack.c.l.b16 %v35
    %v178 = vunpack.c.l.b16 %v36
    %v179 = vunpack.c.l.b16 %v37
    %v180 = vunpack.c.l.b16 %v38
    %v181 = vunpack.c.l.b16 %v39
    %v182 = vunpack.c.l.b16 %v40
    %v183 = vunpack.c.l.b16 %v41
    %v184 = vunpack.c.l.b16 %v42
    %v185 = vunpack.c.l.b16 %v43
    %v186 = vunpack.c.l.b16 %v44
    %v187 = vunpack.c.l.b16 %v45
    %v188 = vunpack.c.l.b16 %v46
    %v189 = vunpack.c.l.b16 %v47
    %v190 = vunpack.c.l.b16 %v48
    %v191 = vunpack.c.l.b16 %v49
    %v192 = vunpack.c.l.b16 %v50
    %v193 = vunpack.c.l.b16 %v51
    %v194 = vunpack.c.l.b16 %v52
    %v195 = vunpack.c.l.b16 %v53
    %v196 = vunpack.c.l.b16 %v54
    %v197 = vunpack.c.l.b16 %v55
    %v198 = vunpack.c.l.b16 %v56
    %v199 = vunpack.c.l.b16 %v57
    %v200 = vunpack.c.l.b16 %v58
    %v201 = vunpack.c.l.b16 %v59
    %v202 = vunpack.c.l.b16 %v60
    %v203 = vunpack.c.l.b16 %v61
    %v204 = vunpack.c.l.b16 %v62
    %v205 = vunpack.c.l.b16 %v63
    %v206 = vunpack.c.l.b16 %v64
    %v207 = vunpack.c.l.b16 %v65
    %v208 = vunpack.c.l.b16 %v66
    %v209 = vunpack.c.l.b16 %v67
    %v210 = vunpack.c.l.b16 %v68
    %v211 = vunpack.c.l.b16 %v69
    %v212 = vunpack.c.l.b16 %v70
    %v213 = vunpack.c.l.b16 %v71
    %v214 = vunpack.c.l.b16 %v72
    %v215 = vunpack.c.l.b16 %v73
    %v216 = vunpack.c.l.b16 %v74
    %v217 = vunpack.c.l.b16 %v75
    %v218 = vunpack.c.l.b16 %v76
    %v219 = vunpack.c.l.b16 %v77
    %v220 = vunpack.c.l.b16 %v78
    %v221 = vunpack.c.l.b16 %v79
    %v222 = vunpack.c.l.b16 %v80
    %v223 = vunpack.c.l.b16 %v81
    %v224 = vunpack.c.l.b16 %v82
    %v225 = vunpack.c.l.b16 %v83
    %v226 = vunpack.c.l.b16 %v84
    %v227 = vunpack.c.l.b16 %v85
    %v228 = vunpack.c.l.b16 %v86
    %v229 = vunpack.c.l.b16 %v87
    %v230 = vunpack.c.l.b16 %v88
    %v231 = vunpack.c.l.b16 %v89
    %v232 = vunpack.c.l.b16 %v90
    %v233 = vunpack.c.l.b16 %v91
    %v234 = vunpack.c.l.b16 %v92
    %v235 = vunpack.c.l.b16 %v93
    %v236 = vunpack.c.l.b16 %v94
    %v237 = vunpack.c.l.b16 %v95
    %v238 = vunpack.c.l.b16 %v96
    %v239 = vpack.c.b16 %v176, %v175
    %v240 = vpack.c.b16 %v178, %v177
    %v241 = vpack.c.b16 %v180, %v179
    %v242 = vpack.c.b16 %v182, %v181
    %v243 = vpack.c.b16 %v184, %v183
    %v244 = vpack.c.b16 %v186, %v185
    %v245 = vpack.c.b16 %v188, %v187
    %v246 = vpack.c.b16 %v190, %v189
    %v247 = vpack.c.b16 %v192, %v191
    %v248 = vpack.c.b16 %v194, %v193
    %v249 = vpack.c.b16 %v196, %v195
    %v250 = vpack.c.b16 %v198, %v197
    %v251 = vpack.c.b16 %v200, %v199
    %v252 = vpack.c.b16 %v202, %v201
    %v253 = vpack.c.b16 %v204, %v203
    %v254 = vpack.c.b16 %v206, %v205
    %v255 = vpack.c.b16 %v208, %v207
    %v256 = vpack.c.b16 %v210, %v209
    %v257 = vpack.c.b16 %v212, %v211
    %v258 = vpack.c.b16 %v214, %v213
    %v259 = vpack.c.b16 %v216, %v215
    %v260 = vpack.c.b16 %v218, %v217
    %v261 = vpack.c.b16 %v220, %v219
    %v262 = vpack.c.b16 %v222, %v221
    %v263 = vpack.c.b16 %v224, %v223
    %v264 = vpack.c.b16 %v226, %v225
    %v265 = vpack.c.b16 %v228, %v227
    %v266 = vpack.c.b16 %v230, %v229
    %v267 = vpack.c.b16 %v232, %v231
    %v268 = vpack.c.b16 %v234, %v233
    %v269 = vpack.c.b16 %v236, %v235
    %v270 = vpack.c.b16 %v238, %v237
    %303 = vmatprep.subr.bf16.mxu0 0
    %304 = vmatpush1.bf16.msra.mxu0 %v246
    %305 = vmatprep.subr.bf16.mxu0 0
    %306 = vmatpush1.bf16.msra.mxu0 %v245
    %307 = vmatprep.subr.bf16.mxu0 0
    %308 = vmatpush1.bf16.msra.mxu0 %v244
    %309 = vmatprep.subr.bf16.mxu0 0
    %310 = vmatpush1.bf16.msra.mxu0 %v243
    %311 = vmatprep.subr.bf16.mxu0 0
    %312 = vmatpush1.bf16.msra.mxu0 %v242
    %313 = vmatprep.subr.bf16.mxu0 0
    %314 = vmatpush1.bf16.msra.mxu0 %v241
    %315 = vmatprep.subr.bf16.mxu0 0
    %316 = vmatpush1.bf16.msra.mxu0 %v240
    %317 = vmatprep.subr.bf16.mxu0 0
    %318 = vmatpush1.bf16.msra.mxu0 %v239
    %319 = vmatprep.subr.bf16.mxu0 0
    %320 = vmatpush2.bf16.msra.mxu0 %v254
    %321 = vmatprep.subr.bf16.mxu0 0
    %322 = vmatpush2.bf16.msra.mxu0 %v253
    %323 = vmatprep.subr.bf16.mxu0 0
    %324 = vmatpush2.bf16.msra.mxu0 %v252
    %325 = vmatprep.subr.bf16.mxu0 0
    %326 = vmatpush2.bf16.msra.mxu0 %v251
    %327 = vmatprep.subr.bf16.mxu0 0
    %328 = vmatpush2.bf16.msra.mxu0 %v250
    %329 = vmatprep.subr.bf16.mxu0 0
    %330 = vmatpush2.bf16.msra.mxu0 %v249
    %331 = vmatprep.subr.bf16.mxu0 0
    %332 = vmatpush2.bf16.msra.mxu0 %v248
    %333 = vmatprep.subr.bf16.mxu0 0
    %334 = vmatpush2.bf16.msra.mxu0 %v247
    %335 = vmatprep.mubr.bf16.mxu0 %v104
    %336 = vmatmul.mubr.bf16.gmra.mxu0 %v103
    %v337 = vpop.f32.mrf.mxu0
    %v338 = vadd.f32 0.0, %v337
    %v339 = vpop.f32.mrf.mxu0
    %v340 = vpop.f32.mrf.mxu0
    %v341 = vpop.f32.mrf.mxu0
    %342 = vdwg.mxu0
    %343 = vmatprep.subr.bf16.mxu0 0
    %344 = vmatpush1.bf16.msra.mxu0 %v262
    %345 = vmatprep.subr.bf16.mxu0 0
    %346 = vmatpush1.bf16.msra.mxu0 %v261
    %347 = vmatprep.subr.bf16.mxu0 0
    %348 = vmatpush1.bf16.msra.mxu0 %v260
    %349 = vmatprep.subr.bf16.mxu0 0
    %350 = vmatpush1.bf16.msra.mxu0 %v259
    %351 = vmatprep.subr.bf16.mxu0 0
    %352 = vmatpush1.bf16.msra.mxu0 %v258
    %353 = vmatprep.subr.bf16.mxu0 0
    %354 = vmatpush1.bf16.msra.mxu0 %v257
    %355 = vmatprep.subr.bf16.mxu0 0
    %356 = vmatpush1.bf16.msra.mxu0 %v256
    %357 = vmatprep.subr.bf16.mxu0 0
    %358 = vmatpush1.bf16.msra.mxu0 %v255
    %359 = vmatprep.subr.bf16.mxu0 0
    %360 = vmatpush2.bf16.msra.mxu0 %v270
    %361 = vmatprep.subr.bf16.mxu0 0
    %362 = vmatpush2.bf16.msra.mxu0 %v269
    %363 = vmatprep.subr.bf16.mxu0 0
    %364 = vmatpush2.bf16.msra.mxu0 %v268
    %365 = vmatprep.subr.bf16.mxu0 0
    %366 = vmatpush2.bf16.msra.mxu0 %v267
    %367 = vmatprep.subr.bf16.mxu0 0
    %368 = vmatpush2.bf16.msra.mxu0 %v266
    %369 = vmatprep.subr.bf16.mxu0 0
    %370 = vmatpush2.bf16.msra.mxu0 %v265
    %371 = vmatprep.subr.bf16.mxu0 0
    %372 = vmatpush2.bf16.msra.mxu0 %v264
    %373 = vmatprep.subr.bf16.mxu0 0
    %374 = vmatpush2.bf16.msra.mxu0 %v263
    %375 = vmatprep.mubr.bf16.mxu0 %v106
    %376 = vmatmul.mubr.bf16.gmra.mxu0 %v105
    %v377 = vpop.f32.mrf.mxu0
    %v378 = vadd.f32 %v338, %v377
    %v379 = vpop.f32.mrf.mxu0
    %v380 = vpop.f32.mrf.mxu0
    %v381 = vpop.f32.mrf.mxu0
    %382 = vdwg.mxu0
    %v383 = vadd.f32 %v30, %v378
    %384 = vst [vmem:[#allocation2] sm:$0xff] %v383
    // Predicated region
    $region30: #{gcn_forward.7} parent=1 // pred_check
      %p385 = pneg %p25
    $region31: #{gcn_forward.7} parent=1 // pred_check_branch
      %387 = sbr.rel (%p385) target = $region33
    $region32: #{gcn_forward.7} parent=1 // pred_region
      %v388 = vld [vmem:[#allocation2] sm:$0xff]
      %v389 = vld [vmem:[%s2] sm:$0xff]
      %v390 = vld [vmem:[%s2 + $0x8] sm:$0xff]
      %v391 = vld [vmem:[%s2 + $0x10] sm:$0xff]
      %v392 = vld [vmem:[%s2 + $0x18] sm:$0xff]
      %v393 = vld [vmem:[%s2 + $0x20] sm:$0xff]
      %v394 = vld [vmem:[%s2 + $0x28] sm:$0xff]
      %v395 = vld [vmem:[%s2 + $0x30] sm:$0xff]
      %v396 = vld [vmem:[%s2 + $0x38] sm:$0xff]
      %v397 = vld [vmem:[%s2 + $0x40] sm:$0xff]
      %v398 = vld [vmem:[%s2 + $0x48] sm:$0xff]
      %v399 = vld [vmem:[%s2 + $0x50] sm:$0xff]
      %v400 = vld [vmem:[%s2 + $0x58] sm:$0xff]
      %v401 = vld [vmem:[%s2 + $0x60] sm:$0xff]
      %v402 = vld [vmem:[%s2 + $0x68] sm:$0xff]
      %v403 = vld [vmem:[%s2 + $0x70] sm:$0xff]
      %v404 = vld [vmem:[%s2 + $0x78] sm:$0xff]
      %v405 = vld [vmem:[%s3] sm:$0x1]
      %v407 = vlaneseq
      %v408 = vshrl.u32 %v407, 7
      %v409 = vsub.s32 0, %v408
      %v410 = vrot.slane %v405, %v409
      %412 = vmatprep.subr.mxu0 0.0
      %413 = vmatpush1.msra.mxu0 %v404
      %414 = vmatprep.subr.mxu0 0.0
      %415 = vmatpush1.msra.mxu0 %v403
      %416 = vmatprep.subr.mxu0 0.0
      %417 = vmatpush1.msra.mxu0 %v402
      %418 = vmatprep.subr.mxu0 0.0
      %419 = vmatpush1.msra.mxu0 %v401
      %420 = vmatprep.subr.mxu0 0.0
      %421 = vmatpush1.msra.mxu0 %v400
      %422 = vmatprep.subr.mxu0 0.0
      %423 = vmatpush1.msra.mxu0 %v399
      %424 = vmatprep.subr.mxu0 0.0
      %425 = vmatpush1.msra.mxu0 %v398
      %426 = vmatprep.subr.mxu0 0.0
      %427 = vmatpush1.msra.mxu0 %v397
      %428 = vmatprep.subr.mxu0 0.0
      %429 = vmatpush1.msra.mxu0 %v396
      %430 = vmatprep.subr.mxu0 0.0
      %431 = vmatpush1.msra.mxu0 %v395
      %432 = vmatprep.subr.mxu0 0.0
      %433 = vmatpush1.msra.mxu0 %v394
      %434 = vmatprep.subr.mxu0 0.0
      %435 = vmatpush1.msra.mxu0 %v393
      %436 = vmatprep.subr.mxu0 0.0
      %437 = vmatpush1.msra.mxu0 %v392
      %438 = vmatprep.subr.mxu0 0.0
      %439 = vmatpush1.msra.mxu0 %v391
      %440 = vmatprep.subr.mxu0 0.0
      %441 = vmatpush1.msra.mxu0 %v390
      %442 = vmatprep.subr.mxu0 0.0
      %443 = vmatpush1.msra.mxu0 %v389
      %444 = vmatprep.subr.mxu0 0.0
      %445 = vmatpush2.msra.mxu0 0.0
      %446 = vmatprep.subr.mxu0 0.0
      %447 = vmatpush2.msra.mxu0 0.0
      %448 = vmatprep.subr.mxu0 0.0
      %449 = vmatpush2.msra.mxu0 0.0
      %450 = vmatprep.subr.mxu0 0.0
      %451 = vmatpush2.msra.mxu0 0.0
      %452 = vmatprep.subr.mxu0 0.0
      %453 = vmatpush2.msra.mxu0 0.0
      %454 = vmatprep.subr.mxu0 0.0
      %455 = vmatpush2.msra.mxu0 0.0
      %456 = vmatprep.subr.mxu0 0.0
      %457 = vmatpush2.msra.mxu0 0.0
      %458 = vmatprep.subr.mxu0 0.0
      %459 = vmatpush2.msra.mxu0 0.0
      %460 = vmatprep.subr.mxu0 0.0
      %461 = vmatpush2.msra.mxu0 0.0
      %462 = vmatprep.subr.mxu0 0.0
      %463 = vmatpush2.msra.mxu0 0.0
      %464 = vmatprep.subr.mxu0 0.0
      %465 = vmatpush2.msra.mxu0 0.0
      %466 = vmatprep.subr.mxu0 0.0
      %467 = vmatpush2.msra.mxu0 0.0
      %468 = vmatprep.subr.mxu0 0.0
      %469 = vmatpush2.msra.mxu0 0.0
      %470 = vmatprep.subr.mxu0 0.0
      %471 = vmatpush2.msra.mxu0 0.0
      %472 = vmatprep.subr.mxu0 0.0
      %473 = vmatpush2.msra.mxu0 0.0
      %474 = vmatprep.subr.mxu0 0.0
      %475 = vmatpush2.msra.mxu0 0.0
      %476 = vmatprep.mubr.f32.mxu0 0.0
      %477 = vmatmul.mubr.f32.gmra.mxu0 %v388
      %v478 = vpop.f32.mrf.mxu0
      %v479 = vadd.f32 %v410, %v478
      %v480 = vpop.f32.mrf.mxu0
      %481 = vdwg.mxu0
      %v482 = vld [vmem:[%s4] sm:$0xff]
      %v483 = vld [vmem:[%s4 + $0x8] sm:$0xff]
      %v484 = vld [vmem:[%s4 + $0x10] sm:$0xff]
      %v485 = vld [vmem:[%s4 + $0x18] sm:$0xff]
      %v486 = vld [vmem:[%s4 + $0x20] sm:$0xff]
      %v487 = vld [vmem:[%s4 + $0x28] sm:$0xff]
      %v488 = vld [vmem:[%s4 + $0x30] sm:$0xff]
      %v489 = vld [vmem:[%s4 + $0x38] sm:$0xff]
      %v490 = vld [vmem:[%s4 + $0x40] sm:$0xff]
      %v491 = vld [vmem:[%s4 + $0x48] sm:$0xff]
      %v492 = vld [vmem:[%s4 + $0x50] sm:$0xff]
      %v493 = vld [vmem:[%s4 + $0x58] sm:$0xff]
      %v494 = vld [vmem:[%s4 + $0x60] sm:$0xff]
      %v495 = vld [vmem:[%s4 + $0x68] sm:$0xff]
      %v496 = vld [vmem:[%s4 + $0x70] sm:$0xff]
      %v497 = vld [vmem:[%s4 + $0x78] sm:$0xff]
      %v498 = vld [vmem:[%s5] sm:$0x1]
      %v500 = vlaneseq
      %v501 = vshrl.u32 %v500, 7
      %v502 = vsub.s32 0, %v501
      %v503 = vrot.slane %v498, %v502
      %505 = vmatprep.subr.mxu0 0.0
      %506 = vmatpush1.msra.mxu0 %v497
      %507 = vmatprep.subr.mxu0 0.0
      %508 = vmatpush1.msra.mxu0 %v496
      %509 = vmatprep.subr.mxu0 0.0
      %510 = vmatpush1.msra.mxu0 %v495
      %511 = vmatprep.subr.mxu0 0.0
      %512 = vmatpush1.msra.mxu0 %v494
      %513 = vmatprep.subr.mxu0 0.0
      %514 = vmatpush1.msra.mxu0 %v493
      %515 = vmatprep.subr.mxu0 0.0
      %516 = vmatpush1.msra.mxu0 %v492
      %517 = vmatprep.subr.mxu0 0.0
      %518 = vmatpush1.msra.mxu0 %v491
      %519 = vmatprep.subr.mxu0 0.0
      %520 = vmatpush1.msra.mxu0 %v490
      %521 = vmatprep.subr.mxu0 0.0
      %522 = vmatpush1.msra.mxu0 %v489
      %523 = vmatprep.subr.mxu0 0.0
      %524 = vmatpush1.msra.mxu0 %v488
      %525 = vmatprep.subr.mxu0 0.0
      %526 = vmatpush1.msra.mxu0 %v487
      %527 = vmatprep.subr.mxu0 0.0
      %528 = vmatpush1.msra.mxu0 %v486
      %529 = vmatprep.subr.mxu0 0.0
      %530 = vmatpush1.msra.mxu0 %v485
      %531 = vmatprep.subr.mxu0 0.0
      %532 = vmatpush1.msra.mxu0 %v484
      %533 = vmatprep.subr.mxu0 0.0
      %534 = vmatpush1.msra.mxu0 %v483
      %535 = vmatprep.subr.mxu0 0.0
      %536 = vmatpush1.msra.mxu0 %v482
      %537 = vmatprep.subr.mxu0 0.0
      %538 = vmatpush2.msra.mxu0 0.0
      %539 = vmatprep.subr.mxu0 0.0
      %540 = vmatpush2.msra.mxu0 0.0
      %541 = vmatprep.subr.mxu0 0.0
      %542 = vmatpush2.msra.mxu0 0.0
      %543 = vmatprep.subr.mxu0 0.0
      %544 = vmatpush2.msra.mxu0 0.0
      %545 = vmatprep.subr.mxu0 0.0
      %546 = vmatpush2.msra.mxu0 0.0
      %547 = vmatprep.subr.mxu0 0.0
      %548 = vmatpush2.msra.mxu0 0.0
      %549 = vmatprep.subr.mxu0 0.0
      %550 = vmatpush2.msra.mxu0 0.0
      %551 = vmatprep.subr.mxu0 0.0
      %552 = vmatpush2.msra.mxu0 0.0
      %553 = vmatprep.subr.mxu0 0.0
      %554 = vmatpush2.msra.mxu0 0.0
      %555 = vmatprep.subr.mxu0 0.0
      %556 = vmatpush2.msra.mxu0 0.0
      %557 = vmatprep.subr.mxu0 0.0
      %558 = vmatpush2.msra.mxu0 0.0
      %559 = vmatprep.subr.mxu0 0.0
      %560 = vmatpush2.msra.mxu0 0.0
      %561 = vmatprep.subr.mxu0 0.0
      %562 = vmatpush2.msra.mxu0 0.0
      %563 = vmatprep.subr.mxu0 0.0
      %564 = vmatpush2.msra.mxu0 0.0
      %565 = vmatprep.subr.mxu0 0.0
      %566 = vmatpush2.msra.mxu0 0.0
      %567 = vmatprep.subr.mxu0 0.0
      %568 = vmatpush2.msra.mxu0 0.0
      %569 = vmatprep.mubr.f32.mxu0 0.0
      %570 = vmatmul.mubr.f32.gmra.mxu0 %v479
      %v571 = vpop.f32.mrf.mxu0
      %v572 = vadd.f32 %v503, %v571
      %v573 = vpop.f32.mrf.mxu0
      %574 = vdwg.mxu0
      %575 = vst [vmem:[#allocation3] sm:$0xff] %v572
    $region33: #{gcn_forward.7} parent=1 // pred_fallthru
      _
    // Predicated region
    $region34: #{gcn_forward.7} parent=1 // pred_check
      _
    $region35: #{gcn_forward.7} parent=1 // pred_check_branch
      %577 = sbr.rel (0) target = $region37
    $region36: #{gcn_forward.7} parent=1 // pred_region
      %s579 = ssub.s32 128, 128
      %580 = vsyncadd [#allocation4], %s579
      %s582 = sshll.u32 [#allocation3], 4
      %s583 = int_to_ptr.vmem [resolvable:$true] %s582
      %585 = dma.vmem_to_hbm [thread:$0]  %s583, 128, %s6, [#allocation4]
    $region37: #{gcn_forward.7} parent=1 // pred_fallthru
      _
    // Predicated region
    $region38: #{gcn_forward.7} parent=1 // pred_check
      _
    $region39: #{gcn_forward.7} parent=1 // pred_check_branch
      %587 = sbr.rel (0) target = $region41
    $region40: #{gcn_forward.7} parent=1 // pred_region
      %588 = dma.done [#allocation4], 128
    $region41: #{gcn_forward.7} parent=1 // pred_fallthru
      _
    %589 = vsyncpa [#allocation4], 1

</llo_original>
